<compile_context>
chip_gen: v5e
topology: v5e:2x2
jax: 0.10.0
libtpu: 0.0.40
codegen_flags: <defaults>
</compile_context>

<pallas_src>
import functools

import jax
import jax.numpy as jnp
from jax import lax
from jax.experimental import pallas as pl
from jax.experimental.pallas import tpu as pltpu

_LANES = 128
_KH = _KW = 3


def _conv_cls_kernel(H, W, C, halo, inv_hw, compute_dtype,
                     x_ref, w_ref, b_ref, fcw_ref, mask_ref, fcb_ref, out_ref):
    # x_ref:    [1, H*W + 2*halo, C]  flat NHWC strip with zero halo (f32)
    # w_ref:    [K, F_pad]            conv weight, resident (compute_dtype)
    # b_ref:    [1, F_pad]            conv bias (f32, lane-padded)
    # fcw_ref:  [1, F_pad]            FC weight (f32, lane-padded)
    # mask_ref: [9, H*W, 1]           SAME-padding validity mask per tap (f32)
    # fcb_ref:  [1]                   FC bias scalar in SMEM
    # out_ref:  [1, 1, 128]           lane-dense logit slab for this batch elem
    HW = H * W
    x = x_ref[0]                                           # [HW + 2*halo, C]

    # Build the 9 taps as static sublane slices of the haloed strip; each tap
    # t at output index hw reads x_flat[hw + dh*W + dw].  Cross-row / out-of-
    # image reads are zeroed by the precomputed mask (== SAME zero padding).
    taps = []
    t = 0
    for dh in (-1, 0, 1):
        for dw in (-1, 0, 1):
            s = dh * W + dw
            tap = x[halo + s: halo + s + HW, :]            # [HW, C], static
            taps.append(tap * mask_ref[t])                 # [HW, 1] broadcast
            t += 1

    # In-VMEM im2col slab -> single MXU contraction (K = KH*KW*C).
    patches = jnp.concatenate(taps, axis=-1).astype(compute_dtype)   # [HW, K]
    acc = jnp.dot(patches, w_ref[...],
                  preferred_element_type=jnp.float32)      # [HW, F_pad] f32
    acc = jnp.maximum(acc + b_ref[...], 0.0)               # bias + ReLU (f32)

    # Global average pool over all H*W positions, then the FC head as a VPU
    # multiply + lane reduce (padded lanes are zero, so they contribute 0).
    pooled = jnp.sum(acc, axis=0, keepdims=True) * inv_hw  # [1, F_pad]
    logit = jnp.sum(pooled * fcw_ref[...]) + fcb_ref[0]
    out_ref[...] = jnp.full(out_ref.shape, logit, dtype=out_ref.dtype)


def model_forward(x_nchw, conv_w, conv_b, fc_w, fc_b, *,
                  compute_dtype=jnp.bfloat16):
    """Forward pass of the CNN classifier. x_nchw: [B, C, H, W] float32.

    compute_dtype is the MXU operand dtype (bf16 native on v6e/v7x, also valid
    as an MXU input on v5e); accumulation and all elementwise math stay f32.
    """
    B, C, H, W = x_nchw.shape
    KH, KW, _, F = conv_w.shape
    assert (KH, KW) == (_KH, _KW), "kernel specialized for 3x3 conv"
    HW = H * W
    K = KH * KW * C
    F_pad = _LANES
    assert F <= F_pad, "feature maps must fit one lane group"
    halo = W + 1                     # max |dh*W + dw| for a 3x3 tap

    # --- layout glue (≈1x input bytes, no 9x im2col slab in HBM) ------------
    x_flat = jnp.transpose(x_nchw, (0, 2, 3, 1)).reshape(B, HW, C)
    x_flat = jnp.pad(x_flat.astype(jnp.float32), ((0, 0), (halo, halo), (0, 0)))

    # SAME-padding validity mask per tap (also kills cross-row wraparound).
    hw = jnp.arange(HW)
    h_idx, w_idx = hw // W, hw % W
    masks = []
    for dh in (-1, 0, 1):
        for dw in (-1, 0, 1):
            masks.append((h_idx + dh >= 0) & (h_idx + dh < H) &
                         (w_idx + dw >= 0) & (w_idx + dw < W))
    masks = jnp.stack(masks).astype(jnp.float32).reshape(KH * KW, HW, 1)

    # Lane-pad feature dim to 128 (zeros -> padded channels contribute 0).
    w2d = jnp.pad(conv_w.reshape(K, F).astype(compute_dtype),
                  ((0, 0), (0, F_pad - F)))
    b2d = jnp.pad(conv_b.reshape(1, F).astype(jnp.float32),
                  ((0, 0), (0, F_pad - F)))
    fcw2d = jnp.pad(fc_w.reshape(1, F).astype(jnp.float32),
                    ((0, 0), (0, F_pad - F)))
    fcb1 = fc_b.reshape(1).astype(jnp.float32)

    itemsize = jnp.dtype(compute_dtype).itemsize
    bytes_accessed = (x_flat.size * 4 + w2d.size * itemsize +
                      (b2d.size + fcw2d.size + masks.size) * 4 + B * F_pad * 4)
    cost = pl.CostEstimate(flops=2 * B * HW * K * F_pad + 4 * B * HW * F_pad,
                           transcendentals=0, bytes_accessed=bytes_accessed)

    kernel = functools.partial(_conv_cls_kernel, H, W, C, halo,
                               1.0 / float(HW), compute_dtype)

    out = pl.pallas_call(
        kernel,
        out_shape=jax.ShapeDtypeStruct((B, 1, _LANES), jnp.float32),
        grid_spec=pltpu.PrefetchScalarGridSpec(
            num_scalar_prefetch=0,
            grid=(B,),                                     # one step per image
            in_specs=[
                pl.BlockSpec((1, HW + 2 * halo, C), lambda b: (b, 0, 0)),  # x
                pl.BlockSpec((K, F_pad), lambda b: (0, 0)),        # conv W
                pl.BlockSpec((1, F_pad), lambda b: (0, 0)),        # conv b
                pl.BlockSpec((1, F_pad), lambda b: (0, 0)),        # fc W
                pl.BlockSpec((KH * KW, HW, 1), lambda b: (0, 0, 0)),  # masks
                pl.BlockSpec(memory_space=pltpu.MemorySpace.SMEM),    # fc b
            ],
            out_specs=pl.BlockSpec((1, 1, _LANES), lambda b: (b, 0, 0)),
        ),
        compiler_params=pltpu.CompilerParams(
            dimension_semantics=("parallel",),             # batch across cores
            vmem_limit_bytes=32 * 1024 * 1024,             # safe on v7x 64 MiB
        ),
        cost_estimate=cost,
    )(x_flat, w2d, b2d, fcw2d, masks, fcb1)

    return out[:, 0, :1]                                   # [B, 1]


def model_forward_ref(x_nchw, conv_w, conv_b, fc_w, fc_b):
    """Pure-JAX reference (same math, no Pallas) for validation."""
    x_nhwc = jnp.transpose(x_nchw, (0, 2, 3, 1))
    y = lax.conv_general_dilated(
        x_nhwc, conv_w, window_strides=(1, 1), padding="SAME",
        dimension_numbers=("NHWC", "HWIO", "NHWC"))
    y = jnp.maximum(y + conv_b[None, None, None, :], 0.0)
    pooled = jnp.mean(y, axis=(1, 2))
    return pooled @ fc_w.reshape(-1, 1) + fc_b.reshape(1, 1)


if __name__ == "__main__":
    # Small shapes consistent with the module's forward: batch=2, channels=4,
    # spatial=16x16; conv to 8 feature maps, binary logit head.
    B, C, H, W = 2, 4, 16, 16
    F, KH, KW = 8, 3, 3

    key = jax.random.PRNGKey(0)
    kx, kw, kb, kfw, kfb = jax.random.split(key, 5)

    x = jax.random.normal(kx, (B, C, H, W), dtype=jnp.float32)
    conv_w = jax.random.normal(kw, (KH, KW, C, F), dtype=jnp.float32) * 0.1
    conv_b = jax.random.normal(kb, (F,), dtype=jnp.float32) * 0.1
    fc_w = jax.random.normal(kfw, (F,), dtype=jnp.float32) * 0.1
    fc_b = jax.random.normal(kfb, (1,), dtype=jnp.float32) * 0.1

    ref = model_forward_ref(x, conv_w, conv_b, fc_w, fc_b)

    # f32 path: tight tolerance.
    out_f32 = model_forward(x, conv_w, conv_b, fc_w, fc_b,
                            compute_dtype=jnp.float32)
    out_f32 = jax.block_until_ready(out_f32)
    assert out_f32.shape == (B, 1), out_f32.shape
    assert jnp.allclose(out_f32, ref, atol=1e-4, rtol=1e-4), (out_f32, ref)

    # bf16 MXU-operand path (default): looser tolerance.
    out_bf16 = model_forward(x, conv_w, conv_b, fc_w, fc_b,
                             compute_dtype=jnp.bfloat16)
    out_bf16 = jax.block_until_ready(out_bf16)
    assert out_bf16.shape == (B, 1), out_bf16.shape
    assert jnp.allclose(out_bf16, ref, atol=5e-2, rtol=5e-2), (out_bf16, ref)

    print("KERNEL_OK")
</pallas_src>

<mosaic_0001>
module attributes {stable_mosaic.version = 11 : i64} {
  func.func @_conv_cls_kernel(%arg0: i32, %arg1: memref<1x290x4xf32, #tpu.memory_space<vmem>>, %arg2: memref<36x128xf32, #tpu.memory_space<vmem>>, %arg3: memref<1x128xf32, #tpu.memory_space<vmem>>, %arg4: memref<1x128xf32, #tpu.memory_space<vmem>>, %arg5: memref<9x256x1xf32, #tpu.memory_space<vmem>>, %arg6: memref<1xf32, #tpu.memory_space<smem>>, %arg7: memref<1x1x128xf32, #tpu.memory_space<vmem>>) attributes {dimension_semantics = [#tpu.dimension_semantics<parallel>], iteration_bounds = array<i64: 2>, scalar_prefetch = 0 : i64, scratch_operands = 0 : i64, tpu.core_type = #tpu.core_type<tc>, window_params = [{transform_indices = @transform_0, window_bounds = array<i64: 1, 290, 4>}, {pipeline_mode = #tpu.pipeline_mode<synchronous>, transform_indices = @transform_1, window_bounds = array<i64: 36, 128>}, {pipeline_mode = #tpu.pipeline_mode<synchronous>, transform_indices = @transform_2, window_bounds = array<i64: 1, 128>}, {pipeline_mode = #tpu.pipeline_mode<synchronous>, transform_indices = @transform_3, window_bounds = array<i64: 1, 128>}, {pipeline_mode = #tpu.pipeline_mode<synchronous>, transform_indices = @transform_4, window_bounds = array<i64: 9, 256, 1>}, {transform_indices = @transform_5, window_bounds = array<i64: 1>}, {transform_indices = @transform_6, window_bounds = array<i64: 1, 1, 128>}]} {
    %c0 = arith.constant 0 : index
    %c0_0 = arith.constant 0 : index
    %c0_1 = arith.constant 0 : index
    %0 = vector.load %arg1[%c0, %c0_0, %c0_1] : memref<1x290x4xf32, #tpu.memory_space<vmem>>, vector<1x290x4xf32>
    %1 = vector.shape_cast %0 : vector<1x290x4xf32> to vector<290x4xf32>
    %2 = vector.extract_strided_slice %1 {offsets = [0, 0], sizes = [256, 4], strides = [1, 1]} : vector<290x4xf32> to vector<256x4xf32>
    %c0_2 = arith.constant 0 : index
    %c0_3 = arith.constant 0 : index
    %c0_4 = arith.constant 0 : index
    %3 = vector.load %arg5[%c0_2, %c0_3, %c0_4] : memref<9x256x1xf32, #tpu.memory_space<vmem>>, vector<1x256x1xf32>
    %4 = vector.shape_cast %3 : vector<1x256x1xf32> to vector<256x1xf32>
    %5 = vector.broadcast %4 : vector<256x1xf32> to vector<256x4xf32>
    %6 = arith.mulf %2, %5 : vector<256x4xf32>
    %7 = vector.extract_strided_slice %1 {offsets = [1, 0], sizes = [256, 4], strides = [1, 1]} : vector<290x4xf32> to vector<256x4xf32>
    %c1 = arith.constant 1 : index
    %c0_5 = arith.constant 0 : index
    %c0_6 = arith.constant 0 : index
    %8 = vector.load %arg5[%c1, %c0_5, %c0_6] : memref<9x256x1xf32, #tpu.memory_space<vmem>>, vector<1x256x1xf32>
    %9 = vector.shape_cast %8 : vector<1x256x1xf32> to vector<256x1xf32>
    %10 = vector.broadcast %9 : vector<256x1xf32> to vector<256x4xf32>
    %11 = arith.mulf %7, %10 : vector<256x4xf32>
    %12 = vector.extract_strided_slice %1 {offsets = [2, 0], sizes = [256, 4], strides = [1, 1]} : vector<290x4xf32> to vector<256x4xf32>
    %c2 = arith.constant 2 : index
    %c0_7 = arith.constant 0 : index
    %c0_8 = arith.constant 0 : index
    %13 = vector.load %arg5[%c2, %c0_7, %c0_8] : memref<9x256x1xf32, #tpu.memory_space<vmem>>, vector<1x256x1xf32>
    %14 = vector.shape_cast %13 : vector<1x256x1xf32> to vector<256x1xf32>
    %15 = vector.broadcast %14 : vector<256x1xf32> to vector<256x4xf32>
    %16 = arith.mulf %12, %15 : vector<256x4xf32>
    %17 = vector.extract_strided_slice %1 {offsets = [16, 0], sizes = [256, 4], strides = [1, 1]} : vector<290x4xf32> to vector<256x4xf32>
    %c3 = arith.constant 3 : index
    %c0_9 = arith.constant 0 : index
    %c0_10 = arith.constant 0 : index
    %18 = vector.load %arg5[%c3, %c0_9, %c0_10] : memref<9x256x1xf32, #tpu.memory_space<vmem>>, vector<1x256x1xf32>
    %19 = vector.shape_cast %18 : vector<1x256x1xf32> to vector<256x1xf32>
    %20 = vector.broadcast %19 : vector<256x1xf32> to vector<256x4xf32>
    %21 = arith.mulf %17, %20 : vector<256x4xf32>
    %22 = vector.extract_strided_slice %1 {offsets = [17, 0], sizes = [256, 4], strides = [1, 1]} : vector<290x4xf32> to vector<256x4xf32>
    %c4 = arith.constant 4 : index
    %c0_11 = arith.constant 0 : index
    %c0_12 = arith.constant 0 : index
    %23 = vector.load %arg5[%c4, %c0_11, %c0_12] : memref<9x256x1xf32, #tpu.memory_space<vmem>>, vector<1x256x1xf32>
    %24 = vector.shape_cast %23 : vector<1x256x1xf32> to vector<256x1xf32>
    %25 = vector.broadcast %24 : vector<256x1xf32> to vector<256x4xf32>
    %26 = arith.mulf %22, %25 : vector<256x4xf32>
    %27 = vector.extract_strided_slice %1 {offsets = [18, 0], sizes = [256, 4], strides = [1, 1]} : vector<290x4xf32> to vector<256x4xf32>
    %c5 = arith.constant 5 : index
    %c0_13 = arith.constant 0 : index
    %c0_14 = arith.constant 0 : index
    %28 = vector.load %arg5[%c5, %c0_13, %c0_14] : memref<9x256x1xf32, #tpu.memory_space<vmem>>, vector<1x256x1xf32>
    %29 = vector.shape_cast %28 : vector<1x256x1xf32> to vector<256x1xf32>
    %30 = vector.broadcast %29 : vector<256x1xf32> to vector<256x4xf32>
    %31 = arith.mulf %27, %30 : vector<256x4xf32>
    %32 = vector.extract_strided_slice %1 {offsets = [32, 0], sizes = [256, 4], strides = [1, 1]} : vector<290x4xf32> to vector<256x4xf32>
    %c6 = arith.constant 6 : index
    %c0_15 = arith.constant 0 : index
    %c0_16 = arith.constant 0 : index
    %33 = vector.load %arg5[%c6, %c0_15, %c0_16] : memref<9x256x1xf32, #tpu.memory_space<vmem>>, vector<1x256x1xf32>
    %34 = vector.shape_cast %33 : vector<1x256x1xf32> to vector<256x1xf32>
    %35 = vector.broadcast %34 : vector<256x1xf32> to vector<256x4xf32>
    %36 = arith.mulf %32, %35 : vector<256x4xf32>
    %37 = vector.extract_strided_slice %1 {offsets = [33, 0], sizes = [256, 4], strides = [1, 1]} : vector<290x4xf32> to vector<256x4xf32>
    %c7 = arith.constant 7 : index
    %c0_17 = arith.constant 0 : index
    %c0_18 = arith.constant 0 : index
    %38 = vector.load %arg5[%c7, %c0_17, %c0_18] : memref<9x256x1xf32, #tpu.memory_space<vmem>>, vector<1x256x1xf32>
    %39 = vector.shape_cast %38 : vector<1x256x1xf32> to vector<256x1xf32>
    %40 = vector.broadcast %39 : vector<256x1xf32> to vector<256x4xf32>
    %41 = arith.mulf %37, %40 : vector<256x4xf32>
    %42 = vector.extract_strided_slice %1 {offsets = [34, 0], sizes = [256, 4], strides = [1, 1]} : vector<290x4xf32> to vector<256x4xf32>
    %c8 = arith.constant 8 : index
    %c0_19 = arith.constant 0 : index
    %c0_20 = arith.constant 0 : index
    %43 = vector.load %arg5[%c8, %c0_19, %c0_20] : memref<9x256x1xf32, #tpu.memory_space<vmem>>, vector<1x256x1xf32>
    %44 = vector.shape_cast %43 : vector<1x256x1xf32> to vector<256x1xf32>
    %45 = vector.broadcast %44 : vector<256x1xf32> to vector<256x4xf32>
    %46 = arith.mulf %42, %45 : vector<256x4xf32>
    %47 = tpu.concatenate %6, %11, %16, %21, %26, %31, %36, %41, %46 in 1 : vector<256x4xf32>, vector<256x4xf32>, vector<256x4xf32>, vector<256x4xf32>, vector<256x4xf32>, vector<256x4xf32>, vector<256x4xf32>, vector<256x4xf32>, vector<256x4xf32> -> vector<256x36xf32>
    %c0_21 = arith.constant 0 : index
    %c0_22 = arith.constant 0 : index
    %48 = vector.load %arg2[%c0_21, %c0_22] : memref<36x128xf32, #tpu.memory_space<vmem>>, vector<36x128xf32>
    %cst = arith.constant dense<0.000000e+00> : vector<256x128xf32>
    %49 = tpu.matmul %47, %48, %cst {dimension_numbers = #tpu.dot_dimension_numbers<[1], [0], [0], [1], [0, 0, 1, 1], [], []>} : vector<256x36xf32>, vector<36x128xf32>, vector<256x128xf32> -> vector<256x128xf32>
    %c0_23 = arith.constant 0 : index
    %c0_24 = arith.constant 0 : index
    %50 = vector.load %arg3[%c0_23, %c0_24] : memref<1x128xf32, #tpu.memory_space<vmem>>, vector<1x128xf32>
    %51 = vector.broadcast %50 : vector<1x128xf32> to vector<256x128xf32>
    %52 = arith.addf %49, %51 : vector<256x128xf32>
    %cst_25 = arith.constant 0.000000e+00 : f32
    %53 = vector.broadcast %cst_25 : f32 to vector<256x128xf32>
    %54 = arith.maximumf %52, %53 : vector<256x128xf32>
    %cst_26 = arith.constant dense<0.000000e+00> : vector<128xf32>
    %55 = vector.multi_reduction <add>, %54, %cst_26 [0] : vector<256x128xf32> to vector<128xf32>
    %56 = vector.shape_cast %55 : vector<128xf32> to vector<1x128xf32>
    %cst_27 = arith.constant 3.906250e-03 : f32
    %57 = vector.broadcast %cst_27 : f32 to vector<1x128xf32>
    %58 = arith.mulf %56, %57 : vector<1x128xf32>
    %c0_28 = arith.constant 0 : index
    %c0_29 = arith.constant 0 : index
    %59 = vector.load %arg4[%c0_28, %c0_29] : memref<1x128xf32, #tpu.memory_space<vmem>>, vector<1x128xf32>
    %60 = arith.mulf %58, %59 : vector<1x128xf32>
    %61 = vector.shape_cast %60 : vector<1x128xf32> to vector<1x1x128xf32>
    %cst_30 = arith.constant dense<0.000000e+00> : vector<1xf32>
    %62 = vector.multi_reduction <add>, %61, %cst_30 [1, 2] : vector<1x1x128xf32> to vector<1xf32>
    %63 = vector.shape_cast %62 : vector<1xf32> to vector<1x1x1xf32>
    %64 = vector.extract %63[0, 0, 0] : f32 from vector<1x1x1xf32>
    %c0_31 = arith.constant 0 : index
    %65 = memref.load %arg6[%c0_31] : memref<1xf32, #tpu.memory_space<smem>>
    %66 = arith.addf %64, %65 : f32
    %67 = vector.broadcast %66 : f32 to vector<1x1x128xf32>
    %c0_32 = arith.constant 0 : index
    %c0_33 = arith.constant 0 : index
    %c0_34 = arith.constant 0 : index
    %68 = vector.load %arg7[%c0_32, %c0_33, %c0_34] : memref<1x1x128xf32, #tpu.memory_space<vmem>>, vector<1x1x128xf32>
    tpu.vector_store %arg7[%c0_32, %c0_33, %c0_34], %67 {strides = array<i32>} : memref<1x1x128xf32, #tpu.memory_space<vmem>>, vector<1x1x128xf32>,
    return
  }
  func.func @transform_0(%arg0: i32) -> (i32, i32, i32) {
    %c0_i32 = arith.constant 0 : i32
    %c0_i32_0 = arith.constant 0 : i32
    %c0_i32_1 = arith.constant 0 : i32
    return %arg0, %c0_i32, %c0_i32_0 : i32, i32, i32
  }
  func.func @transform_1(%arg0: i32) -> (i32, i32) {
    %c0_i32 = arith.constant 0 : i32
    %c0_i32_0 = arith.constant 0 : i32
    %c0_i32_1 = arith.constant 0 : i32
    return %c0_i32, %c0_i32_0 : i32, i32
  }
  func.func @transform_2(%arg0: i32) -> (i32, i32) {
    %c0_i32 = arith.constant 0 : i32
    %c0_i32_0 = arith.constant 0 : i32
    %c0_i32_1 = arith.constant 0 : i32
    return %c0_i32, %c0_i32_0 : i32, i32
  }
  func.func @transform_3(%arg0: i32) -> (i32, i32) {
    %c0_i32 = arith.constant 0 : i32
    %c0_i32_0 = arith.constant 0 : i32
    %c0_i32_1 = arith.constant 0 : i32
    return %c0_i32, %c0_i32_0 : i32, i32
  }
  func.func @transform_4(%arg0: i32) -> (i32, i32, i32) {
    %c0_i32 = arith.constant 0 : i32
    %c0_i32_0 = arith.constant 0 : i32
    %c0_i32_1 = arith.constant 0 : i32
    %c0_i32_2 = arith.constant 0 : i32
    return %c0_i32, %c0_i32_0, %c0_i32_1 : i32, i32, i32
  }
  func.func @transform_5(%arg0: i32) -> i32 {
    %c0_i32 = arith.constant 0 : i32
    %c0_i32_0 = arith.constant 0 : i32
    return %c0_i32 : i32
  }
  func.func @transform_6(%arg0: i32) -> (i32, i32, i32) {
    %c0_i32 = arith.constant 0 : i32
    %c0_i32_0 = arith.constant 0 : i32
    %c0_i32_1 = arith.constant 0 : i32
    return %arg0, %c0_i32, %c0_i32_0 : i32, i32, i32
  }
}

</mosaic_0001>

<llo_original>
// kernel: tpu_custom_call.1
$region0: #{tpu_custom_call.1}
  #allocation0 [shape = 'u32[]', space=smem, size = 0x4, offset = 0x4, fixed_abs, tag = 'smem constant byte address 0x4 - core index']
  #allocation1 [shape = 'u32[72,128]{1,0:T(1,128)}', space=vmem, size = 0x9000, scoped, tag = 'internal scratch']
  #allocation2 [shape = 'f32[1]{0:T(128)S(6)}', space=smem, size = 0x200, scoped, tag = 'scoped memory for tpu_custom_call.1']
  %s0 = inlined_call_operand.vmem [shape: f32[2,290,4], index: 0, kind: input, shape index: {}]
  %s1 = inlined_call_operand.vmem [shape: f32[36,128], index: 1, kind: input, shape index: {}]
  %s2 = inlined_call_operand.vmem [shape: f32[1,128], index: 2, kind: input, shape index: {}]
  %s3 = inlined_call_operand.vmem [shape: f32[1,128], index: 3, kind: input, shape index: {}]
  %s4 = inlined_call_operand.vmem [shape: f32[9,256,1], index: 4, kind: input, shape index: {}]
  %s5 = inlined_call_operand.<no memory space> [shape: f32[1], index: 5, kind: input, shape index: {}]
  %s6 = inlined_call_operand.hbm [shape: f32[2,1,128], index: 6, kind: output, shape index: {}]
  %s7 = sld [smem:[#allocation0]]
  $region57: #{tpu_custom_call.1} parent=0
    _
  %s9 = ssub.s32 1, %s7
  %s10 = scalar_select 0, %s9, %s7
  %11 = sst [smem:[#allocation2]] %s5
  $region1: #{tpu_custom_call.1} parent=0
    #allocation3 [shape = 'u8[1024]{0}', space=vmem, size = 0x400, scoped, tag = 'output window, operand 0']
    #allocation4 [shape = 's32[2]{0}', space=sflag, size = 0x8, scoped, tag = 'scoped memory for tpu_custom_call.1']
    %12 = vsyncpa [#allocation4], 0
    %s13 = scalar_lea.sflag [#allocation4], 1
    %14 = vsyncpa %s13, 0
    loop: start=0, step=1, limit=4
    $region2: #{tpu_custom_call.1} parent=1 // loop_pre_header
      _
    $region3: #{tpu_custom_call.1} parent=1 // loop_header
      %s16 = sphi 0, %s20
      %p17 = scmp.ge.s32.totalorder %s16, 4
      %s26 = sphi 0, %s28
      %s29 = sphi 0, %s26
      %s30 = sphi 0, %s29
      %s46 = sphi 0, %s30
      %s50 = sphi 0, %s50
      %s52 = sphi 0, %s50
      %s53 = sphi 0, %s52
      %s67 = sphi 0, %s53
      %s71 = sphi 0, %s71
      %s73 = sphi 0, %s71
      %s74 = sphi 0, %s73
      %s88 = sphi 0, %s74
      %s92 = sphi 0, %s92
      %s94 = sphi 0, %s92
      %s95 = sphi 0, %s94
      %s109 = sphi 0, %s95
      %s113 = sphi 0, %s113
      %s115 = sphi 0, %s113
      %s116 = sphi 0, %s115
      %s130 = sphi 0, %s116
      %s134 = sphi 0, %s134
      %s136 = sphi 0, %s134
      %s137 = sphi 0, %s136
      %s151 = sphi 0, %s137
      %s157 = sphi 0, %s159
      %s160 = sphi 0, %s157
      %s161 = sphi 0, %s160
      %s177 = sphi 0, %s161
    $region4: #{tpu_custom_call.1} parent=1 // loop_header_branch
      %19 = sbr.rel (%p17) target = $region8
    $region5: #{tpu_custom_call.1} parent=1 // loop_body
      %s21 = ssub.s32 %s16, 1
      %s22 = ssub.s32 %s16, 2
      %s23 = sadd.s32 %s16, 1
      %s24 = ssub.s32 %s16, %s23
      %p25 = scmp.eq.s32.totalorder %s24, 0
      %s27 = sadd.s32 %s26, 1
      %s28 = scalar_select %p25, %s26, %s27
      %p31 = pneg %p25
      %p32 = scmp.eq.s32.totalorder %s16, 1
      %p33 = por %p31, %p32
      %p34 = scmp.ne.s32.totalorder %s26, %s29
      %p35 = scmp.eq.s32.totalorder %s16, 0
      %p36 = por %p34, %p35
      %p37 = scmp.ne.s32.totalorder %s26, %s29
      %p38 = scmp.eq.s32.totalorder %s21, 1
      %p39 = por %p37, %p38
      %p40 = scmp.ne.s32.totalorder %s29, %s30
      %p41 = scmp.eq.s32.totalorder %s21, 0
      %p42 = por %p40, %p41
      %p43 = scmp.ne.s32.totalorder %s29, %s30
      %p44 = scmp.eq.s32.totalorder %s22, 1
      %p45 = por %p43, %p44
      %p47 = scmp.ne.s32.totalorder %s30, %s46
      %p48 = scmp.eq.s32.totalorder %s22, 0
      %p49 = por %p47, %p48
      %s51 = sadd.s32 %s50, 1
      %p54 = scmp.eq.s32.totalorder %s16, 1
      %p55 = scmp.ne.s32.totalorder %s50, %s52
      %p56 = scmp.eq.s32.totalorder %s16, 0
      %p57 = por %p55, %p56
      %p58 = scmp.ne.s32.totalorder %s50, %s52
      %p59 = scmp.eq.s32.totalorder %s21, 1
      %p60 = por %p58, %p59
      %p61 = scmp.ne.s32.totalorder %s52, %s53
      %p62 = scmp.eq.s32.totalorder %s21, 0
      %p63 = por %p61, %p62
      %p64 = scmp.ne.s32.totalorder %s52, %s53
      %p65 = scmp.eq.s32.totalorder %s22, 1
      %p66 = por %p64, %p65
      %p68 = scmp.ne.s32.totalorder %s53, %s67
      %p69 = scmp.eq.s32.totalorder %s22, 0
      %p70 = por %p68, %p69
      %s72 = sadd.s32 %s71, 1
      %p75 = scmp.eq.s32.totalorder %s16, 1
      %p76 = scmp.ne.s32.totalorder %s71, %s73
      %p77 = scmp.eq.s32.totalorder %s16, 0
      %p78 = por %p76, %p77
      %p79 = scmp.ne.s32.totalorder %s71, %s73
      %p80 = scmp.eq.s32.totalorder %s21, 1
      %p81 = por %p79, %p80
      %p82 = scmp.ne.s32.totalorder %s73, %s74
      %p83 = scmp.eq.s32.totalorder %s21, 0
      %p84 = por %p82, %p83
      %p85 = scmp.ne.s32.totalorder %s73, %s74
      %p86 = scmp.eq.s32.totalorder %s22, 1
      %p87 = por %p85, %p86
      %p89 = scmp.ne.s32.totalorder %s74, %s88
      %p90 = scmp.eq.s32.totalorder %s22, 0
      %p91 = por %p89, %p90
      %s93 = sadd.s32 %s92, 1
      %p96 = scmp.eq.s32.totalorder %s16, 1
      %p97 = scmp.ne.s32.totalorder %s92, %s94
      %p98 = scmp.eq.s32.totalorder %s16, 0
      %p99 = por %p97, %p98
      %p100 = scmp.ne.s32.totalorder %s92, %s94
      %p101 = scmp.eq.s32.totalorder %s21, 1
      %p102 = por %p100, %p101
      %p103 = scmp.ne.s32.totalorder %s94, %s95
      %p104 = scmp.eq.s32.totalorder %s21, 0
      %p105 = por %p103, %p104
      %p106 = scmp.ne.s32.totalorder %s94, %s95
      %p107 = scmp.eq.s32.totalorder %s22, 1
      %p108 = por %p106, %p107
      %p110 = scmp.ne.s32.totalorder %s95, %s109
      %p111 = scmp.eq.s32.totalorder %s22, 0
      %p112 = por %p110, %p111
      %s114 = sadd.s32 %s113, 1
      %p117 = scmp.eq.s32.totalorder %s16, 1
      %p118 = scmp.ne.s32.totalorder %s113, %s115
      %p119 = scmp.eq.s32.totalorder %s16, 0
      %p120 = por %p118, %p119
      %p121 = scmp.ne.s32.totalorder %s113, %s115
      %p122 = scmp.eq.s32.totalorder %s21, 1
      %p123 = por %p121, %p122
      %p124 = scmp.ne.s32.totalorder %s115, %s116
      %p125 = scmp.eq.s32.totalorder %s21, 0
      %p126 = por %p124, %p125
      %p127 = scmp.ne.s32.totalorder %s115, %s116
      %p128 = scmp.eq.s32.totalorder %s22, 1
      %p129 = por %p127, %p128
      %p131 = scmp.ne.s32.totalorder %s116, %s130
      %p132 = scmp.eq.s32.totalorder %s22, 0
      %p133 = por %p131, %p132
      %s135 = sadd.s32 %s134, 1
      %p138 = scmp.eq.s32.totalorder %s16, 1
      %p139 = scmp.ne.s32.totalorder %s134, %s136
      %p140 = scmp.eq.s32.totalorder %s16, 0
      %p141 = por %p139, %p140
      %p142 = scmp.ne.s32.totalorder %s134, %s136
      %p143 = scmp.eq.s32.totalorder %s21, 1
      %p144 = por %p142, %p143
      %p145 = scmp.ne.s32.totalorder %s136, %s137
      %p146 = scmp.eq.s32.totalorder %s21, 0
      %p147 = por %p145, %p146
      %p148 = scmp.ne.s32.totalorder %s136, %s137
      %p149 = scmp.eq.s32.totalorder %s22, 1
      %p150 = por %p148, %p149
      %p152 = scmp.ne.s32.totalorder %s137, %s151
      %p153 = scmp.eq.s32.totalorder %s22, 0
      %p154 = por %p152, %p153
      %s155 = ssub.s32 %s16, %s23
      %p156 = scmp.eq.s32.totalorder %s155, 0
      %s158 = sadd.s32 %s157, 1
      %s159 = scalar_select %p156, %s157, %s158
      %p162 = pneg %p156
      %p163 = scmp.eq.s32.totalorder %s16, 1
      %p164 = por %p162, %p163
      %p165 = scmp.ne.s32.totalorder %s157, %s160
      %p166 = scmp.eq.s32.totalorder %s16, 0
      %p167 = por %p165, %p166
      %p168 = scmp.ne.s32.totalorder %s157, %s160
      %p169 = scmp.eq.s32.totalorder %s21, 1
      %p170 = por %p168, %p169
      %p171 = scmp.ne.s32.totalorder %s160, %s161
      %p172 = scmp.eq.s32.totalorder %s21, 0
      %p173 = por %p171, %p172
      %p174 = scmp.ne.s32.totalorder %s160, %s161
      %p175 = scmp.eq.s32.totalorder %s22, 1
      %p176 = por %p174, %p175
      %p178 = scmp.ne.s32.totalorder %s161, %s177
      %p179 = scmp.eq.s32.totalorder %s22, 0
      %p180 = por %p178, %p179
      %p181 = scmp.le.s32.totalorder 1, %s16
      %p182 = scmp.lt.s32.totalorder %s16, 3
      %p183 = pnand %p181, %p182
      %p184 = pneg %p183
      // Predicated region
      $region9: #{tpu_custom_call.1} parent=5 // pred_check
        _
      $region10: #{tpu_custom_call.1} parent=5 // pred_check_branch
        %186 = sbr.rel (%p183) target = $region12
      $region11: #{tpu_custom_call.1} parent=5 // pred_region
        %s187 = ssub.s32 %s16, 1
        // Predicated region
        $region13: #{tpu_custom_call.1} parent=11 // pred_check
          %p188 = pneg %p63
        $region14: #{tpu_custom_call.1} parent=11 // pred_check_branch
          %190 = sbr.rel (%p188) target = $region16
        $region15: #{tpu_custom_call.1} parent=11 // pred_region
          _
        $region16: #{tpu_custom_call.1} parent=11 // pred_fallthru
          _
        // Predicated region
        $region17: #{tpu_custom_call.1} parent=11 // pred_check
          %p191 = pneg %p84
        $region18: #{tpu_custom_call.1} parent=11 // pred_check_branch
          %193 = sbr.rel (%p191) target = $region20
        $region19: #{tpu_custom_call.1} parent=11 // pred_region
          _
        $region20: #{tpu_custom_call.1} parent=11 // pred_fallthru
          _
        // Predicated region
        $region21: #{tpu_custom_call.1} parent=11 // pred_check
          %p194 = pneg %p105
        $region22: #{tpu_custom_call.1} parent=11 // pred_check_branch
          %196 = sbr.rel (%p194) target = $region24
        $region23: #{tpu_custom_call.1} parent=11 // pred_region
          _
        $region24: #{tpu_custom_call.1} parent=11 // pred_fallthru
          _
        // Predicated region
        $region25: #{tpu_custom_call.1} parent=11 // pred_check
          %p197 = pneg %p126
        $region26: #{tpu_custom_call.1} parent=11 // pred_check_branch
          %199 = sbr.rel (%p197) target = $region28
        $region27: #{tpu_custom_call.1} parent=11 // pred_region
          _
        $region28: #{tpu_custom_call.1} parent=11 // pred_fallthru
          _
        // Predicated region
        $region29: #{tpu_custom_call.1} parent=11 // pred_check
          %p200 = pneg %p147
        $region30: #{tpu_custom_call.1} parent=11 // pred_check_branch
          %202 = sbr.rel (%p200) target = $region32
        $region31: #{tpu_custom_call.1} parent=11 // pred_region
          _
        $region32: #{tpu_custom_call.1} parent=11 // pred_fallthru
          _
      $region12: #{tpu_custom_call.1} parent=5 // pred_fallthru
        _
      %p203 = scmp.lt.s32.totalorder %s16, 2
      // Predicated region
      $region33: #{tpu_custom_call.1} parent=5 // pred_check
        %p204 = pneg %p203
      $region34: #{tpu_custom_call.1} parent=5 // pred_check_branch
        %206 = sbr.rel (%p204) target = $region36
      $region35: #{tpu_custom_call.1} parent=5 // pred_region
        // Predicated region
        $region37: #{tpu_custom_call.1} parent=35 // pred_check
          %p207 = pneg %p36
        $region38: #{tpu_custom_call.1} parent=35 // pred_check_branch
          %209 = sbr.rel (%p207) target = $region40
        $region39: #{tpu_custom_call.1} parent=35 // pred_region
          %p210 = scmp.lt.s32.totalorder %s16, 1
          %s211 = scalar_select %p210, %s16, 1
          %s212 = smul.addr %s211, 37
          %s213 = smul.addr %s212, 8
          %s214 = scalar_lea.vmem %s0, %s213
        $region40: #{tpu_custom_call.1} parent=35 // pred_fallthru
          _
      $region36: #{tpu_custom_call.1} parent=5 // pred_fallthru
        _
      %p215 = scmp.le.s32.totalorder 1, %s16
      %p216 = scmp.lt.s32.totalorder %s16, 3
      %p217 = pnand %p215, %p216
      %p218 = pneg %p217
      // Predicated region
      $region41: #{tpu_custom_call.1} parent=5 // pred_check
        _
      $region42: #{tpu_custom_call.1} parent=5 // pred_check_branch
        %220 = sbr.rel (%p217) target = $region44
      $region43: #{tpu_custom_call.1} parent=5 // pred_region
        %s221 = ssub.s32 %s16, 1
        %p222 = scmp.lt.s32.totalorder %s21, 1
        %s223 = scalar_select %p222, %s21, 1
        %s224 = smul.addr %s223, 37
        %s225 = smul.addr %s224, 8
        %s226 = scalar_lea.vmem %s0, %s225
        %p227 = pneg %p42
        %p228 = pneg %p39
        %p229 = pneg %p63
        %p230 = pneg %p60
        %p231 = pneg %p84
        %p232 = pneg %p81
        %p233 = pneg %p105
        %p234 = pneg %p102
        %p235 = pneg %p126
        %p236 = pneg %p123
        %p237 = pneg %p147
        %p238 = pneg %p144
        %p239 = pneg %p173
        %p240 = pneg %p170
        %s241 = sand.u32 %s160, 1
        %s242 = scalar_lea.sflag [#allocation4], %s241
        %s243 = sand.u32 %s160, 1
        %s244 = scalar_lea.vmem [#allocation3], %s243
        %p245 = scmp.lt.s32.totalorder %s21, 1
        %s246 = scalar_select %p245, %s21, 1
        %s247 = smul.addr %s246, 37
        %s248 = smul.addr %s247, 8
        %s249 = scalar_lea.vmem %s0, %s248
        %v250 = vld [vmem:[%s249] sm:$0xff]
        %v251 = vld [vmem:[%s249 + $0x8] sm:$0xff]
        %v252 = vld [vmem:[%s249 + $0x10] sm:$0xff]
        %v253 = vld [vmem:[%s249 + $0x18] sm:$0xff]
        %v254 = vld [vmem:[%s249 + $0x20] sm:$0xff]
        %v255 = vld [vmem:[%s249 + $0x28] sm:$0xff]
        %v256 = vld [vmem:[%s249 + $0x30] sm:$0xff]
        %v257 = vld [vmem:[%s249 + $0x38] sm:$0xff]
        %v258 = vld [vmem:[%s249 + $0x40] sm:$0xff]
        %v259 = vld [vmem:[%s249 + $0x48] sm:$0xff]
        %v260 = vld [vmem:[%s249 + $0x50] sm:$0xff]
        %v261 = vld [vmem:[%s249 + $0x58] sm:$0xff]
        %v262 = vld [vmem:[%s249 + $0x60] sm:$0xff]
        %v263 = vld [vmem:[%s249 + $0x68] sm:$0xff]
        %v264 = vld [vmem:[%s249 + $0x70] sm:$0xff]
        %v265 = vld [vmem:[%s249 + $0x78] sm:$0xff]
        %v266 = vld [vmem:[%s249 + $0x80] sm:$0xff]
        %v267 = vld [vmem:[%s249 + $0x88] sm:$0xff]
        %v268 = vld [vmem:[%s249 + $0x90] sm:$0xff]
        %v269 = vld [vmem:[%s249 + $0x98] sm:$0xff]
        %v270 = vld [vmem:[%s249 + $0xa0] sm:$0xff]
        %v271 = vld [vmem:[%s249 + $0xa8] sm:$0xff]
        %v272 = vld [vmem:[%s249 + $0xb0] sm:$0xff]
        %v273 = vld [vmem:[%s249 + $0xb8] sm:$0xff]
        %v274 = vld [vmem:[%s249 + $0xc0] sm:$0xff]
        %v275 = vld [vmem:[%s249 + $0xc8] sm:$0xff]
        %v276 = vld [vmem:[%s249 + $0xd0] sm:$0xff]
        %v277 = vld [vmem:[%s249 + $0xd8] sm:$0xff]
        %v278 = vld [vmem:[%s249 + $0xe0] sm:$0xff]
        %v279 = vld [vmem:[%s249 + $0xe8] sm:$0xff]
        %v280 = vld [vmem:[%s249 + $0xf0] sm:$0xff]
        %v281 = vld [vmem:[%s249 + $0xf8] sm:$0xff]
        %v282 = vld [vmem:[%s249 + $0x100] sm:$0xff]
        %v283 = vld [vmem:[%s249 + $0x108] sm:$0xff]
        %v284 = vld [vmem:[%s249 + $0x110] sm:$0xff]
        %v285 = vld [vmem:[%s249 + $0x118] sm:$0xff]
        %v286 = vld [vmem:[%s249 + $0x120] sm:$0x3]
        %v287 = vld [vmem:[%s4] sm:$0xff]
        %v288 = vld [vmem:[%s4 + $0x8] sm:$0xff]
        %v289 = vld [vmem:[%s4 + $0x10] sm:$0xff]
        %v290 = vld [vmem:[%s4 + $0x18] sm:$0xff]
        %v291 = vld [vmem:[%s4 + $0x20] sm:$0xff]
        %v292 = vld [vmem:[%s4 + $0x28] sm:$0xff]
        %v293 = vld [vmem:[%s4 + $0x30] sm:$0xff]
        %v294 = vld [vmem:[%s4 + $0x38] sm:$0xff]
        %v295 = vld [vmem:[%s4 + $0x40] sm:$0xff]
        %v296 = vld [vmem:[%s4 + $0x48] sm:$0xff]
        %v297 = vld [vmem:[%s4 + $0x50] sm:$0xff]
        %v298 = vld [vmem:[%s4 + $0x58] sm:$0xff]
        %v299 = vld [vmem:[%s4 + $0x60] sm:$0xff]
        %v300 = vld [vmem:[%s4 + $0x68] sm:$0xff]
        %v301 = vld [vmem:[%s4 + $0x70] sm:$0xff]
        %v302 = vld [vmem:[%s4 + $0x78] sm:$0xff]
        %v303 = vld [vmem:[%s4 + $0x80] sm:$0xff]
        %v304 = vld [vmem:[%s4 + $0x88] sm:$0xff]
        %v305 = vld [vmem:[%s4 + $0x90] sm:$0xff]
        %v306 = vld [vmem:[%s4 + $0x98] sm:$0xff]
        %v307 = vld [vmem:[%s4 + $0xa0] sm:$0xff]
        %v308 = vld [vmem:[%s4 + $0xa8] sm:$0xff]
        %v309 = vld [vmem:[%s4 + $0xb0] sm:$0xff]
        %v310 = vld [vmem:[%s4 + $0xb8] sm:$0xff]
        %v311 = vld [vmem:[%s4 + $0xc0] sm:$0xff]
        %v312 = vld [vmem:[%s4 + $0xc8] sm:$0xff]
        %v313 = vld [vmem:[%s4 + $0xd0] sm:$0xff]
        %v314 = vld [vmem:[%s4 + $0xd8] sm:$0xff]
        %v315 = vld [vmem:[%s4 + $0xe0] sm:$0xff]
        %v316 = vld [vmem:[%s4 + $0xe8] sm:$0xff]
        %v317 = vld [vmem:[%s4 + $0xf0] sm:$0xff]
        %v318 = vld [vmem:[%s4 + $0xf8] sm:$0xff]
        %320 = vset.pattern.permute.xlu0 0
        %321 = vperm.xlu0 %320, %v287
        %v322 = vpop.permute.xlu0 %321
        %325 = vset.pattern.permute.xlu0 0
        %326 = vperm.xlu0 %325, %v288
        %v327 = vpop.permute.xlu0 %326
        %330 = vset.pattern.permute.xlu0 0
        %331 = vperm.xlu0 %330, %v289
        %v332 = vpop.permute.xlu0 %331
        %335 = vset.pattern.permute.xlu0 0
        %336 = vperm.xlu0 %335, %v290
        %v337 = vpop.permute.xlu0 %336
        %340 = vset.pattern.permute.xlu0 0
        %341 = vperm.xlu0 %340, %v291
        %v342 = vpop.permute.xlu0 %341
        %345 = vset.pattern.permute.xlu0 0
        %346 = vperm.xlu0 %345, %v292
        %v347 = vpop.permute.xlu0 %346
        %350 = vset.pattern.permute.xlu0 0
        %351 = vperm.xlu0 %350, %v293
        %v352 = vpop.permute.xlu0 %351
        %355 = vset.pattern.permute.xlu0 0
        %356 = vperm.xlu0 %355, %v294
        %v357 = vpop.permute.xlu0 %356
        %360 = vset.pattern.permute.xlu0 0
        %361 = vperm.xlu0 %360, %v295
        %v362 = vpop.permute.xlu0 %361
        %365 = vset.pattern.permute.xlu0 0
        %366 = vperm.xlu0 %365, %v296
        %v367 = vpop.permute.xlu0 %366
        %370 = vset.pattern.permute.xlu0 0
        %371 = vperm.xlu0 %370, %v297
        %v372 = vpop.permute.xlu0 %371
        %375 = vset.pattern.permute.xlu0 0
        %376 = vperm.xlu0 %375, %v298
        %v377 = vpop.permute.xlu0 %376
        %380 = vset.pattern.permute.xlu0 0
        %381 = vperm.xlu0 %380, %v299
        %v382 = vpop.permute.xlu0 %381
        %385 = vset.pattern.permute.xlu0 0
        %386 = vperm.xlu0 %385, %v300
        %v387 = vpop.permute.xlu0 %386
        %390 = vset.pattern.permute.xlu0 0
        %391 = vperm.xlu0 %390, %v301
        %v392 = vpop.permute.xlu0 %391
        %395 = vset.pattern.permute.xlu0 0
        %396 = vperm.xlu0 %395, %v302
        %v397 = vpop.permute.xlu0 %396
        %400 = vset.pattern.permute.xlu0 0
        %401 = vperm.xlu0 %400, %v303
        %v402 = vpop.permute.xlu0 %401
        %405 = vset.pattern.permute.xlu0 0
        %406 = vperm.xlu0 %405, %v304
        %v407 = vpop.permute.xlu0 %406
        %410 = vset.pattern.permute.xlu0 0
        %411 = vperm.xlu0 %410, %v305
        %v412 = vpop.permute.xlu0 %411
        %415 = vset.pattern.permute.xlu0 0
        %416 = vperm.xlu0 %415, %v306
        %v417 = vpop.permute.xlu0 %416
        %420 = vset.pattern.permute.xlu0 0
        %421 = vperm.xlu0 %420, %v307
        %v422 = vpop.permute.xlu0 %421
        %425 = vset.pattern.permute.xlu0 0
        %426 = vperm.xlu0 %425, %v308
        %v427 = vpop.permute.xlu0 %426
        %430 = vset.pattern.permute.xlu0 0
        %431 = vperm.xlu0 %430, %v309
        %v432 = vpop.permute.xlu0 %431
        %435 = vset.pattern.permute.xlu0 0
        %436 = vperm.xlu0 %435, %v310
        %v437 = vpop.permute.xlu0 %436
        %440 = vset.pattern.permute.xlu0 0
        %441 = vperm.xlu0 %440, %v311
        %v442 = vpop.permute.xlu0 %441
        %445 = vset.pattern.permute.xlu0 0
        %446 = vperm.xlu0 %445, %v312
        %v447 = vpop.permute.xlu0 %446
        %450 = vset.pattern.permute.xlu0 0
        %451 = vperm.xlu0 %450, %v313
        %v452 = vpop.permute.xlu0 %451
        %455 = vset.pattern.permute.xlu0 0
        %456 = vperm.xlu0 %455, %v314
        %v457 = vpop.permute.xlu0 %456
        %460 = vset.pattern.permute.xlu0 0
        %461 = vperm.xlu0 %460, %v315
        %v462 = vpop.permute.xlu0 %461
        %465 = vset.pattern.permute.xlu0 0
        %466 = vperm.xlu0 %465, %v316
        %v467 = vpop.permute.xlu0 %466
        %470 = vset.pattern.permute.xlu0 0
        %471 = vperm.xlu0 %470, %v317
        %v472 = vpop.permute.xlu0 %471
        %475 = vset.pattern.permute.xlu0 0
        %476 = vperm.xlu0 %475, %v318
        %v477 = vpop.permute.xlu0 %476
        %v479 = vmul.f32 %v250, %v322
        %v480 = vmul.f32 %v251, %v327
        %v481 = vmul.f32 %v252, %v332
        %v482 = vmul.f32 %v253, %v337
        %v483 = vmul.f32 %v254, %v342
        %v484 = vmul.f32 %v255, %v347
        %v485 = vmul.f32 %v256, %v352
        %v486 = vmul.f32 %v257, %v357
        %v487 = vmul.f32 %v258, %v362
        %v488 = vmul.f32 %v259, %v367
        %v489 = vmul.f32 %v260, %v372
        %v490 = vmul.f32 %v261, %v377
        %v491 = vmul.f32 %v262, %v382
        %v492 = vmul.f32 %v263, %v387
        %v493 = vmul.f32 %v264, %v392
        %v494 = vmul.f32 %v265, %v397
        %v495 = vmul.f32 %v266, %v402
        %v496 = vmul.f32 %v267, %v407
        %v497 = vmul.f32 %v268, %v412
        %v498 = vmul.f32 %v269, %v417
        %v499 = vmul.f32 %v270, %v422
        %v500 = vmul.f32 %v271, %v427
        %v501 = vmul.f32 %v272, %v432
        %v502 = vmul.f32 %v273, %v437
        %v503 = vmul.f32 %v274, %v442
        %v504 = vmul.f32 %v275, %v447
        %v505 = vmul.f32 %v276, %v452
        %v506 = vmul.f32 %v277, %v457
        %v507 = vmul.f32 %v278, %v462
        %v508 = vmul.f32 %v279, %v467
        %v509 = vmul.f32 %v280, %v472
        %v510 = vmul.f32 %v281, %v477
        %s511 = scalar_lea.vmem %s4, 256
        %v512 = vld [vmem:[%s511] sm:$0xff]
        %v513 = vld [vmem:[%s511 + $0x8] sm:$0xff]
        %v514 = vld [vmem:[%s511 + $0x10] sm:$0xff]
        %v515 = vld [vmem:[%s511 + $0x18] sm:$0xff]
        %v516 = vld [vmem:[%s511 + $0x20] sm:$0xff]
        %v517 = vld [vmem:[%s511 + $0x28] sm:$0xff]
        %v518 = vld [vmem:[%s511 + $0x30] sm:$0xff]
        %v519 = vld [vmem:[%s511 + $0x38] sm:$0xff]
        %v520 = vld [vmem:[%s511 + $0x40] sm:$0xff]
        %v521 = vld [vmem:[%s511 + $0x48] sm:$0xff]
        %v522 = vld [vmem:[%s511 + $0x50] sm:$0xff]
        %v523 = vld [vmem:[%s511 + $0x58] sm:$0xff]
        %v524 = vld [vmem:[%s511 + $0x60] sm:$0xff]
        %v525 = vld [vmem:[%s511 + $0x68] sm:$0xff]
        %v526 = vld [vmem:[%s511 + $0x70] sm:$0xff]
        %v527 = vld [vmem:[%s511 + $0x78] sm:$0xff]
        %v528 = vld [vmem:[%s511 + $0x80] sm:$0xff]
        %v529 = vld [vmem:[%s511 + $0x88] sm:$0xff]
        %v530 = vld [vmem:[%s511 + $0x90] sm:$0xff]
        %v531 = vld [vmem:[%s511 + $0x98] sm:$0xff]
        %v532 = vld [vmem:[%s511 + $0xa0] sm:$0xff]
        %v533 = vld [vmem:[%s511 + $0xa8] sm:$0xff]
        %v534 = vld [vmem:[%s511 + $0xb0] sm:$0xff]
        %v535 = vld [vmem:[%s511 + $0xb8] sm:$0xff]
        %v536 = vld [vmem:[%s511 + $0xc0] sm:$0xff]
        %v537 = vld [vmem:[%s511 + $0xc8] sm:$0xff]
        %v538 = vld [vmem:[%s511 + $0xd0] sm:$0xff]
        %v539 = vld [vmem:[%s511 + $0xd8] sm:$0xff]
        %v540 = vld [vmem:[%s511 + $0xe0] sm:$0xff]
        %v541 = vld [vmem:[%s511 + $0xe8] sm:$0xff]
        %v542 = vld [vmem:[%s511 + $0xf0] sm:$0xff]
        %v543 = vld [vmem:[%s511 + $0xf8] sm:$0xff]
        %545 = vset.pattern.permute.xlu0 0
        %546 = vperm.xlu0 %545, %v512
        %v547 = vpop.permute.xlu0 %546
        %549 = vset.pattern.permute.xlu0 0
        %550 = vperm.xlu0 %549, %v513
        %v551 = vpop.permute.xlu0 %550
        %553 = vset.pattern.permute.xlu0 0
        %554 = vperm.xlu0 %553, %v514
        %v555 = vpop.permute.xlu0 %554
        %557 = vset.pattern.permute.xlu0 0
        %558 = vperm.xlu0 %557, %v515
        %v559 = vpop.permute.xlu0 %558
        %561 = vset.pattern.permute.xlu0 0
        %562 = vperm.xlu0 %561, %v516
        %v563 = vpop.permute.xlu0 %562
        %565 = vset.pattern.permute.xlu0 0
        %566 = vperm.xlu0 %565, %v517
        %v567 = vpop.permute.xlu0 %566
        %569 = vset.pattern.permute.xlu0 0
        %570 = vperm.xlu0 %569, %v518
        %v571 = vpop.permute.xlu0 %570
        %573 = vset.pattern.permute.xlu0 0
        %574 = vperm.xlu0 %573, %v519
        %v575 = vpop.permute.xlu0 %574
        %577 = vset.pattern.permute.xlu0 0
        %578 = vperm.xlu0 %577, %v520
        %v579 = vpop.permute.xlu0 %578
        %581 = vset.pattern.permute.xlu0 0
        %582 = vperm.xlu0 %581, %v521
        %v583 = vpop.permute.xlu0 %582
        %585 = vset.pattern.permute.xlu0 0
        %586 = vperm.xlu0 %585, %v522
        %v587 = vpop.permute.xlu0 %586
        %589 = vset.pattern.permute.xlu0 0
        %590 = vperm.xlu0 %589, %v523
        %v591 = vpop.permute.xlu0 %590
        %593 = vset.pattern.permute.xlu0 0
        %594 = vperm.xlu0 %593, %v524
        %v595 = vpop.permute.xlu0 %594
        %597 = vset.pattern.permute.xlu0 0
        %598 = vperm.xlu0 %597, %v525
        %v599 = vpop.permute.xlu0 %598
        %601 = vset.pattern.permute.xlu0 0
        %602 = vperm.xlu0 %601, %v526
        %v603 = vpop.permute.xlu0 %602
        %605 = vset.pattern.permute.xlu0 0
        %606 = vperm.xlu0 %605, %v527
        %v607 = vpop.permute.xlu0 %606
        %609 = vset.pattern.permute.xlu0 0
        %610 = vperm.xlu0 %609, %v528
        %v611 = vpop.permute.xlu0 %610
        %613 = vset.pattern.permute.xlu0 0
        %614 = vperm.xlu0 %613, %v529
        %v615 = vpop.permute.xlu0 %614
        %617 = vset.pattern.permute.xlu0 0
        %618 = vperm.xlu0 %617, %v530
        %v619 = vpop.permute.xlu0 %618
        %621 = vset.pattern.permute.xlu0 0
        %622 = vperm.xlu0 %621, %v531
        %v623 = vpop.permute.xlu0 %622
        %625 = vset.pattern.permute.xlu0 0
        %626 = vperm.xlu0 %625, %v532
        %v627 = vpop.permute.xlu0 %626
        %629 = vset.pattern.permute.xlu0 0
        %630 = vperm.xlu0 %629, %v533
        %v631 = vpop.permute.xlu0 %630
        %633 = vset.pattern.permute.xlu0 0
        %634 = vperm.xlu0 %633, %v534
        %v635 = vpop.permute.xlu0 %634
        %637 = vset.pattern.permute.xlu0 0
        %638 = vperm.xlu0 %637, %v535
        %v639 = vpop.permute.xlu0 %638
        %641 = vset.pattern.permute.xlu0 0
        %642 = vperm.xlu0 %641, %v536
        %v643 = vpop.permute.xlu0 %642
        %645 = vset.pattern.permute.xlu0 0
        %646 = vperm.xlu0 %645, %v537
        %v647 = vpop.permute.xlu0 %646
        %649 = vset.pattern.permute.xlu0 0
        %650 = vperm.xlu0 %649, %v538
        %v651 = vpop.permute.xlu0 %650
        %653 = vset.pattern.permute.xlu0 0
        %654 = vperm.xlu0 %653, %v539
        %v655 = vpop.permute.xlu0 %654
        %657 = vset.pattern.permute.xlu0 0
        %658 = vperm.xlu0 %657, %v540
        %v659 = vpop.permute.xlu0 %658
        %661 = vset.pattern.permute.xlu0 0
        %662 = vperm.xlu0 %661, %v541
        %v663 = vpop.permute.xlu0 %662
        %665 = vset.pattern.permute.xlu0 0
        %666 = vperm.xlu0 %665, %v542
        %v667 = vpop.permute.xlu0 %666
        %669 = vset.pattern.permute.xlu0 0
        %670 = vperm.xlu0 %669, %v543
        %v671 = vpop.permute.xlu0 %670
        %vm672 = vcmask 1040384
        %v673 = vrot.slane %v547, 7
        %v674 = vrot.slane %v551, 7
        %v675 = vsel %vm672, %v673, %v674
        %v676 = vrot.slane %v555, 7
        %v677 = vsel %vm672, %v674, %v676
        %v678 = vrot.slane %v559, 7
        %v679 = vsel %vm672, %v676, %v678
        %v680 = vrot.slane %v563, 7
        %v681 = vsel %vm672, %v678, %v680
        %v682 = vrot.slane %v567, 7
        %v683 = vsel %vm672, %v680, %v682
        %v684 = vrot.slane %v571, 7
        %v685 = vsel %vm672, %v682, %v684
        %v686 = vrot.slane %v575, 7
        %v687 = vsel %vm672, %v684, %v686
        %v688 = vrot.slane %v579, 7
        %v689 = vsel %vm672, %v686, %v688
        %v690 = vrot.slane %v583, 7
        %v691 = vsel %vm672, %v688, %v690
        %v692 = vrot.slane %v587, 7
        %v693 = vsel %vm672, %v690, %v692
        %v694 = vrot.slane %v591, 7
        %v695 = vsel %vm672, %v692, %v694
        %v696 = vrot.slane %v595, 7
        %v697 = vsel %vm672, %v694, %v696
        %v698 = vrot.slane %v599, 7
        %v699 = vsel %vm672, %v696, %v698
        %v700 = vrot.slane %v603, 7
        %v701 = vsel %vm672, %v698, %v700
        %v702 = vrot.slane %v607, 7
        %v703 = vsel %vm672, %v700, %v702
        %v704 = vrot.slane %v611, 7
        %v705 = vsel %vm672, %v702, %v704
        %v706 = vrot.slane %v615, 7
        %v707 = vsel %vm672, %v704, %v706
        %v708 = vrot.slane %v619, 7
        %v709 = vsel %vm672, %v706, %v708
        %v710 = vrot.slane %v623, 7
        %v711 = vsel %vm672, %v708, %v710
        %v712 = vrot.slane %v627, 7
        %v713 = vsel %vm672, %v710, %v712
        %v714 = vrot.slane %v631, 7
        %v715 = vsel %vm672, %v712, %v714
        %v716 = vrot.slane %v635, 7
        %v717 = vsel %vm672, %v714, %v716
        %v718 = vrot.slane %v639, 7
        %v719 = vsel %vm672, %v716, %v718
        %v720 = vrot.slane %v643, 7
        %v721 = vsel %vm672, %v718, %v720
        %v722 = vrot.slane %v647, 7
        %v723 = vsel %vm672, %v720, %v722
        %v724 = vrot.slane %v651, 7
        %v725 = vsel %vm672, %v722, %v724
        %v726 = vrot.slane %v655, 7
        %v727 = vsel %vm672, %v724, %v726
        %v728 = vrot.slane %v659, 7
        %v729 = vsel %vm672, %v726, %v728
        %v730 = vrot.slane %v663, 7
        %v731 = vsel %vm672, %v728, %v730
        %v732 = vrot.slane %v667, 7
        %v733 = vsel %vm672, %v730, %v732
        %v734 = vrot.slane %v671, 7
        %v735 = vsel %vm672, %v732, %v734
        %v769 = vmul.f32 %v250, %v673
        %v770 = vmul.f32 %v251, %v675
        %v771 = vmul.f32 %v252, %v677
        %v772 = vmul.f32 %v253, %v679
        %v773 = vmul.f32 %v254, %v681
        %v774 = vmul.f32 %v255, %v683
        %v775 = vmul.f32 %v256, %v685
        %v776 = vmul.f32 %v257, %v687
        %v777 = vmul.f32 %v258, %v689
        %v778 = vmul.f32 %v259, %v691
        %v779 = vmul.f32 %v260, %v693
        %v780 = vmul.f32 %v261, %v695
        %v781 = vmul.f32 %v262, %v697
        %v782 = vmul.f32 %v263, %v699
        %v783 = vmul.f32 %v264, %v701
        %v784 = vmul.f32 %v265, %v703
        %v785 = vmul.f32 %v266, %v705
        %v786 = vmul.f32 %v267, %v707
        %v787 = vmul.f32 %v268, %v709
        %v788 = vmul.f32 %v269, %v711
        %v789 = vmul.f32 %v270, %v713
        %v790 = vmul.f32 %v271, %v715
        %v791 = vmul.f32 %v272, %v717
        %v792 = vmul.f32 %v273, %v719
        %v793 = vmul.f32 %v274, %v721
        %v794 = vmul.f32 %v275, %v723
        %v795 = vmul.f32 %v276, %v725
        %v796 = vmul.f32 %v277, %v727
        %v797 = vmul.f32 %v278, %v729
        %v798 = vmul.f32 %v279, %v731
        %v799 = vmul.f32 %v280, %v733
        %v800 = vmul.f32 %v281, %v735
        %v801 = vmul.f32 %v282, %v734
        %s802 = scalar_lea.vmem %s4, 512
        %v803 = vld [vmem:[%s802] sm:$0xff]
        %v804 = vld [vmem:[%s802 + $0x8] sm:$0xff]
        %v805 = vld [vmem:[%s802 + $0x10] sm:$0xff]
        %v806 = vld [vmem:[%s802 + $0x18] sm:$0xff]
        %v807 = vld [vmem:[%s802 + $0x20] sm:$0xff]
        %v808 = vld [vmem:[%s802 + $0x28] sm:$0xff]
        %v809 = vld [vmem:[%s802 + $0x30] sm:$0xff]
        %v810 = vld [vmem:[%s802 + $0x38] sm:$0xff]
        %v811 = vld [vmem:[%s802 + $0x40] sm:$0xff]
        %v812 = vld [vmem:[%s802 + $0x48] sm:$0xff]
        %v813 = vld [vmem:[%s802 + $0x50] sm:$0xff]
        %v814 = vld [vmem:[%s802 + $0x58] sm:$0xff]
        %v815 = vld [vmem:[%s802 + $0x60] sm:$0xff]
        %v816 = vld [vmem:[%s802 + $0x68] sm:$0xff]
        %v817 = vld [vmem:[%s802 + $0x70] sm:$0xff]
        %v818 = vld [vmem:[%s802 + $0x78] sm:$0xff]
        %v819 = vld [vmem:[%s802 + $0x80] sm:$0xff]
        %v820 = vld [vmem:[%s802 + $0x88] sm:$0xff]
        %v821 = vld [vmem:[%s802 + $0x90] sm:$0xff]
        %v822 = vld [vmem:[%s802 + $0x98] sm:$0xff]
        %v823 = vld [vmem:[%s802 + $0xa0] sm:$0xff]
        %v824 = vld [vmem:[%s802 + $0xa8] sm:$0xff]
        %v825 = vld [vmem:[%s802 + $0xb0] sm:$0xff]
        %v826 = vld [vmem:[%s802 + $0xb8] sm:$0xff]
        %v827 = vld [vmem:[%s802 + $0xc0] sm:$0xff]
        %v828 = vld [vmem:[%s802 + $0xc8] sm:$0xff]
        %v829 = vld [vmem:[%s802 + $0xd0] sm:$0xff]
        %v830 = vld [vmem:[%s802 + $0xd8] sm:$0xff]
        %v831 = vld [vmem:[%s802 + $0xe0] sm:$0xff]
        %v832 = vld [vmem:[%s802 + $0xe8] sm:$0xff]
        %v833 = vld [vmem:[%s802 + $0xf0] sm:$0xff]
        %v834 = vld [vmem:[%s802 + $0xf8] sm:$0xff]
        %836 = vset.pattern.permute.xlu0 0
        %837 = vperm.xlu0 %836, %v803
        %v838 = vpop.permute.xlu0 %837
        %840 = vset.pattern.permute.xlu0 0
        %841 = vperm.xlu0 %840, %v804
        %v842 = vpop.permute.xlu0 %841
        %844 = vset.pattern.permute.xlu0 0
        %845 = vperm.xlu0 %844, %v805
        %v846 = vpop.permute.xlu0 %845
        %848 = vset.pattern.permute.xlu0 0
        %849 = vperm.xlu0 %848, %v806
        %v850 = vpop.permute.xlu0 %849
        %852 = vset.pattern.permute.xlu0 0
        %853 = vperm.xlu0 %852, %v807
        %v854 = vpop.permute.xlu0 %853
        %856 = vset.pattern.permute.xlu0 0
        %857 = vperm.xlu0 %856, %v808
        %v858 = vpop.permute.xlu0 %857
        %860 = vset.pattern.permute.xlu0 0
        %861 = vperm.xlu0 %860, %v809
        %v862 = vpop.permute.xlu0 %861
        %864 = vset.pattern.permute.xlu0 0
        %865 = vperm.xlu0 %864, %v810
        %v866 = vpop.permute.xlu0 %865
        %868 = vset.pattern.permute.xlu0 0
        %869 = vperm.xlu0 %868, %v811
        %v870 = vpop.permute.xlu0 %869
        %872 = vset.pattern.permute.xlu0 0
        %873 = vperm.xlu0 %872, %v812
        %v874 = vpop.permute.xlu0 %873
        %876 = vset.pattern.permute.xlu0 0
        %877 = vperm.xlu0 %876, %v813
        %v878 = vpop.permute.xlu0 %877
        %880 = vset.pattern.permute.xlu0 0
        %881 = vperm.xlu0 %880, %v814
        %v882 = vpop.permute.xlu0 %881
        %884 = vset.pattern.permute.xlu0 0
        %885 = vperm.xlu0 %884, %v815
        %v886 = vpop.permute.xlu0 %885
        %888 = vset.pattern.permute.xlu0 0
        %889 = vperm.xlu0 %888, %v816
        %v890 = vpop.permute.xlu0 %889
        %892 = vset.pattern.permute.xlu0 0
        %893 = vperm.xlu0 %892, %v817
        %v894 = vpop.permute.xlu0 %893
        %896 = vset.pattern.permute.xlu0 0
        %897 = vperm.xlu0 %896, %v818
        %v898 = vpop.permute.xlu0 %897
        %900 = vset.pattern.permute.xlu0 0
        %901 = vperm.xlu0 %900, %v819
        %v902 = vpop.permute.xlu0 %901
        %904 = vset.pattern.permute.xlu0 0
        %905 = vperm.xlu0 %904, %v820
        %v906 = vpop.permute.xlu0 %905
        %908 = vset.pattern.permute.xlu0 0
        %909 = vperm.xlu0 %908, %v821
        %v910 = vpop.permute.xlu0 %909
        %912 = vset.pattern.permute.xlu0 0
        %913 = vperm.xlu0 %912, %v822
        %v914 = vpop.permute.xlu0 %913
        %916 = vset.pattern.permute.xlu0 0
        %917 = vperm.xlu0 %916, %v823
        %v918 = vpop.permute.xlu0 %917
        %920 = vset.pattern.permute.xlu0 0
        %921 = vperm.xlu0 %920, %v824
        %v922 = vpop.permute.xlu0 %921
        %924 = vset.pattern.permute.xlu0 0
        %925 = vperm.xlu0 %924, %v825
        %v926 = vpop.permute.xlu0 %925
        %928 = vset.pattern.permute.xlu0 0
        %929 = vperm.xlu0 %928, %v826
        %v930 = vpop.permute.xlu0 %929
        %932 = vset.pattern.permute.xlu0 0
        %933 = vperm.xlu0 %932, %v827
        %v934 = vpop.permute.xlu0 %933
        %936 = vset.pattern.permute.xlu0 0
        %937 = vperm.xlu0 %936, %v828
        %v938 = vpop.permute.xlu0 %937
        %940 = vset.pattern.permute.xlu0 0
        %941 = vperm.xlu0 %940, %v829
        %v942 = vpop.permute.xlu0 %941
        %944 = vset.pattern.permute.xlu0 0
        %945 = vperm.xlu0 %944, %v830
        %v946 = vpop.permute.xlu0 %945
        %948 = vset.pattern.permute.xlu0 0
        %949 = vperm.xlu0 %948, %v831
        %v950 = vpop.permute.xlu0 %949
        %952 = vset.pattern.permute.xlu0 0
        %953 = vperm.xlu0 %952, %v832
        %v954 = vpop.permute.xlu0 %953
        %956 = vset.pattern.permute.xlu0 0
        %957 = vperm.xlu0 %956, %v833
        %v958 = vpop.permute.xlu0 %957
        %960 = vset.pattern.permute.xlu0 0
        %961 = vperm.xlu0 %960, %v834
        %v962 = vpop.permute.xlu0 %961
        %vm963 = vcmask 1041408
        %v964 = vrot.slane %v838, 6
        %v965 = vrot.slane %v842, 6
        %v966 = vsel %vm963, %v964, %v965
        %v967 = vrot.slane %v846, 6
        %v968 = vsel %vm963, %v965, %v967
        %v969 = vrot.slane %v850, 6
        %v970 = vsel %vm963, %v967, %v969
        %v971 = vrot.slane %v854, 6
        %v972 = vsel %vm963, %v969, %v971
        %v973 = vrot.slane %v858, 6
        %v974 = vsel %vm963, %v971, %v973
        %v975 = vrot.slane %v862, 6
        %v976 = vsel %vm963, %v973, %v975
        %v977 = vrot.slane %v866, 6
        %v978 = vsel %vm963, %v975, %v977
        %v979 = vrot.slane %v870, 6
        %v980 = vsel %vm963, %v977, %v979
        %v981 = vrot.slane %v874, 6
        %v982 = vsel %vm963, %v979, %v981
        %v983 = vrot.slane %v878, 6
        %v984 = vsel %vm963, %v981, %v983
        %v985 = vrot.slane %v882, 6
        %v986 = vsel %vm963, %v983, %v985
        %v987 = vrot.slane %v886, 6
        %v988 = vsel %vm963, %v985, %v987
        %v989 = vrot.slane %v890, 6
        %v990 = vsel %vm963, %v987, %v989
        %v991 = vrot.slane %v894, 6
        %v992 = vsel %vm963, %v989, %v991
        %v993 = vrot.slane %v898, 6
        %v994 = vsel %vm963, %v991, %v993
        %v995 = vrot.slane %v902, 6
        %v996 = vsel %vm963, %v993, %v995
        %v997 = vrot.slane %v906, 6
        %v998 = vsel %vm963, %v995, %v997
        %v999 = vrot.slane %v910, 6
        %v1000 = vsel %vm963, %v997, %v999
        %v1001 = vrot.slane %v914, 6
        %v1002 = vsel %vm963, %v999, %v1001
        %v1003 = vrot.slane %v918, 6
        %v1004 = vsel %vm963, %v1001, %v1003
        %v1005 = vrot.slane %v922, 6
        %v1006 = vsel %vm963, %v1003, %v1005
        %v1007 = vrot.slane %v926, 6
        %v1008 = vsel %vm963, %v1005, %v1007
        %v1009 = vrot.slane %v930, 6
        %v1010 = vsel %vm963, %v1007, %v1009
        %v1011 = vrot.slane %v934, 6
        %v1012 = vsel %vm963, %v1009, %v1011
        %v1013 = vrot.slane %v938, 6
        %v1014 = vsel %vm963, %v1011, %v1013
        %v1015 = vrot.slane %v942, 6
        %v1016 = vsel %vm963, %v1013, %v1015
        %v1017 = vrot.slane %v946, 6
        %v1018 = vsel %vm963, %v1015, %v1017
        %v1019 = vrot.slane %v950, 6
        %v1020 = vsel %vm963, %v1017, %v1019
        %v1021 = vrot.slane %v954, 6
        %v1022 = vsel %vm963, %v1019, %v1021
        %v1023 = vrot.slane %v958, 6
        %v1024 = vsel %vm963, %v1021, %v1023
        %v1025 = vrot.slane %v962, 6
        %v1026 = vsel %vm963, %v1023, %v1025
        %v1060 = vmul.f32 %v250, %v964
        %v1061 = vmul.f32 %v251, %v966
        %v1062 = vmul.f32 %v252, %v968
        %v1063 = vmul.f32 %v253, %v970
        %v1064 = vmul.f32 %v254, %v972
        %v1065 = vmul.f32 %v255, %v974
        %v1066 = vmul.f32 %v256, %v976
        %v1067 = vmul.f32 %v257, %v978
        %v1068 = vmul.f32 %v258, %v980
        %v1069 = vmul.f32 %v259, %v982
        %v1070 = vmul.f32 %v260, %v984
        %v1071 = vmul.f32 %v261, %v986
        %v1072 = vmul.f32 %v262, %v988
        %v1073 = vmul.f32 %v263, %v990
        %v1074 = vmul.f32 %v264, %v992
        %v1075 = vmul.f32 %v265, %v994
        %v1076 = vmul.f32 %v266, %v996
        %v1077 = vmul.f32 %v267, %v998
        %v1078 = vmul.f32 %v268, %v1000
        %v1079 = vmul.f32 %v269, %v1002
        %v1080 = vmul.f32 %v270, %v1004
        %v1081 = vmul.f32 %v271, %v1006
        %v1082 = vmul.f32 %v272, %v1008
        %v1083 = vmul.f32 %v273, %v1010
        %v1084 = vmul.f32 %v274, %v1012
        %v1085 = vmul.f32 %v275, %v1014
        %v1086 = vmul.f32 %v276, %v1016
        %v1087 = vmul.f32 %v277, %v1018
        %v1088 = vmul.f32 %v278, %v1020
        %v1089 = vmul.f32 %v279, %v1022
        %v1090 = vmul.f32 %v280, %v1024
        %v1091 = vmul.f32 %v281, %v1026
        %v1092 = vmul.f32 %v282, %v1025
        %s1093 = scalar_lea.vmem %s4, 768
        %v1094 = vld [vmem:[%s1093] sm:$0xff]
        %v1095 = vld [vmem:[%s1093 + $0x8] sm:$0xff]
        %v1096 = vld [vmem:[%s1093 + $0x10] sm:$0xff]
        %v1097 = vld [vmem:[%s1093 + $0x18] sm:$0xff]
        %v1098 = vld [vmem:[%s1093 + $0x20] sm:$0xff]
        %v1099 = vld [vmem:[%s1093 + $0x28] sm:$0xff]
        %v1100 = vld [vmem:[%s1093 + $0x30] sm:$0xff]
        %v1101 = vld [vmem:[%s1093 + $0x38] sm:$0xff]
        %v1102 = vld [vmem:[%s1093 + $0x40] sm:$0xff]
        %v1103 = vld [vmem:[%s1093 + $0x48] sm:$0xff]
        %v1104 = vld [vmem:[%s1093 + $0x50] sm:$0xff]
        %v1105 = vld [vmem:[%s1093 + $0x58] sm:$0xff]
        %v1106 = vld [vmem:[%s1093 + $0x60] sm:$0xff]
        %v1107 = vld [vmem:[%s1093 + $0x68] sm:$0xff]
        %v1108 = vld [vmem:[%s1093 + $0x70] sm:$0xff]
        %v1109 = vld [vmem:[%s1093 + $0x78] sm:$0xff]
        %v1110 = vld [vmem:[%s1093 + $0x80] sm:$0xff]
        %v1111 = vld [vmem:[%s1093 + $0x88] sm:$0xff]
        %v1112 = vld [vmem:[%s1093 + $0x90] sm:$0xff]
        %v1113 = vld [vmem:[%s1093 + $0x98] sm:$0xff]
        %v1114 = vld [vmem:[%s1093 + $0xa0] sm:$0xff]
        %v1115 = vld [vmem:[%s1093 + $0xa8] sm:$0xff]
        %v1116 = vld [vmem:[%s1093 + $0xb0] sm:$0xff]
        %v1117 = vld [vmem:[%s1093 + $0xb8] sm:$0xff]
        %v1118 = vld [vmem:[%s1093 + $0xc0] sm:$0xff]
        %v1119 = vld [vmem:[%s1093 + $0xc8] sm:$0xff]
        %v1120 = vld [vmem:[%s1093 + $0xd0] sm:$0xff]
        %v1121 = vld [vmem:[%s1093 + $0xd8] sm:$0xff]
        %v1122 = vld [vmem:[%s1093 + $0xe0] sm:$0xff]
        %v1123 = vld [vmem:[%s1093 + $0xe8] sm:$0xff]
        %v1124 = vld [vmem:[%s1093 + $0xf0] sm:$0xff]
        %v1125 = vld [vmem:[%s1093 + $0xf8] sm:$0xff]
        %1127 = vset.pattern.permute.xlu0 0
        %1128 = vperm.xlu0 %1127, %v1094
        %v1129 = vpop.permute.xlu0 %1128
        %1132 = vset.pattern.permute.xlu0 0
        %1133 = vperm.xlu0 %1132, %v1095
        %v1134 = vpop.permute.xlu0 %1133
        %1137 = vset.pattern.permute.xlu0 0
        %1138 = vperm.xlu0 %1137, %v1096
        %v1139 = vpop.permute.xlu0 %1138
        %1142 = vset.pattern.permute.xlu0 0
        %1143 = vperm.xlu0 %1142, %v1097
        %v1144 = vpop.permute.xlu0 %1143
        %1147 = vset.pattern.permute.xlu0 0
        %1148 = vperm.xlu0 %1147, %v1098
        %v1149 = vpop.permute.xlu0 %1148
        %1152 = vset.pattern.permute.xlu0 0
        %1153 = vperm.xlu0 %1152, %v1099
        %v1154 = vpop.permute.xlu0 %1153
        %1157 = vset.pattern.permute.xlu0 0
        %1158 = vperm.xlu0 %1157, %v1100
        %v1159 = vpop.permute.xlu0 %1158
        %1162 = vset.pattern.permute.xlu0 0
        %1163 = vperm.xlu0 %1162, %v1101
        %v1164 = vpop.permute.xlu0 %1163
        %1167 = vset.pattern.permute.xlu0 0
        %1168 = vperm.xlu0 %1167, %v1102
        %v1169 = vpop.permute.xlu0 %1168
        %1172 = vset.pattern.permute.xlu0 0
        %1173 = vperm.xlu0 %1172, %v1103
        %v1174 = vpop.permute.xlu0 %1173
        %1177 = vset.pattern.permute.xlu0 0
        %1178 = vperm.xlu0 %1177, %v1104
        %v1179 = vpop.permute.xlu0 %1178
        %1182 = vset.pattern.permute.xlu0 0
        %1183 = vperm.xlu0 %1182, %v1105
        %v1184 = vpop.permute.xlu0 %1183
        %1187 = vset.pattern.permute.xlu0 0
        %1188 = vperm.xlu0 %1187, %v1106
        %v1189 = vpop.permute.xlu0 %1188
        %1192 = vset.pattern.permute.xlu0 0
        %1193 = vperm.xlu0 %1192, %v1107
        %v1194 = vpop.permute.xlu0 %1193
        %1197 = vset.pattern.permute.xlu0 0
        %1198 = vperm.xlu0 %1197, %v1108
        %v1199 = vpop.permute.xlu0 %1198
        %1202 = vset.pattern.permute.xlu0 0
        %1203 = vperm.xlu0 %1202, %v1109
        %v1204 = vpop.permute.xlu0 %1203
        %1207 = vset.pattern.permute.xlu0 0
        %1208 = vperm.xlu0 %1207, %v1110
        %v1209 = vpop.permute.xlu0 %1208
        %1212 = vset.pattern.permute.xlu0 0
        %1213 = vperm.xlu0 %1212, %v1111
        %v1214 = vpop.permute.xlu0 %1213
        %1217 = vset.pattern.permute.xlu0 0
        %1218 = vperm.xlu0 %1217, %v1112
        %v1219 = vpop.permute.xlu0 %1218
        %1222 = vset.pattern.permute.xlu0 0
        %1223 = vperm.xlu0 %1222, %v1113
        %v1224 = vpop.permute.xlu0 %1223
        %1227 = vset.pattern.permute.xlu0 0
        %1228 = vperm.xlu0 %1227, %v1114
        %v1229 = vpop.permute.xlu0 %1228
        %1232 = vset.pattern.permute.xlu0 0
        %1233 = vperm.xlu0 %1232, %v1115
        %v1234 = vpop.permute.xlu0 %1233
        %1237 = vset.pattern.permute.xlu0 0
        %1238 = vperm.xlu0 %1237, %v1116
        %v1239 = vpop.permute.xlu0 %1238
        %1242 = vset.pattern.permute.xlu0 0
        %1243 = vperm.xlu0 %1242, %v1117
        %v1244 = vpop.permute.xlu0 %1243
        %1247 = vset.pattern.permute.xlu0 0
        %1248 = vperm.xlu0 %1247, %v1118
        %v1249 = vpop.permute.xlu0 %1248
        %1252 = vset.pattern.permute.xlu0 0
        %1253 = vperm.xlu0 %1252, %v1119
        %v1254 = vpop.permute.xlu0 %1253
        %1257 = vset.pattern.permute.xlu0 0
        %1258 = vperm.xlu0 %1257, %v1120
        %v1259 = vpop.permute.xlu0 %1258
        %1262 = vset.pattern.permute.xlu0 0
        %1263 = vperm.xlu0 %1262, %v1121
        %v1264 = vpop.permute.xlu0 %1263
        %1267 = vset.pattern.permute.xlu0 0
        %1268 = vperm.xlu0 %1267, %v1122
        %v1269 = vpop.permute.xlu0 %1268
        %1272 = vset.pattern.permute.xlu0 0
        %1273 = vperm.xlu0 %1272, %v1123
        %v1274 = vpop.permute.xlu0 %1273
        %1277 = vset.pattern.permute.xlu0 0
        %1278 = vperm.xlu0 %1277, %v1124
        %v1279 = vpop.permute.xlu0 %1278
        %1282 = vset.pattern.permute.xlu0 0
        %1283 = vperm.xlu0 %1282, %v1125
        %v1284 = vpop.permute.xlu0 %1283
        %v1286 = vmul.f32 %v252, %v1129
        %v1287 = vmul.f32 %v253, %v1134
        %v1288 = vmul.f32 %v254, %v1139
        %v1289 = vmul.f32 %v255, %v1144
        %v1290 = vmul.f32 %v256, %v1149
        %v1291 = vmul.f32 %v257, %v1154
        %v1292 = vmul.f32 %v258, %v1159
        %v1293 = vmul.f32 %v259, %v1164
        %v1294 = vmul.f32 %v260, %v1169
        %v1295 = vmul.f32 %v261, %v1174
        %v1296 = vmul.f32 %v262, %v1179
        %v1297 = vmul.f32 %v263, %v1184
        %v1298 = vmul.f32 %v264, %v1189
        %v1299 = vmul.f32 %v265, %v1194
        %v1300 = vmul.f32 %v266, %v1199
        %v1301 = vmul.f32 %v267, %v1204
        %v1302 = vmul.f32 %v268, %v1209
        %v1303 = vmul.f32 %v269, %v1214
        %v1304 = vmul.f32 %v270, %v1219
        %v1305 = vmul.f32 %v271, %v1224
        %v1306 = vmul.f32 %v272, %v1229
        %v1307 = vmul.f32 %v273, %v1234
        %v1308 = vmul.f32 %v274, %v1239
        %v1309 = vmul.f32 %v275, %v1244
        %v1310 = vmul.f32 %v276, %v1249
        %v1311 = vmul.f32 %v277, %v1254
        %v1312 = vmul.f32 %v278, %v1259
        %v1313 = vmul.f32 %v279, %v1264
        %v1314 = vmul.f32 %v280, %v1269
        %v1315 = vmul.f32 %v281, %v1274
        %v1316 = vmul.f32 %v282, %v1279
        %v1317 = vmul.f32 %v283, %v1284
        %s1318 = scalar_lea.vmem %s4, 1024
        %v1319 = vld [vmem:[%s1318] sm:$0xff]
        %v1320 = vld [vmem:[%s1318 + $0x8] sm:$0xff]
        %v1321 = vld [vmem:[%s1318 + $0x10] sm:$0xff]
        %v1322 = vld [vmem:[%s1318 + $0x18] sm:$0xff]
        %v1323 = vld [vmem:[%s1318 + $0x20] sm:$0xff]
        %v1324 = vld [vmem:[%s1318 + $0x28] sm:$0xff]
        %v1325 = vld [vmem:[%s1318 + $0x30] sm:$0xff]
        %v1326 = vld [vmem:[%s1318 + $0x38] sm:$0xff]
        %v1327 = vld [vmem:[%s1318 + $0x40] sm:$0xff]
        %v1328 = vld [vmem:[%s1318 + $0x48] sm:$0xff]
        %v1329 = vld [vmem:[%s1318 + $0x50] sm:$0xff]
        %v1330 = vld [vmem:[%s1318 + $0x58] sm:$0xff]
        %v1331 = vld [vmem:[%s1318 + $0x60] sm:$0xff]
        %v1332 = vld [vmem:[%s1318 + $0x68] sm:$0xff]
        %v1333 = vld [vmem:[%s1318 + $0x70] sm:$0xff]
        %v1334 = vld [vmem:[%s1318 + $0x78] sm:$0xff]
        %v1335 = vld [vmem:[%s1318 + $0x80] sm:$0xff]
        %v1336 = vld [vmem:[%s1318 + $0x88] sm:$0xff]
        %v1337 = vld [vmem:[%s1318 + $0x90] sm:$0xff]
        %v1338 = vld [vmem:[%s1318 + $0x98] sm:$0xff]
        %v1339 = vld [vmem:[%s1318 + $0xa0] sm:$0xff]
        %v1340 = vld [vmem:[%s1318 + $0xa8] sm:$0xff]
        %v1341 = vld [vmem:[%s1318 + $0xb0] sm:$0xff]
        %v1342 = vld [vmem:[%s1318 + $0xb8] sm:$0xff]
        %v1343 = vld [vmem:[%s1318 + $0xc0] sm:$0xff]
        %v1344 = vld [vmem:[%s1318 + $0xc8] sm:$0xff]
        %v1345 = vld [vmem:[%s1318 + $0xd0] sm:$0xff]
        %v1346 = vld [vmem:[%s1318 + $0xd8] sm:$0xff]
        %v1347 = vld [vmem:[%s1318 + $0xe0] sm:$0xff]
        %v1348 = vld [vmem:[%s1318 + $0xe8] sm:$0xff]
        %v1349 = vld [vmem:[%s1318 + $0xf0] sm:$0xff]
        %v1350 = vld [vmem:[%s1318 + $0xf8] sm:$0xff]
        %1352 = vset.pattern.permute.xlu0 0
        %1353 = vperm.xlu0 %1352, %v1319
        %v1354 = vpop.permute.xlu0 %1353
        %1356 = vset.pattern.permute.xlu0 0
        %1357 = vperm.xlu0 %1356, %v1320
        %v1358 = vpop.permute.xlu0 %1357
        %1360 = vset.pattern.permute.xlu0 0
        %1361 = vperm.xlu0 %1360, %v1321
        %v1362 = vpop.permute.xlu0 %1361
        %1364 = vset.pattern.permute.xlu0 0
        %1365 = vperm.xlu0 %1364, %v1322
        %v1366 = vpop.permute.xlu0 %1365
        %1368 = vset.pattern.permute.xlu0 0
        %1369 = vperm.xlu0 %1368, %v1323
        %v1370 = vpop.permute.xlu0 %1369
        %1372 = vset.pattern.permute.xlu0 0
        %1373 = vperm.xlu0 %1372, %v1324
        %v1374 = vpop.permute.xlu0 %1373
        %1376 = vset.pattern.permute.xlu0 0
        %1377 = vperm.xlu0 %1376, %v1325
        %v1378 = vpop.permute.xlu0 %1377
        %1380 = vset.pattern.permute.xlu0 0
        %1381 = vperm.xlu0 %1380, %v1326
        %v1382 = vpop.permute.xlu0 %1381
        %1384 = vset.pattern.permute.xlu0 0
        %1385 = vperm.xlu0 %1384, %v1327
        %v1386 = vpop.permute.xlu0 %1385
        %1388 = vset.pattern.permute.xlu0 0
        %1389 = vperm.xlu0 %1388, %v1328
        %v1390 = vpop.permute.xlu0 %1389
        %1392 = vset.pattern.permute.xlu0 0
        %1393 = vperm.xlu0 %1392, %v1329
        %v1394 = vpop.permute.xlu0 %1393
        %1396 = vset.pattern.permute.xlu0 0
        %1397 = vperm.xlu0 %1396, %v1330
        %v1398 = vpop.permute.xlu0 %1397
        %1400 = vset.pattern.permute.xlu0 0
        %1401 = vperm.xlu0 %1400, %v1331
        %v1402 = vpop.permute.xlu0 %1401
        %1404 = vset.pattern.permute.xlu0 0
        %1405 = vperm.xlu0 %1404, %v1332
        %v1406 = vpop.permute.xlu0 %1405
        %1408 = vset.pattern.permute.xlu0 0
        %1409 = vperm.xlu0 %1408, %v1333
        %v1410 = vpop.permute.xlu0 %1409
        %1412 = vset.pattern.permute.xlu0 0
        %1413 = vperm.xlu0 %1412, %v1334
        %v1414 = vpop.permute.xlu0 %1413
        %1416 = vset.pattern.permute.xlu0 0
        %1417 = vperm.xlu0 %1416, %v1335
        %v1418 = vpop.permute.xlu0 %1417
        %1420 = vset.pattern.permute.xlu0 0
        %1421 = vperm.xlu0 %1420, %v1336
        %v1422 = vpop.permute.xlu0 %1421
        %1424 = vset.pattern.permute.xlu0 0
        %1425 = vperm.xlu0 %1424, %v1337
        %v1426 = vpop.permute.xlu0 %1425
        %1428 = vset.pattern.permute.xlu0 0
        %1429 = vperm.xlu0 %1428, %v1338
        %v1430 = vpop.permute.xlu0 %1429
        %1432 = vset.pattern.permute.xlu0 0
        %1433 = vperm.xlu0 %1432, %v1339
        %v1434 = vpop.permute.xlu0 %1433
        %1436 = vset.pattern.permute.xlu0 0
        %1437 = vperm.xlu0 %1436, %v1340
        %v1438 = vpop.permute.xlu0 %1437
        %1440 = vset.pattern.permute.xlu0 0
        %1441 = vperm.xlu0 %1440, %v1341
        %v1442 = vpop.permute.xlu0 %1441
        %1444 = vset.pattern.permute.xlu0 0
        %1445 = vperm.xlu0 %1444, %v1342
        %v1446 = vpop.permute.xlu0 %1445
        %1448 = vset.pattern.permute.xlu0 0
        %1449 = vperm.xlu0 %1448, %v1343
        %v1450 = vpop.permute.xlu0 %1449
        %1452 = vset.pattern.permute.xlu0 0
        %1453 = vperm.xlu0 %1452, %v1344
        %v1454 = vpop.permute.xlu0 %1453
        %1456 = vset.pattern.permute.xlu0 0
        %1457 = vperm.xlu0 %1456, %v1345
        %v1458 = vpop.permute.xlu0 %1457
        %1460 = vset.pattern.permute.xlu0 0
        %1461 = vperm.xlu0 %1460, %v1346
        %v1462 = vpop.permute.xlu0 %1461
        %1464 = vset.pattern.permute.xlu0 0
        %1465 = vperm.xlu0 %1464, %v1347
        %v1466 = vpop.permute.xlu0 %1465
        %1468 = vset.pattern.permute.xlu0 0
        %1469 = vperm.xlu0 %1468, %v1348
        %v1470 = vpop.permute.xlu0 %1469
        %1472 = vset.pattern.permute.xlu0 0
        %1473 = vperm.xlu0 %1472, %v1349
        %v1474 = vpop.permute.xlu0 %1473
        %1476 = vset.pattern.permute.xlu0 0
        %1477 = vperm.xlu0 %1476, %v1350
        %v1478 = vpop.permute.xlu0 %1477
        %v1479 = vrot.slane %v1354, 7
        %v1480 = vrot.slane %v1358, 7
        %v1481 = vsel %vm672, %v1479, %v1480
        %v1482 = vrot.slane %v1362, 7
        %v1483 = vsel %vm672, %v1480, %v1482
        %v1484 = vrot.slane %v1366, 7
        %v1485 = vsel %vm672, %v1482, %v1484
        %v1486 = vrot.slane %v1370, 7
        %v1487 = vsel %vm672, %v1484, %v1486
        %v1488 = vrot.slane %v1374, 7
        %v1489 = vsel %vm672, %v1486, %v1488
        %v1490 = vrot.slane %v1378, 7
        %v1491 = vsel %vm672, %v1488, %v1490
        %v1492 = vrot.slane %v1382, 7
        %v1493 = vsel %vm672, %v1490, %v1492
        %v1494 = vrot.slane %v1386, 7
        %v1495 = vsel %vm672, %v1492, %v1494
        %v1496 = vrot.slane %v1390, 7
        %v1497 = vsel %vm672, %v1494, %v1496
        %v1498 = vrot.slane %v1394, 7
        %v1499 = vsel %vm672, %v1496, %v1498
        %v1500 = vrot.slane %v1398, 7
        %v1501 = vsel %vm672, %v1498, %v1500
        %v1502 = vrot.slane %v1402, 7
        %v1503 = vsel %vm672, %v1500, %v1502
        %v1504 = vrot.slane %v1406, 7
        %v1505 = vsel %vm672, %v1502, %v1504
        %v1506 = vrot.slane %v1410, 7
        %v1507 = vsel %vm672, %v1504, %v1506
        %v1508 = vrot.slane %v1414, 7
        %v1509 = vsel %vm672, %v1506, %v1508
        %v1510 = vrot.slane %v1418, 7
        %v1511 = vsel %vm672, %v1508, %v1510
        %v1512 = vrot.slane %v1422, 7
        %v1513 = vsel %vm672, %v1510, %v1512
        %v1514 = vrot.slane %v1426, 7
        %v1515 = vsel %vm672, %v1512, %v1514
        %v1516 = vrot.slane %v1430, 7
        %v1517 = vsel %vm672, %v1514, %v1516
        %v1518 = vrot.slane %v1434, 7
        %v1519 = vsel %vm672, %v1516, %v1518
        %v1520 = vrot.slane %v1438, 7
        %v1521 = vsel %vm672, %v1518, %v1520
        %v1522 = vrot.slane %v1442, 7
        %v1523 = vsel %vm672, %v1520, %v1522
        %v1524 = vrot.slane %v1446, 7
        %v1525 = vsel %vm672, %v1522, %v1524
        %v1526 = vrot.slane %v1450, 7
        %v1527 = vsel %vm672, %v1524, %v1526
        %v1528 = vrot.slane %v1454, 7
        %v1529 = vsel %vm672, %v1526, %v1528
        %v1530 = vrot.slane %v1458, 7
        %v1531 = vsel %vm672, %v1528, %v1530
        %v1532 = vrot.slane %v1462, 7
        %v1533 = vsel %vm672, %v1530, %v1532
        %v1534 = vrot.slane %v1466, 7
        %v1535 = vsel %vm672, %v1532, %v1534
        %v1536 = vrot.slane %v1470, 7
        %v1537 = vsel %vm672, %v1534, %v1536
        %v1538 = vrot.slane %v1474, 7
        %v1539 = vsel %vm672, %v1536, %v1538
        %v1540 = vrot.slane %v1478, 7
        %v1541 = vsel %vm672, %v1538, %v1540
        %v1575 = vmul.f32 %v252, %v1479
        %v1576 = vmul.f32 %v253, %v1481
        %v1577 = vmul.f32 %v254, %v1483
        %v1578 = vmul.f32 %v255, %v1485
        %v1579 = vmul.f32 %v256, %v1487
        %v1580 = vmul.f32 %v257, %v1489
        %v1581 = vmul.f32 %v258, %v1491
        %v1582 = vmul.f32 %v259, %v1493
        %v1583 = vmul.f32 %v260, %v1495
        %v1584 = vmul.f32 %v261, %v1497
        %v1585 = vmul.f32 %v262, %v1499
        %v1586 = vmul.f32 %v263, %v1501
        %v1587 = vmul.f32 %v264, %v1503
        %v1588 = vmul.f32 %v265, %v1505
        %v1589 = vmul.f32 %v266, %v1507
        %v1590 = vmul.f32 %v267, %v1509
        %v1591 = vmul.f32 %v268, %v1511
        %v1592 = vmul.f32 %v269, %v1513
        %v1593 = vmul.f32 %v270, %v1515
        %v1594 = vmul.f32 %v271, %v1517
        %v1595 = vmul.f32 %v272, %v1519
        %v1596 = vmul.f32 %v273, %v1521
        %v1597 = vmul.f32 %v274, %v1523
        %v1598 = vmul.f32 %v275, %v1525
        %v1599 = vmul.f32 %v276, %v1527
        %v1600 = vmul.f32 %v277, %v1529
        %v1601 = vmul.f32 %v278, %v1531
        %v1602 = vmul.f32 %v279, %v1533
        %v1603 = vmul.f32 %v280, %v1535
        %v1604 = vmul.f32 %v281, %v1537
        %v1605 = vmul.f32 %v282, %v1539
        %v1606 = vmul.f32 %v283, %v1541
        %v1607 = vmul.f32 %v284, %v1540
        %s1608 = scalar_lea.vmem %s4, 1280
        %v1609 = vld [vmem:[%s1608] sm:$0xff]
        %v1610 = vld [vmem:[%s1608 + $0x8] sm:$0xff]
        %v1611 = vld [vmem:[%s1608 + $0x10] sm:$0xff]
        %v1612 = vld [vmem:[%s1608 + $0x18] sm:$0xff]
        %v1613 = vld [vmem:[%s1608 + $0x20] sm:$0xff]
        %v1614 = vld [vmem:[%s1608 + $0x28] sm:$0xff]
        %v1615 = vld [vmem:[%s1608 + $0x30] sm:$0xff]
        %v1616 = vld [vmem:[%s1608 + $0x38] sm:$0xff]
        %v1617 = vld [vmem:[%s1608 + $0x40] sm:$0xff]
        %v1618 = vld [vmem:[%s1608 + $0x48] sm:$0xff]
        %v1619 = vld [vmem:[%s1608 + $0x50] sm:$0xff]
        %v1620 = vld [vmem:[%s1608 + $0x58] sm:$0xff]
        %v1621 = vld [vmem:[%s1608 + $0x60] sm:$0xff]
        %v1622 = vld [vmem:[%s1608 + $0x68] sm:$0xff]
        %v1623 = vld [vmem:[%s1608 + $0x70] sm:$0xff]
        %v1624 = vld [vmem:[%s1608 + $0x78] sm:$0xff]
        %v1625 = vld [vmem:[%s1608 + $0x80] sm:$0xff]
        %v1626 = vld [vmem:[%s1608 + $0x88] sm:$0xff]
        %v1627 = vld [vmem:[%s1608 + $0x90] sm:$0xff]
        %v1628 = vld [vmem:[%s1608 + $0x98] sm:$0xff]
        %v1629 = vld [vmem:[%s1608 + $0xa0] sm:$0xff]
        %v1630 = vld [vmem:[%s1608 + $0xa8] sm:$0xff]
        %v1631 = vld [vmem:[%s1608 + $0xb0] sm:$0xff]
        %v1632 = vld [vmem:[%s1608 + $0xb8] sm:$0xff]
        %v1633 = vld [vmem:[%s1608 + $0xc0] sm:$0xff]
        %v1634 = vld [vmem:[%s1608 + $0xc8] sm:$0xff]
        %v1635 = vld [vmem:[%s1608 + $0xd0] sm:$0xff]
        %v1636 = vld [vmem:[%s1608 + $0xd8] sm:$0xff]
        %v1637 = vld [vmem:[%s1608 + $0xe0] sm:$0xff]
        %v1638 = vld [vmem:[%s1608 + $0xe8] sm:$0xff]
        %v1639 = vld [vmem:[%s1608 + $0xf0] sm:$0xff]
        %v1640 = vld [vmem:[%s1608 + $0xf8] sm:$0xff]
        %1642 = vset.pattern.permute.xlu0 0
        %1643 = vperm.xlu0 %1642, %v1609
        %v1644 = vpop.permute.xlu0 %1643
        %1646 = vset.pattern.permute.xlu0 0
        %1647 = vperm.xlu0 %1646, %v1610
        %v1648 = vpop.permute.xlu0 %1647
        %1650 = vset.pattern.permute.xlu0 0
        %1651 = vperm.xlu0 %1650, %v1611
        %v1652 = vpop.permute.xlu0 %1651
        %1654 = vset.pattern.permute.xlu0 0
        %1655 = vperm.xlu0 %1654, %v1612
        %v1656 = vpop.permute.xlu0 %1655
        %1658 = vset.pattern.permute.xlu0 0
        %1659 = vperm.xlu0 %1658, %v1613
        %v1660 = vpop.permute.xlu0 %1659
        %1662 = vset.pattern.permute.xlu0 0
        %1663 = vperm.xlu0 %1662, %v1614
        %v1664 = vpop.permute.xlu0 %1663
        %1666 = vset.pattern.permute.xlu0 0
        %1667 = vperm.xlu0 %1666, %v1615
        %v1668 = vpop.permute.xlu0 %1667
        %1670 = vset.pattern.permute.xlu0 0
        %1671 = vperm.xlu0 %1670, %v1616
        %v1672 = vpop.permute.xlu0 %1671
        %1674 = vset.pattern.permute.xlu0 0
        %1675 = vperm.xlu0 %1674, %v1617
        %v1676 = vpop.permute.xlu0 %1675
        %1678 = vset.pattern.permute.xlu0 0
        %1679 = vperm.xlu0 %1678, %v1618
        %v1680 = vpop.permute.xlu0 %1679
        %1682 = vset.pattern.permute.xlu0 0
        %1683 = vperm.xlu0 %1682, %v1619
        %v1684 = vpop.permute.xlu0 %1683
        %1686 = vset.pattern.permute.xlu0 0
        %1687 = vperm.xlu0 %1686, %v1620
        %v1688 = vpop.permute.xlu0 %1687
        %1690 = vset.pattern.permute.xlu0 0
        %1691 = vperm.xlu0 %1690, %v1621
        %v1692 = vpop.permute.xlu0 %1691
        %1694 = vset.pattern.permute.xlu0 0
        %1695 = vperm.xlu0 %1694, %v1622
        %v1696 = vpop.permute.xlu0 %1695
        %1698 = vset.pattern.permute.xlu0 0
        %1699 = vperm.xlu0 %1698, %v1623
        %v1700 = vpop.permute.xlu0 %1699
        %1702 = vset.pattern.permute.xlu0 0
        %1703 = vperm.xlu0 %1702, %v1624
        %v1704 = vpop.permute.xlu0 %1703
        %1706 = vset.pattern.permute.xlu0 0
        %1707 = vperm.xlu0 %1706, %v1625
        %v1708 = vpop.permute.xlu0 %1707
        %1710 = vset.pattern.permute.xlu0 0
        %1711 = vperm.xlu0 %1710, %v1626
        %v1712 = vpop.permute.xlu0 %1711
        %1714 = vset.pattern.permute.xlu0 0
        %1715 = vperm.xlu0 %1714, %v1627
        %v1716 = vpop.permute.xlu0 %1715
        %1718 = vset.pattern.permute.xlu0 0
        %1719 = vperm.xlu0 %1718, %v1628
        %v1720 = vpop.permute.xlu0 %1719
        %1722 = vset.pattern.permute.xlu0 0
        %1723 = vperm.xlu0 %1722, %v1629
        %v1724 = vpop.permute.xlu0 %1723
        %1726 = vset.pattern.permute.xlu0 0
        %1727 = vperm.xlu0 %1726, %v1630
        %v1728 = vpop.permute.xlu0 %1727
        %1730 = vset.pattern.permute.xlu0 0
        %1731 = vperm.xlu0 %1730, %v1631
        %v1732 = vpop.permute.xlu0 %1731
        %1734 = vset.pattern.permute.xlu0 0
        %1735 = vperm.xlu0 %1734, %v1632
        %v1736 = vpop.permute.xlu0 %1735
        %1738 = vset.pattern.permute.xlu0 0
        %1739 = vperm.xlu0 %1738, %v1633
        %v1740 = vpop.permute.xlu0 %1739
        %1742 = vset.pattern.permute.xlu0 0
        %1743 = vperm.xlu0 %1742, %v1634
        %v1744 = vpop.permute.xlu0 %1743
        %1746 = vset.pattern.permute.xlu0 0
        %1747 = vperm.xlu0 %1746, %v1635
        %v1748 = vpop.permute.xlu0 %1747
        %1750 = vset.pattern.permute.xlu0 0
        %1751 = vperm.xlu0 %1750, %v1636
        %v1752 = vpop.permute.xlu0 %1751
        %1754 = vset.pattern.permute.xlu0 0
        %1755 = vperm.xlu0 %1754, %v1637
        %v1756 = vpop.permute.xlu0 %1755
        %1758 = vset.pattern.permute.xlu0 0
        %1759 = vperm.xlu0 %1758, %v1638
        %v1760 = vpop.permute.xlu0 %1759
        %1762 = vset.pattern.permute.xlu0 0
        %1763 = vperm.xlu0 %1762, %v1639
        %v1764 = vpop.permute.xlu0 %1763
        %1766 = vset.pattern.permute.xlu0 0
        %1767 = vperm.xlu0 %1766, %v1640
        %v1768 = vpop.permute.xlu0 %1767
        %v1769 = vrot.slane %v1644, 6
        %v1770 = vrot.slane %v1648, 6
        %v1771 = vsel %vm963, %v1769, %v1770
        %v1772 = vrot.slane %v1652, 6
        %v1773 = vsel %vm963, %v1770, %v1772
        %v1774 = vrot.slane %v1656, 6
        %v1775 = vsel %vm963, %v1772, %v1774
        %v1776 = vrot.slane %v1660, 6
        %v1777 = vsel %vm963, %v1774, %v1776
        %v1778 = vrot.slane %v1664, 6
        %v1779 = vsel %vm963, %v1776, %v1778
        %v1780 = vrot.slane %v1668, 6
        %v1781 = vsel %vm963, %v1778, %v1780
        %v1782 = vrot.slane %v1672, 6
        %v1783 = vsel %vm963, %v1780, %v1782
        %v1784 = vrot.slane %v1676, 6
        %v1785 = vsel %vm963, %v1782, %v1784
        %v1786 = vrot.slane %v1680, 6
        %v1787 = vsel %vm963, %v1784, %v1786
        %v1788 = vrot.slane %v1684, 6
        %v1789 = vsel %vm963, %v1786, %v1788
        %v1790 = vrot.slane %v1688, 6
        %v1791 = vsel %vm963, %v1788, %v1790
        %v1792 = vrot.slane %v1692, 6
        %v1793 = vsel %vm963, %v1790, %v1792
        %v1794 = vrot.slane %v1696, 6
        %v1795 = vsel %vm963, %v1792, %v1794
        %v1796 = vrot.slane %v1700, 6
        %v1797 = vsel %vm963, %v1794, %v1796
        %v1798 = vrot.slane %v1704, 6
        %v1799 = vsel %vm963, %v1796, %v1798
        %v1800 = vrot.slane %v1708, 6
        %v1801 = vsel %vm963, %v1798, %v1800
        %v1802 = vrot.slane %v1712, 6
        %v1803 = vsel %vm963, %v1800, %v1802
        %v1804 = vrot.slane %v1716, 6
        %v1805 = vsel %vm963, %v1802, %v1804
        %v1806 = vrot.slane %v1720, 6
        %v1807 = vsel %vm963, %v1804, %v1806
        %v1808 = vrot.slane %v1724, 6
        %v1809 = vsel %vm963, %v1806, %v1808
        %v1810 = vrot.slane %v1728, 6
        %v1811 = vsel %vm963, %v1808, %v1810
        %v1812 = vrot.slane %v1732, 6
        %v1813 = vsel %vm963, %v1810, %v1812
        %v1814 = vrot.slane %v1736, 6
        %v1815 = vsel %vm963, %v1812, %v1814
        %v1816 = vrot.slane %v1740, 6
        %v1817 = vsel %vm963, %v1814, %v1816
        %v1818 = vrot.slane %v1744, 6
        %v1819 = vsel %vm963, %v1816, %v1818
        %v1820 = vrot.slane %v1748, 6
        %v1821 = vsel %vm963, %v1818, %v1820
        %v1822 = vrot.slane %v1752, 6
        %v1823 = vsel %vm963, %v1820, %v1822
        %v1824 = vrot.slane %v1756, 6
        %v1825 = vsel %vm963, %v1822, %v1824
        %v1826 = vrot.slane %v1760, 6
        %v1827 = vsel %vm963, %v1824, %v1826
        %v1828 = vrot.slane %v1764, 6
        %v1829 = vsel %vm963, %v1826, %v1828
        %v1830 = vrot.slane %v1768, 6
        %v1831 = vsel %vm963, %v1828, %v1830
        %v1865 = vmul.f32 %v252, %v1769
        %v1866 = vmul.f32 %v253, %v1771
        %v1867 = vmul.f32 %v254, %v1773
        %v1868 = vmul.f32 %v255, %v1775
        %v1869 = vmul.f32 %v256, %v1777
        %v1870 = vmul.f32 %v257, %v1779
        %v1871 = vmul.f32 %v258, %v1781
        %v1872 = vmul.f32 %v259, %v1783
        %v1873 = vmul.f32 %v260, %v1785
        %v1874 = vmul.f32 %v261, %v1787
        %v1875 = vmul.f32 %v262, %v1789
        %v1876 = vmul.f32 %v263, %v1791
        %v1877 = vmul.f32 %v264, %v1793
        %v1878 = vmul.f32 %v265, %v1795
        %v1879 = vmul.f32 %v266, %v1797
        %v1880 = vmul.f32 %v267, %v1799
        %v1881 = vmul.f32 %v268, %v1801
        %v1882 = vmul.f32 %v269, %v1803
        %v1883 = vmul.f32 %v270, %v1805
        %v1884 = vmul.f32 %v271, %v1807
        %v1885 = vmul.f32 %v272, %v1809
        %v1886 = vmul.f32 %v273, %v1811
        %v1887 = vmul.f32 %v274, %v1813
        %v1888 = vmul.f32 %v275, %v1815
        %v1889 = vmul.f32 %v276, %v1817
        %v1890 = vmul.f32 %v277, %v1819
        %v1891 = vmul.f32 %v278, %v1821
        %v1892 = vmul.f32 %v279, %v1823
        %v1893 = vmul.f32 %v280, %v1825
        %v1894 = vmul.f32 %v281, %v1827
        %v1895 = vmul.f32 %v282, %v1829
        %v1896 = vmul.f32 %v283, %v1831
        %v1897 = vmul.f32 %v284, %v1830
        %s1898 = scalar_lea.vmem %s4, 1536
        %v1899 = vld [vmem:[%s1898] sm:$0xff]
        %v1900 = vld [vmem:[%s1898 + $0x8] sm:$0xff]
        %v1901 = vld [vmem:[%s1898 + $0x10] sm:$0xff]
        %v1902 = vld [vmem:[%s1898 + $0x18] sm:$0xff]
        %v1903 = vld [vmem:[%s1898 + $0x20] sm:$0xff]
        %v1904 = vld [vmem:[%s1898 + $0x28] sm:$0xff]
        %v1905 = vld [vmem:[%s1898 + $0x30] sm:$0xff]
        %v1906 = vld [vmem:[%s1898 + $0x38] sm:$0xff]
        %v1907 = vld [vmem:[%s1898 + $0x40] sm:$0xff]
        %v1908 = vld [vmem:[%s1898 + $0x48] sm:$0xff]
        %v1909 = vld [vmem:[%s1898 + $0x50] sm:$0xff]
        %v1910 = vld [vmem:[%s1898 + $0x58] sm:$0xff]
        %v1911 = vld [vmem:[%s1898 + $0x60] sm:$0xff]
        %v1912 = vld [vmem:[%s1898 + $0x68] sm:$0xff]
        %v1913 = vld [vmem:[%s1898 + $0x70] sm:$0xff]
        %v1914 = vld [vmem:[%s1898 + $0x78] sm:$0xff]
        %v1915 = vld [vmem:[%s1898 + $0x80] sm:$0xff]
        %v1916 = vld [vmem:[%s1898 + $0x88] sm:$0xff]
        %v1917 = vld [vmem:[%s1898 + $0x90] sm:$0xff]
        %v1918 = vld [vmem:[%s1898 + $0x98] sm:$0xff]
        %v1919 = vld [vmem:[%s1898 + $0xa0] sm:$0xff]
        %v1920 = vld [vmem:[%s1898 + $0xa8] sm:$0xff]
        %v1921 = vld [vmem:[%s1898 + $0xb0] sm:$0xff]
        %v1922 = vld [vmem:[%s1898 + $0xb8] sm:$0xff]
        %v1923 = vld [vmem:[%s1898 + $0xc0] sm:$0xff]
        %v1924 = vld [vmem:[%s1898 + $0xc8] sm:$0xff]
        %v1925 = vld [vmem:[%s1898 + $0xd0] sm:$0xff]
        %v1926 = vld [vmem:[%s1898 + $0xd8] sm:$0xff]
        %v1927 = vld [vmem:[%s1898 + $0xe0] sm:$0xff]
        %v1928 = vld [vmem:[%s1898 + $0xe8] sm:$0xff]
        %v1929 = vld [vmem:[%s1898 + $0xf0] sm:$0xff]
        %v1930 = vld [vmem:[%s1898 + $0xf8] sm:$0xff]
        %1932 = vset.pattern.permute.xlu0 0
        %1933 = vperm.xlu0 %1932, %v1899
        %v1934 = vpop.permute.xlu0 %1933
        %1937 = vset.pattern.permute.xlu0 0
        %1938 = vperm.xlu0 %1937, %v1900
        %v1939 = vpop.permute.xlu0 %1938
        %1942 = vset.pattern.permute.xlu0 0
        %1943 = vperm.xlu0 %1942, %v1901
        %v1944 = vpop.permute.xlu0 %1943
        %1947 = vset.pattern.permute.xlu0 0
        %1948 = vperm.xlu0 %1947, %v1902
        %v1949 = vpop.permute.xlu0 %1948
        %1952 = vset.pattern.permute.xlu0 0
        %1953 = vperm.xlu0 %1952, %v1903
        %v1954 = vpop.permute.xlu0 %1953
        %1957 = vset.pattern.permute.xlu0 0
        %1958 = vperm.xlu0 %1957, %v1904
        %v1959 = vpop.permute.xlu0 %1958
        %1962 = vset.pattern.permute.xlu0 0
        %1963 = vperm.xlu0 %1962, %v1905
        %v1964 = vpop.permute.xlu0 %1963
        %1967 = vset.pattern.permute.xlu0 0
        %1968 = vperm.xlu0 %1967, %v1906
        %v1969 = vpop.permute.xlu0 %1968
        %1972 = vset.pattern.permute.xlu0 0
        %1973 = vperm.xlu0 %1972, %v1907
        %v1974 = vpop.permute.xlu0 %1973
        %1977 = vset.pattern.permute.xlu0 0
        %1978 = vperm.xlu0 %1977, %v1908
        %v1979 = vpop.permute.xlu0 %1978
        %1982 = vset.pattern.permute.xlu0 0
        %1983 = vperm.xlu0 %1982, %v1909
        %v1984 = vpop.permute.xlu0 %1983
        %1987 = vset.pattern.permute.xlu0 0
        %1988 = vperm.xlu0 %1987, %v1910
        %v1989 = vpop.permute.xlu0 %1988
        %1992 = vset.pattern.permute.xlu0 0
        %1993 = vperm.xlu0 %1992, %v1911
        %v1994 = vpop.permute.xlu0 %1993
        %1997 = vset.pattern.permute.xlu0 0
        %1998 = vperm.xlu0 %1997, %v1912
        %v1999 = vpop.permute.xlu0 %1998
        %2002 = vset.pattern.permute.xlu0 0
        %2003 = vperm.xlu0 %2002, %v1913
        %v2004 = vpop.permute.xlu0 %2003
        %2007 = vset.pattern.permute.xlu0 0
        %2008 = vperm.xlu0 %2007, %v1914
        %v2009 = vpop.permute.xlu0 %2008
        %2012 = vset.pattern.permute.xlu0 0
        %2013 = vperm.xlu0 %2012, %v1915
        %v2014 = vpop.permute.xlu0 %2013
        %2017 = vset.pattern.permute.xlu0 0
        %2018 = vperm.xlu0 %2017, %v1916
        %v2019 = vpop.permute.xlu0 %2018
        %2022 = vset.pattern.permute.xlu0 0
        %2023 = vperm.xlu0 %2022, %v1917
        %v2024 = vpop.permute.xlu0 %2023
        %2027 = vset.pattern.permute.xlu0 0
        %2028 = vperm.xlu0 %2027, %v1918
        %v2029 = vpop.permute.xlu0 %2028
        %2032 = vset.pattern.permute.xlu0 0
        %2033 = vperm.xlu0 %2032, %v1919
        %v2034 = vpop.permute.xlu0 %2033
        %2037 = vset.pattern.permute.xlu0 0
        %2038 = vperm.xlu0 %2037, %v1920
        %v2039 = vpop.permute.xlu0 %2038
        %2042 = vset.pattern.permute.xlu0 0
        %2043 = vperm.xlu0 %2042, %v1921
        %v2044 = vpop.permute.xlu0 %2043
        %2047 = vset.pattern.permute.xlu0 0
        %2048 = vperm.xlu0 %2047, %v1922
        %v2049 = vpop.permute.xlu0 %2048
        %2052 = vset.pattern.permute.xlu0 0
        %2053 = vperm.xlu0 %2052, %v1923
        %v2054 = vpop.permute.xlu0 %2053
        %2057 = vset.pattern.permute.xlu0 0
        %2058 = vperm.xlu0 %2057, %v1924
        %v2059 = vpop.permute.xlu0 %2058
        %2062 = vset.pattern.permute.xlu0 0
        %2063 = vperm.xlu0 %2062, %v1925
        %v2064 = vpop.permute.xlu0 %2063
        %2067 = vset.pattern.permute.xlu0 0
        %2068 = vperm.xlu0 %2067, %v1926
        %v2069 = vpop.permute.xlu0 %2068
        %2072 = vset.pattern.permute.xlu0 0
        %2073 = vperm.xlu0 %2072, %v1927
        %v2074 = vpop.permute.xlu0 %2073
        %2077 = vset.pattern.permute.xlu0 0
        %2078 = vperm.xlu0 %2077, %v1928
        %v2079 = vpop.permute.xlu0 %2078
        %2082 = vset.pattern.permute.xlu0 0
        %2083 = vperm.xlu0 %2082, %v1929
        %v2084 = vpop.permute.xlu0 %2083
        %2087 = vset.pattern.permute.xlu0 0
        %2088 = vperm.xlu0 %2087, %v1930
        %v2089 = vpop.permute.xlu0 %2088
        %v2091 = vmul.f32 %v254, %v1934
        %v2092 = vmul.f32 %v255, %v1939
        %v2093 = vmul.f32 %v256, %v1944
        %v2094 = vmul.f32 %v257, %v1949
        %v2095 = vmul.f32 %v258, %v1954
        %v2096 = vmul.f32 %v259, %v1959
        %v2097 = vmul.f32 %v260, %v1964
        %v2098 = vmul.f32 %v261, %v1969
        %v2099 = vmul.f32 %v262, %v1974
        %v2100 = vmul.f32 %v263, %v1979
        %v2101 = vmul.f32 %v264, %v1984
        %v2102 = vmul.f32 %v265, %v1989
        %v2103 = vmul.f32 %v266, %v1994
        %v2104 = vmul.f32 %v267, %v1999
        %v2105 = vmul.f32 %v268, %v2004
        %v2106 = vmul.f32 %v269, %v2009
        %v2107 = vmul.f32 %v270, %v2014
        %v2108 = vmul.f32 %v271, %v2019
        %v2109 = vmul.f32 %v272, %v2024
        %v2110 = vmul.f32 %v273, %v2029
        %v2111 = vmul.f32 %v274, %v2034
        %v2112 = vmul.f32 %v275, %v2039
        %v2113 = vmul.f32 %v276, %v2044
        %v2114 = vmul.f32 %v277, %v2049
        %v2115 = vmul.f32 %v278, %v2054
        %v2116 = vmul.f32 %v279, %v2059
        %v2117 = vmul.f32 %v280, %v2064
        %v2118 = vmul.f32 %v281, %v2069
        %v2119 = vmul.f32 %v282, %v2074
        %v2120 = vmul.f32 %v283, %v2079
        %v2121 = vmul.f32 %v284, %v2084
        %v2122 = vmul.f32 %v285, %v2089
        %s2123 = scalar_lea.vmem %s4, 1792
        %v2124 = vld [vmem:[%s2123] sm:$0xff]
        %v2125 = vld [vmem:[%s2123 + $0x8] sm:$0xff]
        %v2126 = vld [vmem:[%s2123 + $0x10] sm:$0xff]
        %v2127 = vld [vmem:[%s2123 + $0x18] sm:$0xff]
        %v2128 = vld [vmem:[%s2123 + $0x20] sm:$0xff]
        %v2129 = vld [vmem:[%s2123 + $0x28] sm:$0xff]
        %v2130 = vld [vmem:[%s2123 + $0x30] sm:$0xff]
        %v2131 = vld [vmem:[%s2123 + $0x38] sm:$0xff]
        %v2132 = vld [vmem:[%s2123 + $0x40] sm:$0xff]
        %v2133 = vld [vmem:[%s2123 + $0x48] sm:$0xff]
        %v2134 = vld [vmem:[%s2123 + $0x50] sm:$0xff]
        %v2135 = vld [vmem:[%s2123 + $0x58] sm:$0xff]
        %v2136 = vld [vmem:[%s2123 + $0x60] sm:$0xff]
        %v2137 = vld [vmem:[%s2123 + $0x68] sm:$0xff]
        %v2138 = vld [vmem:[%s2123 + $0x70] sm:$0xff]
        %v2139 = vld [vmem:[%s2123 + $0x78] sm:$0xff]
        %v2140 = vld [vmem:[%s2123 + $0x80] sm:$0xff]
        %v2141 = vld [vmem:[%s2123 + $0x88] sm:$0xff]
        %v2142 = vld [vmem:[%s2123 + $0x90] sm:$0xff]
        %v2143 = vld [vmem:[%s2123 + $0x98] sm:$0xff]
        %v2144 = vld [vmem:[%s2123 + $0xa0] sm:$0xff]
        %v2145 = vld [vmem:[%s2123 + $0xa8] sm:$0xff]
        %v2146 = vld [vmem:[%s2123 + $0xb0] sm:$0xff]
        %v2147 = vld [vmem:[%s2123 + $0xb8] sm:$0xff]
        %v2148 = vld [vmem:[%s2123 + $0xc0] sm:$0xff]
        %v2149 = vld [vmem:[%s2123 + $0xc8] sm:$0xff]
        %v2150 = vld [vmem:[%s2123 + $0xd0] sm:$0xff]
        %v2151 = vld [vmem:[%s2123 + $0xd8] sm:$0xff]
        %v2152 = vld [vmem:[%s2123 + $0xe0] sm:$0xff]
        %v2153 = vld [vmem:[%s2123 + $0xe8] sm:$0xff]
        %v2154 = vld [vmem:[%s2123 + $0xf0] sm:$0xff]
        %v2155 = vld [vmem:[%s2123 + $0xf8] sm:$0xff]
        %2157 = vset.pattern.permute.xlu0 0
        %2158 = vperm.xlu0 %2157, %v2124
        %v2159 = vpop.permute.xlu0 %2158
        %2161 = vset.pattern.permute.xlu0 0
        %2162 = vperm.xlu0 %2161, %v2125
        %v2163 = vpop.permute.xlu0 %2162
        %2165 = vset.pattern.permute.xlu0 0
        %2166 = vperm.xlu0 %2165, %v2126
        %v2167 = vpop.permute.xlu0 %2166
        %2169 = vset.pattern.permute.xlu0 0
        %2170 = vperm.xlu0 %2169, %v2127
        %v2171 = vpop.permute.xlu0 %2170
        %2173 = vset.pattern.permute.xlu0 0
        %2174 = vperm.xlu0 %2173, %v2128
        %v2175 = vpop.permute.xlu0 %2174
        %2177 = vset.pattern.permute.xlu0 0
        %2178 = vperm.xlu0 %2177, %v2129
        %v2179 = vpop.permute.xlu0 %2178
        %2181 = vset.pattern.permute.xlu0 0
        %2182 = vperm.xlu0 %2181, %v2130
        %v2183 = vpop.permute.xlu0 %2182
        %2185 = vset.pattern.permute.xlu0 0
        %2186 = vperm.xlu0 %2185, %v2131
        %v2187 = vpop.permute.xlu0 %2186
        %2189 = vset.pattern.permute.xlu0 0
        %2190 = vperm.xlu0 %2189, %v2132
        %v2191 = vpop.permute.xlu0 %2190
        %2193 = vset.pattern.permute.xlu0 0
        %2194 = vperm.xlu0 %2193, %v2133
        %v2195 = vpop.permute.xlu0 %2194
        %2197 = vset.pattern.permute.xlu0 0
        %2198 = vperm.xlu0 %2197, %v2134
        %v2199 = vpop.permute.xlu0 %2198
        %2201 = vset.pattern.permute.xlu0 0
        %2202 = vperm.xlu0 %2201, %v2135
        %v2203 = vpop.permute.xlu0 %2202
        %2205 = vset.pattern.permute.xlu0 0
        %2206 = vperm.xlu0 %2205, %v2136
        %v2207 = vpop.permute.xlu0 %2206
        %2209 = vset.pattern.permute.xlu0 0
        %2210 = vperm.xlu0 %2209, %v2137
        %v2211 = vpop.permute.xlu0 %2210
        %2213 = vset.pattern.permute.xlu0 0
        %2214 = vperm.xlu0 %2213, %v2138
        %v2215 = vpop.permute.xlu0 %2214
        %2217 = vset.pattern.permute.xlu0 0
        %2218 = vperm.xlu0 %2217, %v2139
        %v2219 = vpop.permute.xlu0 %2218
        %2221 = vset.pattern.permute.xlu0 0
        %2222 = vperm.xlu0 %2221, %v2140
        %v2223 = vpop.permute.xlu0 %2222
        %2225 = vset.pattern.permute.xlu0 0
        %2226 = vperm.xlu0 %2225, %v2141
        %v2227 = vpop.permute.xlu0 %2226
        %2229 = vset.pattern.permute.xlu0 0
        %2230 = vperm.xlu0 %2229, %v2142
        %v2231 = vpop.permute.xlu0 %2230
        %2233 = vset.pattern.permute.xlu0 0
        %2234 = vperm.xlu0 %2233, %v2143
        %v2235 = vpop.permute.xlu0 %2234
        %2237 = vset.pattern.permute.xlu0 0
        %2238 = vperm.xlu0 %2237, %v2144
        %v2239 = vpop.permute.xlu0 %2238
        %2241 = vset.pattern.permute.xlu0 0
        %2242 = vperm.xlu0 %2241, %v2145
        %v2243 = vpop.permute.xlu0 %2242
        %2245 = vset.pattern.permute.xlu0 0
        %2246 = vperm.xlu0 %2245, %v2146
        %v2247 = vpop.permute.xlu0 %2246
        %2249 = vset.pattern.permute.xlu0 0
        %2250 = vperm.xlu0 %2249, %v2147
        %v2251 = vpop.permute.xlu0 %2250
        %2253 = vset.pattern.permute.xlu0 0
        %2254 = vperm.xlu0 %2253, %v2148
        %v2255 = vpop.permute.xlu0 %2254
        %2257 = vset.pattern.permute.xlu0 0
        %2258 = vperm.xlu0 %2257, %v2149
        %v2259 = vpop.permute.xlu0 %2258
        %2261 = vset.pattern.permute.xlu0 0
        %2262 = vperm.xlu0 %2261, %v2150
        %v2263 = vpop.permute.xlu0 %2262
        %2265 = vset.pattern.permute.xlu0 0
        %2266 = vperm.xlu0 %2265, %v2151
        %v2267 = vpop.permute.xlu0 %2266
        %2269 = vset.pattern.permute.xlu0 0
        %2270 = vperm.xlu0 %2269, %v2152
        %v2271 = vpop.permute.xlu0 %2270
        %2273 = vset.pattern.permute.xlu0 0
        %2274 = vperm.xlu0 %2273, %v2153
        %v2275 = vpop.permute.xlu0 %2274
        %2277 = vset.pattern.permute.xlu0 0
        %2278 = vperm.xlu0 %2277, %v2154
        %v2279 = vpop.permute.xlu0 %2278
        %2281 = vset.pattern.permute.xlu0 0
        %2282 = vperm.xlu0 %2281, %v2155
        %v2283 = vpop.permute.xlu0 %2282
        %v2284 = vrot.slane %v2159, 7
        %v2285 = vrot.slane %v2163, 7
        %v2286 = vsel %vm672, %v2284, %v2285
        %v2287 = vrot.slane %v2167, 7
        %v2288 = vsel %vm672, %v2285, %v2287
        %v2289 = vrot.slane %v2171, 7
        %v2290 = vsel %vm672, %v2287, %v2289
        %v2291 = vrot.slane %v2175, 7
        %v2292 = vsel %vm672, %v2289, %v2291
        %v2293 = vrot.slane %v2179, 7
        %v2294 = vsel %vm672, %v2291, %v2293
        %v2295 = vrot.slane %v2183, 7
        %v2296 = vsel %vm672, %v2293, %v2295
        %v2297 = vrot.slane %v2187, 7
        %v2298 = vsel %vm672, %v2295, %v2297
        %v2299 = vrot.slane %v2191, 7
        %v2300 = vsel %vm672, %v2297, %v2299
        %v2301 = vrot.slane %v2195, 7
        %v2302 = vsel %vm672, %v2299, %v2301
        %v2303 = vrot.slane %v2199, 7
        %v2304 = vsel %vm672, %v2301, %v2303
        %v2305 = vrot.slane %v2203, 7
        %v2306 = vsel %vm672, %v2303, %v2305
        %v2307 = vrot.slane %v2207, 7
        %v2308 = vsel %vm672, %v2305, %v2307
        %v2309 = vrot.slane %v2211, 7
        %v2310 = vsel %vm672, %v2307, %v2309
        %v2311 = vrot.slane %v2215, 7
        %v2312 = vsel %vm672, %v2309, %v2311
        %v2313 = vrot.slane %v2219, 7
        %v2314 = vsel %vm672, %v2311, %v2313
        %v2315 = vrot.slane %v2223, 7
        %v2316 = vsel %vm672, %v2313, %v2315
        %v2317 = vrot.slane %v2227, 7
        %v2318 = vsel %vm672, %v2315, %v2317
        %v2319 = vrot.slane %v2231, 7
        %v2320 = vsel %vm672, %v2317, %v2319
        %v2321 = vrot.slane %v2235, 7
        %v2322 = vsel %vm672, %v2319, %v2321
        %v2323 = vrot.slane %v2239, 7
        %v2324 = vsel %vm672, %v2321, %v2323
        %v2325 = vrot.slane %v2243, 7
        %v2326 = vsel %vm672, %v2323, %v2325
        %v2327 = vrot.slane %v2247, 7
        %v2328 = vsel %vm672, %v2325, %v2327
        %v2329 = vrot.slane %v2251, 7
        %v2330 = vsel %vm672, %v2327, %v2329
        %v2331 = vrot.slane %v2255, 7
        %v2332 = vsel %vm672, %v2329, %v2331
        %v2333 = vrot.slane %v2259, 7
        %v2334 = vsel %vm672, %v2331, %v2333
        %v2335 = vrot.slane %v2263, 7
        %v2336 = vsel %vm672, %v2333, %v2335
        %v2337 = vrot.slane %v2267, 7
        %v2338 = vsel %vm672, %v2335, %v2337
        %v2339 = vrot.slane %v2271, 7
        %v2340 = vsel %vm672, %v2337, %v2339
        %v2341 = vrot.slane %v2275, 7
        %v2342 = vsel %vm672, %v2339, %v2341
        %v2343 = vrot.slane %v2279, 7
        %v2344 = vsel %vm672, %v2341, %v2343
        %v2345 = vrot.slane %v2283, 7
        %v2346 = vsel %vm672, %v2343, %v2345
        %v2380 = vmul.f32 %v254, %v2284
        %v2381 = vmul.f32 %v255, %v2286
        %v2382 = vmul.f32 %v256, %v2288
        %v2383 = vmul.f32 %v257, %v2290
        %v2384 = vmul.f32 %v258, %v2292
        %v2385 = vmul.f32 %v259, %v2294
        %v2386 = vmul.f32 %v260, %v2296
        %v2387 = vmul.f32 %v261, %v2298
        %v2388 = vmul.f32 %v262, %v2300
        %v2389 = vmul.f32 %v263, %v2302
        %v2390 = vmul.f32 %v264, %v2304
        %v2391 = vmul.f32 %v265, %v2306
        %v2392 = vmul.f32 %v266, %v2308
        %v2393 = vmul.f32 %v267, %v2310
        %v2394 = vmul.f32 %v268, %v2312
        %v2395 = vmul.f32 %v269, %v2314
        %v2396 = vmul.f32 %v270, %v2316
        %v2397 = vmul.f32 %v271, %v2318
        %v2398 = vmul.f32 %v272, %v2320
        %v2399 = vmul.f32 %v273, %v2322
        %v2400 = vmul.f32 %v274, %v2324
        %v2401 = vmul.f32 %v275, %v2326
        %v2402 = vmul.f32 %v276, %v2328
        %v2403 = vmul.f32 %v277, %v2330
        %v2404 = vmul.f32 %v278, %v2332
        %v2405 = vmul.f32 %v279, %v2334
        %v2406 = vmul.f32 %v280, %v2336
        %v2407 = vmul.f32 %v281, %v2338
        %v2408 = vmul.f32 %v282, %v2340
        %v2409 = vmul.f32 %v283, %v2342
        %v2410 = vmul.f32 %v284, %v2344
        %v2411 = vmul.f32 %v285, %v2346
        %v2412 = vmul.f32 %v286, %v2345
        %s2413 = scalar_lea.vmem %s4, 2048
        %v2414 = vld [vmem:[%s2413] sm:$0xff]
        %v2415 = vld [vmem:[%s2413 + $0x8] sm:$0xff]
        %v2416 = vld [vmem:[%s2413 + $0x10] sm:$0xff]
        %v2417 = vld [vmem:[%s2413 + $0x18] sm:$0xff]
        %v2418 = vld [vmem:[%s2413 + $0x20] sm:$0xff]
        %v2419 = vld [vmem:[%s2413 + $0x28] sm:$0xff]
        %v2420 = vld [vmem:[%s2413 + $0x30] sm:$0xff]
        %v2421 = vld [vmem:[%s2413 + $0x38] sm:$0xff]
        %v2422 = vld [vmem:[%s2413 + $0x40] sm:$0xff]
        %v2423 = vld [vmem:[%s2413 + $0x48] sm:$0xff]
        %v2424 = vld [vmem:[%s2413 + $0x50] sm:$0xff]
        %v2425 = vld [vmem:[%s2413 + $0x58] sm:$0xff]
        %v2426 = vld [vmem:[%s2413 + $0x60] sm:$0xff]
        %v2427 = vld [vmem:[%s2413 + $0x68] sm:$0xff]
        %v2428 = vld [vmem:[%s2413 + $0x70] sm:$0xff]
        %v2429 = vld [vmem:[%s2413 + $0x78] sm:$0xff]
        %v2430 = vld [vmem:[%s2413 + $0x80] sm:$0xff]
        %v2431 = vld [vmem:[%s2413 + $0x88] sm:$0xff]
        %v2432 = vld [vmem:[%s2413 + $0x90] sm:$0xff]
        %v2433 = vld [vmem:[%s2413 + $0x98] sm:$0xff]
        %v2434 = vld [vmem:[%s2413 + $0xa0] sm:$0xff]
        %v2435 = vld [vmem:[%s2413 + $0xa8] sm:$0xff]
        %v2436 = vld [vmem:[%s2413 + $0xb0] sm:$0xff]
        %v2437 = vld [vmem:[%s2413 + $0xb8] sm:$0xff]
        %v2438 = vld [vmem:[%s2413 + $0xc0] sm:$0xff]
        %v2439 = vld [vmem:[%s2413 + $0xc8] sm:$0xff]
        %v2440 = vld [vmem:[%s2413 + $0xd0] sm:$0xff]
        %v2441 = vld [vmem:[%s2413 + $0xd8] sm:$0xff]
        %v2442 = vld [vmem:[%s2413 + $0xe0] sm:$0xff]
        %v2443 = vld [vmem:[%s2413 + $0xe8] sm:$0xff]
        %v2444 = vld [vmem:[%s2413 + $0xf0] sm:$0xff]
        %v2445 = vld [vmem:[%s2413 + $0xf8] sm:$0xff]
        %2447 = vset.pattern.permute.xlu0 0
        %2448 = vperm.xlu0 %2447, %v2414
        %v2449 = vpop.permute.xlu0 %2448
        %2451 = vset.pattern.permute.xlu0 0
        %2452 = vperm.xlu0 %2451, %v2415
        %v2453 = vpop.permute.xlu0 %2452
        %2455 = vset.pattern.permute.xlu0 0
        %2456 = vperm.xlu0 %2455, %v2416
        %v2457 = vpop.permute.xlu0 %2456
        %2459 = vset.pattern.permute.xlu0 0
        %2460 = vperm.xlu0 %2459, %v2417
        %v2461 = vpop.permute.xlu0 %2460
        %2463 = vset.pattern.permute.xlu0 0
        %2464 = vperm.xlu0 %2463, %v2418
        %v2465 = vpop.permute.xlu0 %2464
        %2467 = vset.pattern.permute.xlu0 0
        %2468 = vperm.xlu0 %2467, %v2419
        %v2469 = vpop.permute.xlu0 %2468
        %2471 = vset.pattern.permute.xlu0 0
        %2472 = vperm.xlu0 %2471, %v2420
        %v2473 = vpop.permute.xlu0 %2472
        %2475 = vset.pattern.permute.xlu0 0
        %2476 = vperm.xlu0 %2475, %v2421
        %v2477 = vpop.permute.xlu0 %2476
        %2479 = vset.pattern.permute.xlu0 0
        %2480 = vperm.xlu0 %2479, %v2422
        %v2481 = vpop.permute.xlu0 %2480
        %2483 = vset.pattern.permute.xlu0 0
        %2484 = vperm.xlu0 %2483, %v2423
        %v2485 = vpop.permute.xlu0 %2484
        %2487 = vset.pattern.permute.xlu0 0
        %2488 = vperm.xlu0 %2487, %v2424
        %v2489 = vpop.permute.xlu0 %2488
        %2491 = vset.pattern.permute.xlu0 0
        %2492 = vperm.xlu0 %2491, %v2425
        %v2493 = vpop.permute.xlu0 %2492
        %2495 = vset.pattern.permute.xlu0 0
        %2496 = vperm.xlu0 %2495, %v2426
        %v2497 = vpop.permute.xlu0 %2496
        %2499 = vset.pattern.permute.xlu0 0
        %2500 = vperm.xlu0 %2499, %v2427
        %v2501 = vpop.permute.xlu0 %2500
        %2503 = vset.pattern.permute.xlu0 0
        %2504 = vperm.xlu0 %2503, %v2428
        %v2505 = vpop.permute.xlu0 %2504
        %2507 = vset.pattern.permute.xlu0 0
        %2508 = vperm.xlu0 %2507, %v2429
        %v2509 = vpop.permute.xlu0 %2508
        %2511 = vset.pattern.permute.xlu0 0
        %2512 = vperm.xlu0 %2511, %v2430
        %v2513 = vpop.permute.xlu0 %2512
        %2515 = vset.pattern.permute.xlu0 0
        %2516 = vperm.xlu0 %2515, %v2431
        %v2517 = vpop.permute.xlu0 %2516
        %2519 = vset.pattern.permute.xlu0 0
        %2520 = vperm.xlu0 %2519, %v2432
        %v2521 = vpop.permute.xlu0 %2520
        %2523 = vset.pattern.permute.xlu0 0
        %2524 = vperm.xlu0 %2523, %v2433
        %v2525 = vpop.permute.xlu0 %2524
        %2527 = vset.pattern.permute.xlu0 0
        %2528 = vperm.xlu0 %2527, %v2434
        %v2529 = vpop.permute.xlu0 %2528
        %2531 = vset.pattern.permute.xlu0 0
        %2532 = vperm.xlu0 %2531, %v2435
        %v2533 = vpop.permute.xlu0 %2532
        %2535 = vset.pattern.permute.xlu0 0
        %2536 = vperm.xlu0 %2535, %v2436
        %v2537 = vpop.permute.xlu0 %2536
        %2539 = vset.pattern.permute.xlu0 0
        %2540 = vperm.xlu0 %2539, %v2437
        %v2541 = vpop.permute.xlu0 %2540
        %2543 = vset.pattern.permute.xlu0 0
        %2544 = vperm.xlu0 %2543, %v2438
        %v2545 = vpop.permute.xlu0 %2544
        %2547 = vset.pattern.permute.xlu0 0
        %2548 = vperm.xlu0 %2547, %v2439
        %v2549 = vpop.permute.xlu0 %2548
        %2551 = vset.pattern.permute.xlu0 0
        %2552 = vperm.xlu0 %2551, %v2440
        %v2553 = vpop.permute.xlu0 %2552
        %2555 = vset.pattern.permute.xlu0 0
        %2556 = vperm.xlu0 %2555, %v2441
        %v2557 = vpop.permute.xlu0 %2556
        %2559 = vset.pattern.permute.xlu0 0
        %2560 = vperm.xlu0 %2559, %v2442
        %v2561 = vpop.permute.xlu0 %2560
        %2563 = vset.pattern.permute.xlu0 0
        %2564 = vperm.xlu0 %2563, %v2443
        %v2565 = vpop.permute.xlu0 %2564
        %2567 = vset.pattern.permute.xlu0 0
        %2568 = vperm.xlu0 %2567, %v2444
        %v2569 = vpop.permute.xlu0 %2568
        %2571 = vset.pattern.permute.xlu0 0
        %2572 = vperm.xlu0 %2571, %v2445
        %v2573 = vpop.permute.xlu0 %2572
        %v2574 = vrot.slane %v2449, 6
        %v2575 = vrot.slane %v2453, 6
        %v2576 = vsel %vm963, %v2574, %v2575
        %v2577 = vrot.slane %v2457, 6
        %v2578 = vsel %vm963, %v2575, %v2577
        %v2579 = vrot.slane %v2461, 6
        %v2580 = vsel %vm963, %v2577, %v2579
        %v2581 = vrot.slane %v2465, 6
        %v2582 = vsel %vm963, %v2579, %v2581
        %v2583 = vrot.slane %v2469, 6
        %v2584 = vsel %vm963, %v2581, %v2583
        %v2585 = vrot.slane %v2473, 6
        %v2586 = vsel %vm963, %v2583, %v2585
        %v2587 = vrot.slane %v2477, 6
        %v2588 = vsel %vm963, %v2585, %v2587
        %v2589 = vrot.slane %v2481, 6
        %v2590 = vsel %vm963, %v2587, %v2589
        %v2591 = vrot.slane %v2485, 6
        %v2592 = vsel %vm963, %v2589, %v2591
        %v2593 = vrot.slane %v2489, 6
        %v2594 = vsel %vm963, %v2591, %v2593
        %v2595 = vrot.slane %v2493, 6
        %v2596 = vsel %vm963, %v2593, %v2595
        %v2597 = vrot.slane %v2497, 6
        %v2598 = vsel %vm963, %v2595, %v2597
        %v2599 = vrot.slane %v2501, 6
        %v2600 = vsel %vm963, %v2597, %v2599
        %v2601 = vrot.slane %v2505, 6
        %v2602 = vsel %vm963, %v2599, %v2601
        %v2603 = vrot.slane %v2509, 6
        %v2604 = vsel %vm963, %v2601, %v2603
        %v2605 = vrot.slane %v2513, 6
        %v2606 = vsel %vm963, %v2603, %v2605
        %v2607 = vrot.slane %v2517, 6
        %v2608 = vsel %vm963, %v2605, %v2607
        %v2609 = vrot.slane %v2521, 6
        %v2610 = vsel %vm963, %v2607, %v2609
        %v2611 = vrot.slane %v2525, 6
        %v2612 = vsel %vm963, %v2609, %v2611
        %v2613 = vrot.slane %v2529, 6
        %v2614 = vsel %vm963, %v2611, %v2613
        %v2615 = vrot.slane %v2533, 6
        %v2616 = vsel %vm963, %v2613, %v2615
        %v2617 = vrot.slane %v2537, 6
        %v2618 = vsel %vm963, %v2615, %v2617
        %v2619 = vrot.slane %v2541, 6
        %v2620 = vsel %vm963, %v2617, %v2619
        %v2621 = vrot.slane %v2545, 6
        %v2622 = vsel %vm963, %v2619, %v2621
        %v2623 = vrot.slane %v2549, 6
        %v2624 = vsel %vm963, %v2621, %v2623
        %v2625 = vrot.slane %v2553, 6
        %v2626 = vsel %vm963, %v2623, %v2625
        %v2627 = vrot.slane %v2557, 6
        %v2628 = vsel %vm963, %v2625, %v2627
        %v2629 = vrot.slane %v2561, 6
        %v2630 = vsel %vm963, %v2627, %v2629
        %v2631 = vrot.slane %v2565, 6
        %v2632 = vsel %vm963, %v2629, %v2631
        %v2633 = vrot.slane %v2569, 6
        %v2634 = vsel %vm963, %v2631, %v2633
        %v2635 = vrot.slane %v2573, 6
        %v2636 = vsel %vm963, %v2633, %v2635
        %v2670 = vmul.f32 %v254, %v2574
        %v2671 = vmul.f32 %v255, %v2576
        %v2672 = vmul.f32 %v256, %v2578
        %v2673 = vmul.f32 %v257, %v2580
        %v2674 = vmul.f32 %v258, %v2582
        %v2675 = vmul.f32 %v259, %v2584
        %v2676 = vmul.f32 %v260, %v2586
        %v2677 = vmul.f32 %v261, %v2588
        %v2678 = vmul.f32 %v262, %v2590
        %v2679 = vmul.f32 %v263, %v2592
        %v2680 = vmul.f32 %v264, %v2594
        %v2681 = vmul.f32 %v265, %v2596
        %v2682 = vmul.f32 %v266, %v2598
        %v2683 = vmul.f32 %v267, %v2600
        %v2684 = vmul.f32 %v268, %v2602
        %v2685 = vmul.f32 %v269, %v2604
        %v2686 = vmul.f32 %v270, %v2606
        %v2687 = vmul.f32 %v271, %v2608
        %v2688 = vmul.f32 %v272, %v2610
        %v2689 = vmul.f32 %v273, %v2612
        %v2690 = vmul.f32 %v274, %v2614
        %v2691 = vmul.f32 %v275, %v2616
        %v2692 = vmul.f32 %v276, %v2618
        %v2693 = vmul.f32 %v277, %v2620
        %v2694 = vmul.f32 %v278, %v2622
        %v2695 = vmul.f32 %v279, %v2624
        %v2696 = vmul.f32 %v280, %v2626
        %v2697 = vmul.f32 %v281, %v2628
        %v2698 = vmul.f32 %v282, %v2630
        %v2699 = vmul.f32 %v283, %v2632
        %v2700 = vmul.f32 %v284, %v2634
        %v2701 = vmul.f32 %v285, %v2636
        %v2702 = vmul.f32 %v286, %v2635
        %vm2736 = vcmask 1046528
        %v2737 = vrot.slane %v769, 1
        %v2738 = vrot.slane %v770, 1
        %v2739 = vsel %vm2736, %v2737, %v2738
        %v2740 = vrot.slane %v771, 1
        %v2741 = vsel %vm2736, %v2738, %v2740
        %v2742 = vrot.slane %v772, 1
        %v2743 = vsel %vm2736, %v2740, %v2742
        %v2744 = vrot.slane %v773, 1
        %v2745 = vsel %vm2736, %v2742, %v2744
        %v2746 = vrot.slane %v774, 1
        %v2747 = vsel %vm2736, %v2744, %v2746
        %v2748 = vrot.slane %v775, 1
        %v2749 = vsel %vm2736, %v2746, %v2748
        %v2750 = vrot.slane %v776, 1
        %v2751 = vsel %vm2736, %v2748, %v2750
        %v2752 = vrot.slane %v777, 1
        %v2753 = vsel %vm2736, %v2750, %v2752
        %v2754 = vrot.slane %v778, 1
        %v2755 = vsel %vm2736, %v2752, %v2754
        %v2756 = vrot.slane %v779, 1
        %v2757 = vsel %vm2736, %v2754, %v2756
        %v2758 = vrot.slane %v780, 1
        %v2759 = vsel %vm2736, %v2756, %v2758
        %v2760 = vrot.slane %v781, 1
        %v2761 = vsel %vm2736, %v2758, %v2760
        %v2762 = vrot.slane %v782, 1
        %v2763 = vsel %vm2736, %v2760, %v2762
        %v2764 = vrot.slane %v783, 1
        %v2765 = vsel %vm2736, %v2762, %v2764
        %v2766 = vrot.slane %v784, 1
        %v2767 = vsel %vm2736, %v2764, %v2766
        %v2768 = vrot.slane %v785, 1
        %v2769 = vsel %vm2736, %v2766, %v2768
        %v2770 = vrot.slane %v786, 1
        %v2771 = vsel %vm2736, %v2768, %v2770
        %v2772 = vrot.slane %v787, 1
        %v2773 = vsel %vm2736, %v2770, %v2772
        %v2774 = vrot.slane %v788, 1
        %v2775 = vsel %vm2736, %v2772, %v2774
        %v2776 = vrot.slane %v789, 1
        %v2777 = vsel %vm2736, %v2774, %v2776
        %v2778 = vrot.slane %v790, 1
        %v2779 = vsel %vm2736, %v2776, %v2778
        %v2780 = vrot.slane %v791, 1
        %v2781 = vsel %vm2736, %v2778, %v2780
        %v2782 = vrot.slane %v792, 1
        %v2783 = vsel %vm2736, %v2780, %v2782
        %v2784 = vrot.slane %v793, 1
        %v2785 = vsel %vm2736, %v2782, %v2784
        %v2786 = vrot.slane %v794, 1
        %v2787 = vsel %vm2736, %v2784, %v2786
        %v2788 = vrot.slane %v795, 1
        %v2789 = vsel %vm2736, %v2786, %v2788
        %v2790 = vrot.slane %v796, 1
        %v2791 = vsel %vm2736, %v2788, %v2790
        %v2792 = vrot.slane %v797, 1
        %v2793 = vsel %vm2736, %v2790, %v2792
        %v2794 = vrot.slane %v798, 1
        %v2795 = vsel %vm2736, %v2792, %v2794
        %v2796 = vrot.slane %v799, 1
        %v2797 = vsel %vm2736, %v2794, %v2796
        %v2798 = vrot.slane %v800, 1
        %v2799 = vsel %vm2736, %v2796, %v2798
        %v2800 = vrot.slane %v801, 1
        %v2801 = vsel %vm2736, %v2798, %v2800
        %2802 = vrot.lane.b32.xlu0 %v2739, 4
        %v2803 = vpop.permute.xlu0 %2802
        %2804 = vrot.lane.b32.xlu0 %v2741, 4
        %v2805 = vpop.permute.xlu0 %2804
        %2806 = vrot.lane.b32.xlu0 %v2743, 4
        %v2807 = vpop.permute.xlu0 %2806
        %2808 = vrot.lane.b32.xlu0 %v2745, 4
        %v2809 = vpop.permute.xlu0 %2808
        %2810 = vrot.lane.b32.xlu0 %v2747, 4
        %v2811 = vpop.permute.xlu0 %2810
        %2812 = vrot.lane.b32.xlu0 %v2749, 4
        %v2813 = vpop.permute.xlu0 %2812
        %2814 = vrot.lane.b32.xlu0 %v2751, 4
        %v2815 = vpop.permute.xlu0 %2814
        %2816 = vrot.lane.b32.xlu0 %v2753, 4
        %v2817 = vpop.permute.xlu0 %2816
        %2818 = vrot.lane.b32.xlu0 %v2755, 4
        %v2819 = vpop.permute.xlu0 %2818
        %2820 = vrot.lane.b32.xlu0 %v2757, 4
        %v2821 = vpop.permute.xlu0 %2820
        %2822 = vrot.lane.b32.xlu0 %v2759, 4
        %v2823 = vpop.permute.xlu0 %2822
        %2824 = vrot.lane.b32.xlu0 %v2761, 4
        %v2825 = vpop.permute.xlu0 %2824
        %2826 = vrot.lane.b32.xlu0 %v2763, 4
        %v2827 = vpop.permute.xlu0 %2826
        %2828 = vrot.lane.b32.xlu0 %v2765, 4
        %v2829 = vpop.permute.xlu0 %2828
        %2830 = vrot.lane.b32.xlu0 %v2767, 4
        %v2831 = vpop.permute.xlu0 %2830
        %2832 = vrot.lane.b32.xlu0 %v2769, 4
        %v2833 = vpop.permute.xlu0 %2832
        %2834 = vrot.lane.b32.xlu0 %v2771, 4
        %v2835 = vpop.permute.xlu0 %2834
        %2836 = vrot.lane.b32.xlu0 %v2773, 4
        %v2837 = vpop.permute.xlu0 %2836
        %2838 = vrot.lane.b32.xlu0 %v2775, 4
        %v2839 = vpop.permute.xlu0 %2838
        %2840 = vrot.lane.b32.xlu0 %v2777, 4
        %v2841 = vpop.permute.xlu0 %2840
        %2842 = vrot.lane.b32.xlu0 %v2779, 4
        %v2843 = vpop.permute.xlu0 %2842
        %2844 = vrot.lane.b32.xlu0 %v2781, 4
        %v2845 = vpop.permute.xlu0 %2844
        %2846 = vrot.lane.b32.xlu0 %v2783, 4
        %v2847 = vpop.permute.xlu0 %2846
        %2848 = vrot.lane.b32.xlu0 %v2785, 4
        %v2849 = vpop.permute.xlu0 %2848
        %2850 = vrot.lane.b32.xlu0 %v2787, 4
        %v2851 = vpop.permute.xlu0 %2850
        %2852 = vrot.lane.b32.xlu0 %v2789, 4
        %v2853 = vpop.permute.xlu0 %2852
        %2854 = vrot.lane.b32.xlu0 %v2791, 4
        %v2855 = vpop.permute.xlu0 %2854
        %2856 = vrot.lane.b32.xlu0 %v2793, 4
        %v2857 = vpop.permute.xlu0 %2856
        %2858 = vrot.lane.b32.xlu0 %v2795, 4
        %v2859 = vpop.permute.xlu0 %2858
        %2860 = vrot.lane.b32.xlu0 %v2797, 4
        %v2861 = vpop.permute.xlu0 %2860
        %2862 = vrot.lane.b32.xlu0 %v2799, 4
        %v2863 = vpop.permute.xlu0 %2862
        %2864 = vrot.lane.b32.xlu0 %v2801, 4
        %v2865 = vpop.permute.xlu0 %2864
        %vm2931 = vcmask 1045504
        %v2932 = vrot.slane %v1060, 2
        %v2933 = vrot.slane %v1061, 2
        %v2934 = vsel %vm2931, %v2932, %v2933
        %v2935 = vrot.slane %v1062, 2
        %v2936 = vsel %vm2931, %v2933, %v2935
        %v2937 = vrot.slane %v1063, 2
        %v2938 = vsel %vm2931, %v2935, %v2937
        %v2939 = vrot.slane %v1064, 2
        %v2940 = vsel %vm2931, %v2937, %v2939
        %v2941 = vrot.slane %v1065, 2
        %v2942 = vsel %vm2931, %v2939, %v2941
        %v2943 = vrot.slane %v1066, 2
        %v2944 = vsel %vm2931, %v2941, %v2943
        %v2945 = vrot.slane %v1067, 2
        %v2946 = vsel %vm2931, %v2943, %v2945
        %v2947 = vrot.slane %v1068, 2
        %v2948 = vsel %vm2931, %v2945, %v2947
        %v2949 = vrot.slane %v1069, 2
        %v2950 = vsel %vm2931, %v2947, %v2949
        %v2951 = vrot.slane %v1070, 2
        %v2952 = vsel %vm2931, %v2949, %v2951
        %v2953 = vrot.slane %v1071, 2
        %v2954 = vsel %vm2931, %v2951, %v2953
        %v2955 = vrot.slane %v1072, 2
        %v2956 = vsel %vm2931, %v2953, %v2955
        %v2957 = vrot.slane %v1073, 2
        %v2958 = vsel %vm2931, %v2955, %v2957
        %v2959 = vrot.slane %v1074, 2
        %v2960 = vsel %vm2931, %v2957, %v2959
        %v2961 = vrot.slane %v1075, 2
        %v2962 = vsel %vm2931, %v2959, %v2961
        %v2963 = vrot.slane %v1076, 2
        %v2964 = vsel %vm2931, %v2961, %v2963
        %v2965 = vrot.slane %v1077, 2
        %v2966 = vsel %vm2931, %v2963, %v2965
        %v2967 = vrot.slane %v1078, 2
        %v2968 = vsel %vm2931, %v2965, %v2967
        %v2969 = vrot.slane %v1079, 2
        %v2970 = vsel %vm2931, %v2967, %v2969
        %v2971 = vrot.slane %v1080, 2
        %v2972 = vsel %vm2931, %v2969, %v2971
        %v2973 = vrot.slane %v1081, 2
        %v2974 = vsel %vm2931, %v2971, %v2973
        %v2975 = vrot.slane %v1082, 2
        %v2976 = vsel %vm2931, %v2973, %v2975
        %v2977 = vrot.slane %v1083, 2
        %v2978 = vsel %vm2931, %v2975, %v2977
        %v2979 = vrot.slane %v1084, 2
        %v2980 = vsel %vm2931, %v2977, %v2979
        %v2981 = vrot.slane %v1085, 2
        %v2982 = vsel %vm2931, %v2979, %v2981
        %v2983 = vrot.slane %v1086, 2
        %v2984 = vsel %vm2931, %v2981, %v2983
        %v2985 = vrot.slane %v1087, 2
        %v2986 = vsel %vm2931, %v2983, %v2985
        %v2987 = vrot.slane %v1088, 2
        %v2988 = vsel %vm2931, %v2985, %v2987
        %v2989 = vrot.slane %v1089, 2
        %v2990 = vsel %vm2931, %v2987, %v2989
        %v2991 = vrot.slane %v1090, 2
        %v2992 = vsel %vm2931, %v2989, %v2991
        %v2993 = vrot.slane %v1091, 2
        %v2994 = vsel %vm2931, %v2991, %v2993
        %v2995 = vrot.slane %v1092, 2
        %v2996 = vsel %vm2931, %v2993, %v2995
        %2997 = vrot.lane.b32.xlu0 %v2934, 8
        %v2998 = vpop.permute.xlu0 %2997
        %2999 = vrot.lane.b32.xlu0 %v2936, 8
        %v3000 = vpop.permute.xlu0 %2999
        %3001 = vrot.lane.b32.xlu0 %v2938, 8
        %v3002 = vpop.permute.xlu0 %3001
        %3003 = vrot.lane.b32.xlu0 %v2940, 8
        %v3004 = vpop.permute.xlu0 %3003
        %3005 = vrot.lane.b32.xlu0 %v2942, 8
        %v3006 = vpop.permute.xlu0 %3005
        %3007 = vrot.lane.b32.xlu0 %v2944, 8
        %v3008 = vpop.permute.xlu0 %3007
        %3009 = vrot.lane.b32.xlu0 %v2946, 8
        %v3010 = vpop.permute.xlu0 %3009
        %3011 = vrot.lane.b32.xlu0 %v2948, 8
        %v3012 = vpop.permute.xlu0 %3011
        %3013 = vrot.lane.b32.xlu0 %v2950, 8
        %v3014 = vpop.permute.xlu0 %3013
        %3015 = vrot.lane.b32.xlu0 %v2952, 8
        %v3016 = vpop.permute.xlu0 %3015
        %3017 = vrot.lane.b32.xlu0 %v2954, 8
        %v3018 = vpop.permute.xlu0 %3017
        %3019 = vrot.lane.b32.xlu0 %v2956, 8
        %v3020 = vpop.permute.xlu0 %3019
        %3021 = vrot.lane.b32.xlu0 %v2958, 8
        %v3022 = vpop.permute.xlu0 %3021
        %3023 = vrot.lane.b32.xlu0 %v2960, 8
        %v3024 = vpop.permute.xlu0 %3023
        %3025 = vrot.lane.b32.xlu0 %v2962, 8
        %v3026 = vpop.permute.xlu0 %3025
        %3027 = vrot.lane.b32.xlu0 %v2964, 8
        %v3028 = vpop.permute.xlu0 %3027
        %3029 = vrot.lane.b32.xlu0 %v2966, 8
        %v3030 = vpop.permute.xlu0 %3029
        %3031 = vrot.lane.b32.xlu0 %v2968, 8
        %v3032 = vpop.permute.xlu0 %3031
        %3033 = vrot.lane.b32.xlu0 %v2970, 8
        %v3034 = vpop.permute.xlu0 %3033
        %3035 = vrot.lane.b32.xlu0 %v2972, 8
        %v3036 = vpop.permute.xlu0 %3035
        %3037 = vrot.lane.b32.xlu0 %v2974, 8
        %v3038 = vpop.permute.xlu0 %3037
        %3039 = vrot.lane.b32.xlu0 %v2976, 8
        %v3040 = vpop.permute.xlu0 %3039
        %3041 = vrot.lane.b32.xlu0 %v2978, 8
        %v3042 = vpop.permute.xlu0 %3041
        %3043 = vrot.lane.b32.xlu0 %v2980, 8
        %v3044 = vpop.permute.xlu0 %3043
        %3045 = vrot.lane.b32.xlu0 %v2982, 8
        %v3046 = vpop.permute.xlu0 %3045
        %3047 = vrot.lane.b32.xlu0 %v2984, 8
        %v3048 = vpop.permute.xlu0 %3047
        %3049 = vrot.lane.b32.xlu0 %v2986, 8
        %v3050 = vpop.permute.xlu0 %3049
        %3051 = vrot.lane.b32.xlu0 %v2988, 8
        %v3052 = vpop.permute.xlu0 %3051
        %3053 = vrot.lane.b32.xlu0 %v2990, 8
        %v3054 = vpop.permute.xlu0 %3053
        %3055 = vrot.lane.b32.xlu0 %v2992, 8
        %v3056 = vpop.permute.xlu0 %3055
        %3057 = vrot.lane.b32.xlu0 %v2994, 8
        %v3058 = vpop.permute.xlu0 %3057
        %3059 = vrot.lane.b32.xlu0 %v2996, 8
        %v3060 = vpop.permute.xlu0 %3059
        %3125 = vrot.lane.b32.xlu0 %v1286, 12
        %v3126 = vpop.permute.xlu0 %3125
        %3127 = vrot.lane.b32.xlu0 %v1287, 12
        %v3128 = vpop.permute.xlu0 %3127
        %3129 = vrot.lane.b32.xlu0 %v1288, 12
        %v3130 = vpop.permute.xlu0 %3129
        %3131 = vrot.lane.b32.xlu0 %v1289, 12
        %v3132 = vpop.permute.xlu0 %3131
        %3133 = vrot.lane.b32.xlu0 %v1290, 12
        %v3134 = vpop.permute.xlu0 %3133
        %3135 = vrot.lane.b32.xlu0 %v1291, 12
        %v3136 = vpop.permute.xlu0 %3135
        %3137 = vrot.lane.b32.xlu0 %v1292, 12
        %v3138 = vpop.permute.xlu0 %3137
        %3139 = vrot.lane.b32.xlu0 %v1293, 12
        %v3140 = vpop.permute.xlu0 %3139
        %3141 = vrot.lane.b32.xlu0 %v1294, 12
        %v3142 = vpop.permute.xlu0 %3141
        %3143 = vrot.lane.b32.xlu0 %v1295, 12
        %v3144 = vpop.permute.xlu0 %3143
        %3145 = vrot.lane.b32.xlu0 %v1296, 12
        %v3146 = vpop.permute.xlu0 %3145
        %3147 = vrot.lane.b32.xlu0 %v1297, 12
        %v3148 = vpop.permute.xlu0 %3147
        %3149 = vrot.lane.b32.xlu0 %v1298, 12
        %v3150 = vpop.permute.xlu0 %3149
        %3151 = vrot.lane.b32.xlu0 %v1299, 12
        %v3152 = vpop.permute.xlu0 %3151
        %3153 = vrot.lane.b32.xlu0 %v1300, 12
        %v3154 = vpop.permute.xlu0 %3153
        %3155 = vrot.lane.b32.xlu0 %v1301, 12
        %v3156 = vpop.permute.xlu0 %3155
        %3157 = vrot.lane.b32.xlu0 %v1302, 12
        %v3158 = vpop.permute.xlu0 %3157
        %3159 = vrot.lane.b32.xlu0 %v1303, 12
        %v3160 = vpop.permute.xlu0 %3159
        %3161 = vrot.lane.b32.xlu0 %v1304, 12
        %v3162 = vpop.permute.xlu0 %3161
        %3163 = vrot.lane.b32.xlu0 %v1305, 12
        %v3164 = vpop.permute.xlu0 %3163
        %3165 = vrot.lane.b32.xlu0 %v1306, 12
        %v3166 = vpop.permute.xlu0 %3165
        %3167 = vrot.lane.b32.xlu0 %v1307, 12
        %v3168 = vpop.permute.xlu0 %3167
        %3169 = vrot.lane.b32.xlu0 %v1308, 12
        %v3170 = vpop.permute.xlu0 %3169
        %3171 = vrot.lane.b32.xlu0 %v1309, 12
        %v3172 = vpop.permute.xlu0 %3171
        %3173 = vrot.lane.b32.xlu0 %v1310, 12
        %v3174 = vpop.permute.xlu0 %3173
        %3175 = vrot.lane.b32.xlu0 %v1311, 12
        %v3176 = vpop.permute.xlu0 %3175
        %3177 = vrot.lane.b32.xlu0 %v1312, 12
        %v3178 = vpop.permute.xlu0 %3177
        %3179 = vrot.lane.b32.xlu0 %v1313, 12
        %v3180 = vpop.permute.xlu0 %3179
        %3181 = vrot.lane.b32.xlu0 %v1314, 12
        %v3182 = vpop.permute.xlu0 %3181
        %3183 = vrot.lane.b32.xlu0 %v1315, 12
        %v3184 = vpop.permute.xlu0 %3183
        %3185 = vrot.lane.b32.xlu0 %v1316, 12
        %v3186 = vpop.permute.xlu0 %3185
        %3187 = vrot.lane.b32.xlu0 %v1317, 12
        %v3188 = vpop.permute.xlu0 %3187
        %v3254 = vrot.slane %v1575, 1
        %v3255 = vrot.slane %v1576, 1
        %v3256 = vsel %vm2736, %v3254, %v3255
        %v3257 = vrot.slane %v1577, 1
        %v3258 = vsel %vm2736, %v3255, %v3257
        %v3259 = vrot.slane %v1578, 1
        %v3260 = vsel %vm2736, %v3257, %v3259
        %v3261 = vrot.slane %v1579, 1
        %v3262 = vsel %vm2736, %v3259, %v3261
        %v3263 = vrot.slane %v1580, 1
        %v3264 = vsel %vm2736, %v3261, %v3263
        %v3265 = vrot.slane %v1581, 1
        %v3266 = vsel %vm2736, %v3263, %v3265
        %v3267 = vrot.slane %v1582, 1
        %v3268 = vsel %vm2736, %v3265, %v3267
        %v3269 = vrot.slane %v1583, 1
        %v3270 = vsel %vm2736, %v3267, %v3269
        %v3271 = vrot.slane %v1584, 1
        %v3272 = vsel %vm2736, %v3269, %v3271
        %v3273 = vrot.slane %v1585, 1
        %v3274 = vsel %vm2736, %v3271, %v3273
        %v3275 = vrot.slane %v1586, 1
        %v3276 = vsel %vm2736, %v3273, %v3275
        %v3277 = vrot.slane %v1587, 1
        %v3278 = vsel %vm2736, %v3275, %v3277
        %v3279 = vrot.slane %v1588, 1
        %v3280 = vsel %vm2736, %v3277, %v3279
        %v3281 = vrot.slane %v1589, 1
        %v3282 = vsel %vm2736, %v3279, %v3281
        %v3283 = vrot.slane %v1590, 1
        %v3284 = vsel %vm2736, %v3281, %v3283
        %v3285 = vrot.slane %v1591, 1
        %v3286 = vsel %vm2736, %v3283, %v3285
        %v3287 = vrot.slane %v1592, 1
        %v3288 = vsel %vm2736, %v3285, %v3287
        %v3289 = vrot.slane %v1593, 1
        %v3290 = vsel %vm2736, %v3287, %v3289
        %v3291 = vrot.slane %v1594, 1
        %v3292 = vsel %vm2736, %v3289, %v3291
        %v3293 = vrot.slane %v1595, 1
        %v3294 = vsel %vm2736, %v3291, %v3293
        %v3295 = vrot.slane %v1596, 1
        %v3296 = vsel %vm2736, %v3293, %v3295
        %v3297 = vrot.slane %v1597, 1
        %v3298 = vsel %vm2736, %v3295, %v3297
        %v3299 = vrot.slane %v1598, 1
        %v3300 = vsel %vm2736, %v3297, %v3299
        %v3301 = vrot.slane %v1599, 1
        %v3302 = vsel %vm2736, %v3299, %v3301
        %v3303 = vrot.slane %v1600, 1
        %v3304 = vsel %vm2736, %v3301, %v3303
        %v3305 = vrot.slane %v1601, 1
        %v3306 = vsel %vm2736, %v3303, %v3305
        %v3307 = vrot.slane %v1602, 1
        %v3308 = vsel %vm2736, %v3305, %v3307
        %v3309 = vrot.slane %v1603, 1
        %v3310 = vsel %vm2736, %v3307, %v3309
        %v3311 = vrot.slane %v1604, 1
        %v3312 = vsel %vm2736, %v3309, %v3311
        %v3313 = vrot.slane %v1605, 1
        %v3314 = vsel %vm2736, %v3311, %v3313
        %v3315 = vrot.slane %v1606, 1
        %v3316 = vsel %vm2736, %v3313, %v3315
        %v3317 = vrot.slane %v1607, 1
        %v3318 = vsel %vm2736, %v3315, %v3317
        %3319 = vrot.lane.b32.xlu0 %v3256, 16
        %v3320 = vpop.permute.xlu0 %3319
        %3321 = vrot.lane.b32.xlu0 %v3258, 16
        %v3322 = vpop.permute.xlu0 %3321
        %3323 = vrot.lane.b32.xlu0 %v3260, 16
        %v3324 = vpop.permute.xlu0 %3323
        %3325 = vrot.lane.b32.xlu0 %v3262, 16
        %v3326 = vpop.permute.xlu0 %3325
        %3327 = vrot.lane.b32.xlu0 %v3264, 16
        %v3328 = vpop.permute.xlu0 %3327
        %3329 = vrot.lane.b32.xlu0 %v3266, 16
        %v3330 = vpop.permute.xlu0 %3329
        %3331 = vrot.lane.b32.xlu0 %v3268, 16
        %v3332 = vpop.permute.xlu0 %3331
        %3333 = vrot.lane.b32.xlu0 %v3270, 16
        %v3334 = vpop.permute.xlu0 %3333
        %3335 = vrot.lane.b32.xlu0 %v3272, 16
        %v3336 = vpop.permute.xlu0 %3335
        %3337 = vrot.lane.b32.xlu0 %v3274, 16
        %v3338 = vpop.permute.xlu0 %3337
        %3339 = vrot.lane.b32.xlu0 %v3276, 16
        %v3340 = vpop.permute.xlu0 %3339
        %3341 = vrot.lane.b32.xlu0 %v3278, 16
        %v3342 = vpop.permute.xlu0 %3341
        %3343 = vrot.lane.b32.xlu0 %v3280, 16
        %v3344 = vpop.permute.xlu0 %3343
        %3345 = vrot.lane.b32.xlu0 %v3282, 16
        %v3346 = vpop.permute.xlu0 %3345
        %3347 = vrot.lane.b32.xlu0 %v3284, 16
        %v3348 = vpop.permute.xlu0 %3347
        %3349 = vrot.lane.b32.xlu0 %v3286, 16
        %v3350 = vpop.permute.xlu0 %3349
        %3351 = vrot.lane.b32.xlu0 %v3288, 16
        %v3352 = vpop.permute.xlu0 %3351
        %3353 = vrot.lane.b32.xlu0 %v3290, 16
        %v3354 = vpop.permute.xlu0 %3353
        %3355 = vrot.lane.b32.xlu0 %v3292, 16
        %v3356 = vpop.permute.xlu0 %3355
        %3357 = vrot.lane.b32.xlu0 %v3294, 16
        %v3358 = vpop.permute.xlu0 %3357
        %3359 = vrot.lane.b32.xlu0 %v3296, 16
        %v3360 = vpop.permute.xlu0 %3359
        %3361 = vrot.lane.b32.xlu0 %v3298, 16
        %v3362 = vpop.permute.xlu0 %3361
        %3363 = vrot.lane.b32.xlu0 %v3300, 16
        %v3364 = vpop.permute.xlu0 %3363
        %3365 = vrot.lane.b32.xlu0 %v3302, 16
        %v3366 = vpop.permute.xlu0 %3365
        %3367 = vrot.lane.b32.xlu0 %v3304, 16
        %v3368 = vpop.permute.xlu0 %3367
        %3369 = vrot.lane.b32.xlu0 %v3306, 16
        %v3370 = vpop.permute.xlu0 %3369
        %3371 = vrot.lane.b32.xlu0 %v3308, 16
        %v3372 = vpop.permute.xlu0 %3371
        %3373 = vrot.lane.b32.xlu0 %v3310, 16
        %v3374 = vpop.permute.xlu0 %3373
        %3375 = vrot.lane.b32.xlu0 %v3312, 16
        %v3376 = vpop.permute.xlu0 %3375
        %3377 = vrot.lane.b32.xlu0 %v3314, 16
        %v3378 = vpop.permute.xlu0 %3377
        %3379 = vrot.lane.b32.xlu0 %v3316, 16
        %v3380 = vpop.permute.xlu0 %3379
        %3381 = vrot.lane.b32.xlu0 %v3318, 16
        %v3382 = vpop.permute.xlu0 %3381
        %v3448 = vrot.slane %v1865, 2
        %v3449 = vrot.slane %v1866, 2
        %v3450 = vsel %vm2931, %v3448, %v3449
        %v3451 = vrot.slane %v1867, 2
        %v3452 = vsel %vm2931, %v3449, %v3451
        %v3453 = vrot.slane %v1868, 2
        %v3454 = vsel %vm2931, %v3451, %v3453
        %v3455 = vrot.slane %v1869, 2
        %v3456 = vsel %vm2931, %v3453, %v3455
        %v3457 = vrot.slane %v1870, 2
        %v3458 = vsel %vm2931, %v3455, %v3457
        %v3459 = vrot.slane %v1871, 2
        %v3460 = vsel %vm2931, %v3457, %v3459
        %v3461 = vrot.slane %v1872, 2
        %v3462 = vsel %vm2931, %v3459, %v3461
        %v3463 = vrot.slane %v1873, 2
        %v3464 = vsel %vm2931, %v3461, %v3463
        %v3465 = vrot.slane %v1874, 2
        %v3466 = vsel %vm2931, %v3463, %v3465
        %v3467 = vrot.slane %v1875, 2
        %v3468 = vsel %vm2931, %v3465, %v3467
        %v3469 = vrot.slane %v1876, 2
        %v3470 = vsel %vm2931, %v3467, %v3469
        %v3471 = vrot.slane %v1877, 2
        %v3472 = vsel %vm2931, %v3469, %v3471
        %v3473 = vrot.slane %v1878, 2
        %v3474 = vsel %vm2931, %v3471, %v3473
        %v3475 = vrot.slane %v1879, 2
        %v3476 = vsel %vm2931, %v3473, %v3475
        %v3477 = vrot.slane %v1880, 2
        %v3478 = vsel %vm2931, %v3475, %v3477
        %v3479 = vrot.slane %v1881, 2
        %v3480 = vsel %vm2931, %v3477, %v3479
        %v3481 = vrot.slane %v1882, 2
        %v3482 = vsel %vm2931, %v3479, %v3481
        %v3483 = vrot.slane %v1883, 2
        %v3484 = vsel %vm2931, %v3481, %v3483
        %v3485 = vrot.slane %v1884, 2
        %v3486 = vsel %vm2931, %v3483, %v3485
        %v3487 = vrot.slane %v1885, 2
        %v3488 = vsel %vm2931, %v3485, %v3487
        %v3489 = vrot.slane %v1886, 2
        %v3490 = vsel %vm2931, %v3487, %v3489
        %v3491 = vrot.slane %v1887, 2
        %v3492 = vsel %vm2931, %v3489, %v3491
        %v3493 = vrot.slane %v1888, 2
        %v3494 = vsel %vm2931, %v3491, %v3493
        %v3495 = vrot.slane %v1889, 2
        %v3496 = vsel %vm2931, %v3493, %v3495
        %v3497 = vrot.slane %v1890, 2
        %v3498 = vsel %vm2931, %v3495, %v3497
        %v3499 = vrot.slane %v1891, 2
        %v3500 = vsel %vm2931, %v3497, %v3499
        %v3501 = vrot.slane %v1892, 2
        %v3502 = vsel %vm2931, %v3499, %v3501
        %v3503 = vrot.slane %v1893, 2
        %v3504 = vsel %vm2931, %v3501, %v3503
        %v3505 = vrot.slane %v1894, 2
        %v3506 = vsel %vm2931, %v3503, %v3505
        %v3507 = vrot.slane %v1895, 2
        %v3508 = vsel %vm2931, %v3505, %v3507
        %v3509 = vrot.slane %v1896, 2
        %v3510 = vsel %vm2931, %v3507, %v3509
        %v3511 = vrot.slane %v1897, 2
        %v3512 = vsel %vm2931, %v3509, %v3511
        %3513 = vrot.lane.b32.xlu0 %v3450, 20
        %v3514 = vpop.permute.xlu0 %3513
        %3515 = vrot.lane.b32.xlu0 %v3452, 20
        %v3516 = vpop.permute.xlu0 %3515
        %3517 = vrot.lane.b32.xlu0 %v3454, 20
        %v3518 = vpop.permute.xlu0 %3517
        %3519 = vrot.lane.b32.xlu0 %v3456, 20
        %v3520 = vpop.permute.xlu0 %3519
        %3521 = vrot.lane.b32.xlu0 %v3458, 20
        %v3522 = vpop.permute.xlu0 %3521
        %3523 = vrot.lane.b32.xlu0 %v3460, 20
        %v3524 = vpop.permute.xlu0 %3523
        %3525 = vrot.lane.b32.xlu0 %v3462, 20
        %v3526 = vpop.permute.xlu0 %3525
        %3527 = vrot.lane.b32.xlu0 %v3464, 20
        %v3528 = vpop.permute.xlu0 %3527
        %3529 = vrot.lane.b32.xlu0 %v3466, 20
        %v3530 = vpop.permute.xlu0 %3529
        %3531 = vrot.lane.b32.xlu0 %v3468, 20
        %v3532 = vpop.permute.xlu0 %3531
        %3533 = vrot.lane.b32.xlu0 %v3470, 20
        %v3534 = vpop.permute.xlu0 %3533
        %3535 = vrot.lane.b32.xlu0 %v3472, 20
        %v3536 = vpop.permute.xlu0 %3535
        %3537 = vrot.lane.b32.xlu0 %v3474, 20
        %v3538 = vpop.permute.xlu0 %3537
        %3539 = vrot.lane.b32.xlu0 %v3476, 20
        %v3540 = vpop.permute.xlu0 %3539
        %3541 = vrot.lane.b32.xlu0 %v3478, 20
        %v3542 = vpop.permute.xlu0 %3541
        %3543 = vrot.lane.b32.xlu0 %v3480, 20
        %v3544 = vpop.permute.xlu0 %3543
        %3545 = vrot.lane.b32.xlu0 %v3482, 20
        %v3546 = vpop.permute.xlu0 %3545
        %3547 = vrot.lane.b32.xlu0 %v3484, 20
        %v3548 = vpop.permute.xlu0 %3547
        %3549 = vrot.lane.b32.xlu0 %v3486, 20
        %v3550 = vpop.permute.xlu0 %3549
        %3551 = vrot.lane.b32.xlu0 %v3488, 20
        %v3552 = vpop.permute.xlu0 %3551
        %3553 = vrot.lane.b32.xlu0 %v3490, 20
        %v3554 = vpop.permute.xlu0 %3553
        %3555 = vrot.lane.b32.xlu0 %v3492, 20
        %v3556 = vpop.permute.xlu0 %3555
        %3557 = vrot.lane.b32.xlu0 %v3494, 20
        %v3558 = vpop.permute.xlu0 %3557
        %3559 = vrot.lane.b32.xlu0 %v3496, 20
        %v3560 = vpop.permute.xlu0 %3559
        %3561 = vrot.lane.b32.xlu0 %v3498, 20
        %v3562 = vpop.permute.xlu0 %3561
        %3563 = vrot.lane.b32.xlu0 %v3500, 20
        %v3564 = vpop.permute.xlu0 %3563
        %3565 = vrot.lane.b32.xlu0 %v3502, 20
        %v3566 = vpop.permute.xlu0 %3565
        %3567 = vrot.lane.b32.xlu0 %v3504, 20
        %v3568 = vpop.permute.xlu0 %3567
        %3569 = vrot.lane.b32.xlu0 %v3506, 20
        %v3570 = vpop.permute.xlu0 %3569
        %3571 = vrot.lane.b32.xlu0 %v3508, 20
        %v3572 = vpop.permute.xlu0 %3571
        %3573 = vrot.lane.b32.xlu0 %v3510, 20
        %v3574 = vpop.permute.xlu0 %3573
        %3575 = vrot.lane.b32.xlu0 %v3512, 20
        %v3576 = vpop.permute.xlu0 %3575
        %3641 = vrot.lane.b32.xlu0 %v2091, 24
        %v3642 = vpop.permute.xlu0 %3641
        %3643 = vrot.lane.b32.xlu0 %v2092, 24
        %v3644 = vpop.permute.xlu0 %3643
        %3645 = vrot.lane.b32.xlu0 %v2093, 24
        %v3646 = vpop.permute.xlu0 %3645
        %3647 = vrot.lane.b32.xlu0 %v2094, 24
        %v3648 = vpop.permute.xlu0 %3647
        %3649 = vrot.lane.b32.xlu0 %v2095, 24
        %v3650 = vpop.permute.xlu0 %3649
        %3651 = vrot.lane.b32.xlu0 %v2096, 24
        %v3652 = vpop.permute.xlu0 %3651
        %3653 = vrot.lane.b32.xlu0 %v2097, 24
        %v3654 = vpop.permute.xlu0 %3653
        %3655 = vrot.lane.b32.xlu0 %v2098, 24
        %v3656 = vpop.permute.xlu0 %3655
        %3657 = vrot.lane.b32.xlu0 %v2099, 24
        %v3658 = vpop.permute.xlu0 %3657
        %3659 = vrot.lane.b32.xlu0 %v2100, 24
        %v3660 = vpop.permute.xlu0 %3659
        %3661 = vrot.lane.b32.xlu0 %v2101, 24
        %v3662 = vpop.permute.xlu0 %3661
        %3663 = vrot.lane.b32.xlu0 %v2102, 24
        %v3664 = vpop.permute.xlu0 %3663
        %3665 = vrot.lane.b32.xlu0 %v2103, 24
        %v3666 = vpop.permute.xlu0 %3665
        %3667 = vrot.lane.b32.xlu0 %v2104, 24
        %v3668 = vpop.permute.xlu0 %3667
        %3669 = vrot.lane.b32.xlu0 %v2105, 24
        %v3670 = vpop.permute.xlu0 %3669
        %3671 = vrot.lane.b32.xlu0 %v2106, 24
        %v3672 = vpop.permute.xlu0 %3671
        %3673 = vrot.lane.b32.xlu0 %v2107, 24
        %v3674 = vpop.permute.xlu0 %3673
        %3675 = vrot.lane.b32.xlu0 %v2108, 24
        %v3676 = vpop.permute.xlu0 %3675
        %3677 = vrot.lane.b32.xlu0 %v2109, 24
        %v3678 = vpop.permute.xlu0 %3677
        %3679 = vrot.lane.b32.xlu0 %v2110, 24
        %v3680 = vpop.permute.xlu0 %3679
        %3681 = vrot.lane.b32.xlu0 %v2111, 24
        %v3682 = vpop.permute.xlu0 %3681
        %3683 = vrot.lane.b32.xlu0 %v2112, 24
        %v3684 = vpop.permute.xlu0 %3683
        %3685 = vrot.lane.b32.xlu0 %v2113, 24
        %v3686 = vpop.permute.xlu0 %3685
        %3687 = vrot.lane.b32.xlu0 %v2114, 24
        %v3688 = vpop.permute.xlu0 %3687
        %3689 = vrot.lane.b32.xlu0 %v2115, 24
        %v3690 = vpop.permute.xlu0 %3689
        %3691 = vrot.lane.b32.xlu0 %v2116, 24
        %v3692 = vpop.permute.xlu0 %3691
        %3693 = vrot.lane.b32.xlu0 %v2117, 24
        %v3694 = vpop.permute.xlu0 %3693
        %3695 = vrot.lane.b32.xlu0 %v2118, 24
        %v3696 = vpop.permute.xlu0 %3695
        %3697 = vrot.lane.b32.xlu0 %v2119, 24
        %v3698 = vpop.permute.xlu0 %3697
        %3699 = vrot.lane.b32.xlu0 %v2120, 24
        %v3700 = vpop.permute.xlu0 %3699
        %3701 = vrot.lane.b32.xlu0 %v2121, 24
        %v3702 = vpop.permute.xlu0 %3701
        %3703 = vrot.lane.b32.xlu0 %v2122, 24
        %v3704 = vpop.permute.xlu0 %3703
        %v3770 = vrot.slane %v2380, 1
        %v3771 = vrot.slane %v2381, 1
        %v3772 = vsel %vm2736, %v3770, %v3771
        %v3773 = vrot.slane %v2382, 1
        %v3774 = vsel %vm2736, %v3771, %v3773
        %v3775 = vrot.slane %v2383, 1
        %v3776 = vsel %vm2736, %v3773, %v3775
        %v3777 = vrot.slane %v2384, 1
        %v3778 = vsel %vm2736, %v3775, %v3777
        %v3779 = vrot.slane %v2385, 1
        %v3780 = vsel %vm2736, %v3777, %v3779
        %v3781 = vrot.slane %v2386, 1
        %v3782 = vsel %vm2736, %v3779, %v3781
        %v3783 = vrot.slane %v2387, 1
        %v3784 = vsel %vm2736, %v3781, %v3783
        %v3785 = vrot.slane %v2388, 1
        %v3786 = vsel %vm2736, %v3783, %v3785
        %v3787 = vrot.slane %v2389, 1
        %v3788 = vsel %vm2736, %v3785, %v3787
        %v3789 = vrot.slane %v2390, 1
        %v3790 = vsel %vm2736, %v3787, %v3789
        %v3791 = vrot.slane %v2391, 1
        %v3792 = vsel %vm2736, %v3789, %v3791
        %v3793 = vrot.slane %v2392, 1
        %v3794 = vsel %vm2736, %v3791, %v3793
        %v3795 = vrot.slane %v2393, 1
        %v3796 = vsel %vm2736, %v3793, %v3795
        %v3797 = vrot.slane %v2394, 1
        %v3798 = vsel %vm2736, %v3795, %v3797
        %v3799 = vrot.slane %v2395, 1
        %v3800 = vsel %vm2736, %v3797, %v3799
        %v3801 = vrot.slane %v2396, 1
        %v3802 = vsel %vm2736, %v3799, %v3801
        %v3803 = vrot.slane %v2397, 1
        %v3804 = vsel %vm2736, %v3801, %v3803
        %v3805 = vrot.slane %v2398, 1
        %v3806 = vsel %vm2736, %v3803, %v3805
        %v3807 = vrot.slane %v2399, 1
        %v3808 = vsel %vm2736, %v3805, %v3807
        %v3809 = vrot.slane %v2400, 1
        %v3810 = vsel %vm2736, %v3807, %v3809
        %v3811 = vrot.slane %v2401, 1
        %v3812 = vsel %vm2736, %v3809, %v3811
        %v3813 = vrot.slane %v2402, 1
        %v3814 = vsel %vm2736, %v3811, %v3813
        %v3815 = vrot.slane %v2403, 1
        %v3816 = vsel %vm2736, %v3813, %v3815
        %v3817 = vrot.slane %v2404, 1
        %v3818 = vsel %vm2736, %v3815, %v3817
        %v3819 = vrot.slane %v2405, 1
        %v3820 = vsel %vm2736, %v3817, %v3819
        %v3821 = vrot.slane %v2406, 1
        %v3822 = vsel %vm2736, %v3819, %v3821
        %v3823 = vrot.slane %v2407, 1
        %v3824 = vsel %vm2736, %v3821, %v3823
        %v3825 = vrot.slane %v2408, 1
        %v3826 = vsel %vm2736, %v3823, %v3825
        %v3827 = vrot.slane %v2409, 1
        %v3828 = vsel %vm2736, %v3825, %v3827
        %v3829 = vrot.slane %v2410, 1
        %v3830 = vsel %vm2736, %v3827, %v3829
        %v3831 = vrot.slane %v2411, 1
        %v3832 = vsel %vm2736, %v3829, %v3831
        %v3833 = vrot.slane %v2412, 1
        %v3834 = vsel %vm2736, %v3831, %v3833
        %3835 = vrot.lane.b32.xlu0 %v3772, 28
        %v3836 = vpop.permute.xlu0 %3835
        %3837 = vrot.lane.b32.xlu0 %v3774, 28
        %v3838 = vpop.permute.xlu0 %3837
        %3839 = vrot.lane.b32.xlu0 %v3776, 28
        %v3840 = vpop.permute.xlu0 %3839
        %3841 = vrot.lane.b32.xlu0 %v3778, 28
        %v3842 = vpop.permute.xlu0 %3841
        %3843 = vrot.lane.b32.xlu0 %v3780, 28
        %v3844 = vpop.permute.xlu0 %3843
        %3845 = vrot.lane.b32.xlu0 %v3782, 28
        %v3846 = vpop.permute.xlu0 %3845
        %3847 = vrot.lane.b32.xlu0 %v3784, 28
        %v3848 = vpop.permute.xlu0 %3847
        %3849 = vrot.lane.b32.xlu0 %v3786, 28
        %v3850 = vpop.permute.xlu0 %3849
        %3851 = vrot.lane.b32.xlu0 %v3788, 28
        %v3852 = vpop.permute.xlu0 %3851
        %3853 = vrot.lane.b32.xlu0 %v3790, 28
        %v3854 = vpop.permute.xlu0 %3853
        %3855 = vrot.lane.b32.xlu0 %v3792, 28
        %v3856 = vpop.permute.xlu0 %3855
        %3857 = vrot.lane.b32.xlu0 %v3794, 28
        %v3858 = vpop.permute.xlu0 %3857
        %3859 = vrot.lane.b32.xlu0 %v3796, 28
        %v3860 = vpop.permute.xlu0 %3859
        %3861 = vrot.lane.b32.xlu0 %v3798, 28
        %v3862 = vpop.permute.xlu0 %3861
        %3863 = vrot.lane.b32.xlu0 %v3800, 28
        %v3864 = vpop.permute.xlu0 %3863
        %3865 = vrot.lane.b32.xlu0 %v3802, 28
        %v3866 = vpop.permute.xlu0 %3865
        %3867 = vrot.lane.b32.xlu0 %v3804, 28
        %v3868 = vpop.permute.xlu0 %3867
        %3869 = vrot.lane.b32.xlu0 %v3806, 28
        %v3870 = vpop.permute.xlu0 %3869
        %3871 = vrot.lane.b32.xlu0 %v3808, 28
        %v3872 = vpop.permute.xlu0 %3871
        %3873 = vrot.lane.b32.xlu0 %v3810, 28
        %v3874 = vpop.permute.xlu0 %3873
        %3875 = vrot.lane.b32.xlu0 %v3812, 28
        %v3876 = vpop.permute.xlu0 %3875
        %3877 = vrot.lane.b32.xlu0 %v3814, 28
        %v3878 = vpop.permute.xlu0 %3877
        %3879 = vrot.lane.b32.xlu0 %v3816, 28
        %v3880 = vpop.permute.xlu0 %3879
        %3881 = vrot.lane.b32.xlu0 %v3818, 28
        %v3882 = vpop.permute.xlu0 %3881
        %3883 = vrot.lane.b32.xlu0 %v3820, 28
        %v3884 = vpop.permute.xlu0 %3883
        %3885 = vrot.lane.b32.xlu0 %v3822, 28
        %v3886 = vpop.permute.xlu0 %3885
        %3887 = vrot.lane.b32.xlu0 %v3824, 28
        %v3888 = vpop.permute.xlu0 %3887
        %3889 = vrot.lane.b32.xlu0 %v3826, 28
        %v3890 = vpop.permute.xlu0 %3889
        %3891 = vrot.lane.b32.xlu0 %v3828, 28
        %v3892 = vpop.permute.xlu0 %3891
        %3893 = vrot.lane.b32.xlu0 %v3830, 28
        %v3894 = vpop.permute.xlu0 %3893
        %3895 = vrot.lane.b32.xlu0 %v3832, 28
        %v3896 = vpop.permute.xlu0 %3895
        %3897 = vrot.lane.b32.xlu0 %v3834, 28
        %v3898 = vpop.permute.xlu0 %3897
        %v3964 = vrot.slane %v2670, 2
        %v3965 = vrot.slane %v2671, 2
        %v3966 = vsel %vm2931, %v3964, %v3965
        %v3967 = vrot.slane %v2672, 2
        %v3968 = vsel %vm2931, %v3965, %v3967
        %v3969 = vrot.slane %v2673, 2
        %v3970 = vsel %vm2931, %v3967, %v3969
        %v3971 = vrot.slane %v2674, 2
        %v3972 = vsel %vm2931, %v3969, %v3971
        %v3973 = vrot.slane %v2675, 2
        %v3974 = vsel %vm2931, %v3971, %v3973
        %v3975 = vrot.slane %v2676, 2
        %v3976 = vsel %vm2931, %v3973, %v3975
        %v3977 = vrot.slane %v2677, 2
        %v3978 = vsel %vm2931, %v3975, %v3977
        %v3979 = vrot.slane %v2678, 2
        %v3980 = vsel %vm2931, %v3977, %v3979
        %v3981 = vrot.slane %v2679, 2
        %v3982 = vsel %vm2931, %v3979, %v3981
        %v3983 = vrot.slane %v2680, 2
        %v3984 = vsel %vm2931, %v3981, %v3983
        %v3985 = vrot.slane %v2681, 2
        %v3986 = vsel %vm2931, %v3983, %v3985
        %v3987 = vrot.slane %v2682, 2
        %v3988 = vsel %vm2931, %v3985, %v3987
        %v3989 = vrot.slane %v2683, 2
        %v3990 = vsel %vm2931, %v3987, %v3989
        %v3991 = vrot.slane %v2684, 2
        %v3992 = vsel %vm2931, %v3989, %v3991
        %v3993 = vrot.slane %v2685, 2
        %v3994 = vsel %vm2931, %v3991, %v3993
        %v3995 = vrot.slane %v2686, 2
        %v3996 = vsel %vm2931, %v3993, %v3995
        %v3997 = vrot.slane %v2687, 2
        %v3998 = vsel %vm2931, %v3995, %v3997
        %v3999 = vrot.slane %v2688, 2
        %v4000 = vsel %vm2931, %v3997, %v3999
        %v4001 = vrot.slane %v2689, 2
        %v4002 = vsel %vm2931, %v3999, %v4001
        %v4003 = vrot.slane %v2690, 2
        %v4004 = vsel %vm2931, %v4001, %v4003
        %v4005 = vrot.slane %v2691, 2
        %v4006 = vsel %vm2931, %v4003, %v4005
        %v4007 = vrot.slane %v2692, 2
        %v4008 = vsel %vm2931, %v4005, %v4007
        %v4009 = vrot.slane %v2693, 2
        %v4010 = vsel %vm2931, %v4007, %v4009
        %v4011 = vrot.slane %v2694, 2
        %v4012 = vsel %vm2931, %v4009, %v4011
        %v4013 = vrot.slane %v2695, 2
        %v4014 = vsel %vm2931, %v4011, %v4013
        %v4015 = vrot.slane %v2696, 2
        %v4016 = vsel %vm2931, %v4013, %v4015
        %v4017 = vrot.slane %v2697, 2
        %v4018 = vsel %vm2931, %v4015, %v4017
        %v4019 = vrot.slane %v2698, 2
        %v4020 = vsel %vm2931, %v4017, %v4019
        %v4021 = vrot.slane %v2699, 2
        %v4022 = vsel %vm2931, %v4019, %v4021
        %v4023 = vrot.slane %v2700, 2
        %v4024 = vsel %vm2931, %v4021, %v4023
        %v4025 = vrot.slane %v2701, 2
        %v4026 = vsel %vm2931, %v4023, %v4025
        %v4027 = vrot.slane %v2702, 2
        %v4028 = vsel %vm2931, %v4025, %v4027
        %4029 = vrot.lane.b32.xlu0 %v3966, 32
        %v4030 = vpop.permute.xlu0 %4029
        %4031 = vrot.lane.b32.xlu0 %v3968, 32
        %v4032 = vpop.permute.xlu0 %4031
        %4033 = vrot.lane.b32.xlu0 %v3970, 32
        %v4034 = vpop.permute.xlu0 %4033
        %4035 = vrot.lane.b32.xlu0 %v3972, 32
        %v4036 = vpop.permute.xlu0 %4035
        %4037 = vrot.lane.b32.xlu0 %v3974, 32
        %v4038 = vpop.permute.xlu0 %4037
        %4039 = vrot.lane.b32.xlu0 %v3976, 32
        %v4040 = vpop.permute.xlu0 %4039
        %4041 = vrot.lane.b32.xlu0 %v3978, 32
        %v4042 = vpop.permute.xlu0 %4041
        %4043 = vrot.lane.b32.xlu0 %v3980, 32
        %v4044 = vpop.permute.xlu0 %4043
        %4045 = vrot.lane.b32.xlu0 %v3982, 32
        %v4046 = vpop.permute.xlu0 %4045
        %4047 = vrot.lane.b32.xlu0 %v3984, 32
        %v4048 = vpop.permute.xlu0 %4047
        %4049 = vrot.lane.b32.xlu0 %v3986, 32
        %v4050 = vpop.permute.xlu0 %4049
        %4051 = vrot.lane.b32.xlu0 %v3988, 32
        %v4052 = vpop.permute.xlu0 %4051
        %4053 = vrot.lane.b32.xlu0 %v3990, 32
        %v4054 = vpop.permute.xlu0 %4053
        %4055 = vrot.lane.b32.xlu0 %v3992, 32
        %v4056 = vpop.permute.xlu0 %4055
        %4057 = vrot.lane.b32.xlu0 %v3994, 32
        %v4058 = vpop.permute.xlu0 %4057
        %4059 = vrot.lane.b32.xlu0 %v3996, 32
        %v4060 = vpop.permute.xlu0 %4059
        %4061 = vrot.lane.b32.xlu0 %v3998, 32
        %v4062 = vpop.permute.xlu0 %4061
        %4063 = vrot.lane.b32.xlu0 %v4000, 32
        %v4064 = vpop.permute.xlu0 %4063
        %4065 = vrot.lane.b32.xlu0 %v4002, 32
        %v4066 = vpop.permute.xlu0 %4065
        %4067 = vrot.lane.b32.xlu0 %v4004, 32
        %v4068 = vpop.permute.xlu0 %4067
        %4069 = vrot.lane.b32.xlu0 %v4006, 32
        %v4070 = vpop.permute.xlu0 %4069
        %4071 = vrot.lane.b32.xlu0 %v4008, 32
        %v4072 = vpop.permute.xlu0 %4071
        %4073 = vrot.lane.b32.xlu0 %v4010, 32
        %v4074 = vpop.permute.xlu0 %4073
        %4075 = vrot.lane.b32.xlu0 %v4012, 32
        %v4076 = vpop.permute.xlu0 %4075
        %4077 = vrot.lane.b32.xlu0 %v4014, 32
        %v4078 = vpop.permute.xlu0 %4077
        %4079 = vrot.lane.b32.xlu0 %v4016, 32
        %v4080 = vpop.permute.xlu0 %4079
        %4081 = vrot.lane.b32.xlu0 %v4018, 32
        %v4082 = vpop.permute.xlu0 %4081
        %4083 = vrot.lane.b32.xlu0 %v4020, 32
        %v4084 = vpop.permute.xlu0 %4083
        %4085 = vrot.lane.b32.xlu0 %v4022, 32
        %v4086 = vpop.permute.xlu0 %4085
        %4087 = vrot.lane.b32.xlu0 %v4024, 32
        %v4088 = vpop.permute.xlu0 %4087
        %4089 = vrot.lane.b32.xlu0 %v4026, 32
        %v4090 = vpop.permute.xlu0 %4089
        %4091 = vrot.lane.b32.xlu0 %v4028, 32
        %v4092 = vpop.permute.xlu0 %4091
        %vm4125 = vcmask 31744
        %v4126 = vsel %vm4125, %v479, %v2803
        %v4127 = vsel %vm4125, %v480, %v2805
        %v4128 = vsel %vm4125, %v481, %v2807
        %v4129 = vsel %vm4125, %v482, %v2809
        %v4130 = vsel %vm4125, %v483, %v2811
        %v4131 = vsel %vm4125, %v484, %v2813
        %v4132 = vsel %vm4125, %v485, %v2815
        %v4133 = vsel %vm4125, %v486, %v2817
        %v4134 = vsel %vm4125, %v487, %v2819
        %v4135 = vsel %vm4125, %v488, %v2821
        %v4136 = vsel %vm4125, %v489, %v2823
        %v4137 = vsel %vm4125, %v490, %v2825
        %v4138 = vsel %vm4125, %v491, %v2827
        %v4139 = vsel %vm4125, %v492, %v2829
        %v4140 = vsel %vm4125, %v493, %v2831
        %v4141 = vsel %vm4125, %v494, %v2833
        %v4142 = vsel %vm4125, %v495, %v2835
        %v4143 = vsel %vm4125, %v496, %v2837
        %v4144 = vsel %vm4125, %v497, %v2839
        %v4145 = vsel %vm4125, %v498, %v2841
        %v4146 = vsel %vm4125, %v499, %v2843
        %v4147 = vsel %vm4125, %v500, %v2845
        %v4148 = vsel %vm4125, %v501, %v2847
        %v4149 = vsel %vm4125, %v502, %v2849
        %v4150 = vsel %vm4125, %v503, %v2851
        %v4151 = vsel %vm4125, %v504, %v2853
        %v4152 = vsel %vm4125, %v505, %v2855
        %v4153 = vsel %vm4125, %v506, %v2857
        %v4154 = vsel %vm4125, %v507, %v2859
        %v4155 = vsel %vm4125, %v508, %v2861
        %v4156 = vsel %vm4125, %v509, %v2863
        %v4157 = vsel %vm4125, %v510, %v2865
        %vm4158 = vcmask 64512
        %v4159 = vsel %vm4158, %v4126, %v2998
        %v4160 = vsel %vm4158, %v4127, %v3000
        %v4161 = vsel %vm4158, %v4128, %v3002
        %v4162 = vsel %vm4158, %v4129, %v3004
        %v4163 = vsel %vm4158, %v4130, %v3006
        %v4164 = vsel %vm4158, %v4131, %v3008
        %v4165 = vsel %vm4158, %v4132, %v3010
        %v4166 = vsel %vm4158, %v4133, %v3012
        %v4167 = vsel %vm4158, %v4134, %v3014
        %v4168 = vsel %vm4158, %v4135, %v3016
        %v4169 = vsel %vm4158, %v4136, %v3018
        %v4170 = vsel %vm4158, %v4137, %v3020
        %v4171 = vsel %vm4158, %v4138, %v3022
        %v4172 = vsel %vm4158, %v4139, %v3024
        %v4173 = vsel %vm4158, %v4140, %v3026
        %v4174 = vsel %vm4158, %v4141, %v3028
        %v4175 = vsel %vm4158, %v4142, %v3030
        %v4176 = vsel %vm4158, %v4143, %v3032
        %v4177 = vsel %vm4158, %v4144, %v3034
        %v4178 = vsel %vm4158, %v4145, %v3036
        %v4179 = vsel %vm4158, %v4146, %v3038
        %v4180 = vsel %vm4158, %v4147, %v3040
        %v4181 = vsel %vm4158, %v4148, %v3042
        %v4182 = vsel %vm4158, %v4149, %v3044
        %v4183 = vsel %vm4158, %v4150, %v3046
        %v4184 = vsel %vm4158, %v4151, %v3048
        %v4185 = vsel %vm4158, %v4152, %v3050
        %v4186 = vsel %vm4158, %v4153, %v3052
        %v4187 = vsel %vm4158, %v4154, %v3054
        %v4188 = vsel %vm4158, %v4155, %v3056
        %v4189 = vsel %vm4158, %v4156, %v3058
        %v4190 = vsel %vm4158, %v4157, %v3060
        %vm4191 = vcmask 97280
        %v4192 = vsel %vm4191, %v4159, %v3126
        %v4193 = vsel %vm4191, %v4160, %v3128
        %v4194 = vsel %vm4191, %v4161, %v3130
        %v4195 = vsel %vm4191, %v4162, %v3132
        %v4196 = vsel %vm4191, %v4163, %v3134
        %v4197 = vsel %vm4191, %v4164, %v3136
        %v4198 = vsel %vm4191, %v4165, %v3138
        %v4199 = vsel %vm4191, %v4166, %v3140
        %v4200 = vsel %vm4191, %v4167, %v3142
        %v4201 = vsel %vm4191, %v4168, %v3144
        %v4202 = vsel %vm4191, %v4169, %v3146
        %v4203 = vsel %vm4191, %v4170, %v3148
        %v4204 = vsel %vm4191, %v4171, %v3150
        %v4205 = vsel %vm4191, %v4172, %v3152
        %v4206 = vsel %vm4191, %v4173, %v3154
        %v4207 = vsel %vm4191, %v4174, %v3156
        %v4208 = vsel %vm4191, %v4175, %v3158
        %v4209 = vsel %vm4191, %v4176, %v3160
        %v4210 = vsel %vm4191, %v4177, %v3162
        %v4211 = vsel %vm4191, %v4178, %v3164
        %v4212 = vsel %vm4191, %v4179, %v3166
        %v4213 = vsel %vm4191, %v4180, %v3168
        %v4214 = vsel %vm4191, %v4181, %v3170
        %v4215 = vsel %vm4191, %v4182, %v3172
        %v4216 = vsel %vm4191, %v4183, %v3174
        %v4217 = vsel %vm4191, %v4184, %v3176
        %v4218 = vsel %vm4191, %v4185, %v3178
        %v4219 = vsel %vm4191, %v4186, %v3180
        %v4220 = vsel %vm4191, %v4187, %v3182
        %v4221 = vsel %vm4191, %v4188, %v3184
        %v4222 = vsel %vm4191, %v4189, %v3186
        %v4223 = vsel %vm4191, %v4190, %v3188
        %vm4224 = vcmask 130048
        %v4225 = vsel %vm4224, %v4192, %v3320
        %v4226 = vsel %vm4224, %v4193, %v3322
        %v4227 = vsel %vm4224, %v4194, %v3324
        %v4228 = vsel %vm4224, %v4195, %v3326
        %v4229 = vsel %vm4224, %v4196, %v3328
        %v4230 = vsel %vm4224, %v4197, %v3330
        %v4231 = vsel %vm4224, %v4198, %v3332
        %v4232 = vsel %vm4224, %v4199, %v3334
        %v4233 = vsel %vm4224, %v4200, %v3336
        %v4234 = vsel %vm4224, %v4201, %v3338
        %v4235 = vsel %vm4224, %v4202, %v3340
        %v4236 = vsel %vm4224, %v4203, %v3342
        %v4237 = vsel %vm4224, %v4204, %v3344
        %v4238 = vsel %vm4224, %v4205, %v3346
        %v4239 = vsel %vm4224, %v4206, %v3348
        %v4240 = vsel %vm4224, %v4207, %v3350
        %v4241 = vsel %vm4224, %v4208, %v3352
        %v4242 = vsel %vm4224, %v4209, %v3354
        %v4243 = vsel %vm4224, %v4210, %v3356
        %v4244 = vsel %vm4224, %v4211, %v3358
        %v4245 = vsel %vm4224, %v4212, %v3360
        %v4246 = vsel %vm4224, %v4213, %v3362
        %v4247 = vsel %vm4224, %v4214, %v3364
        %v4248 = vsel %vm4224, %v4215, %v3366
        %v4249 = vsel %vm4224, %v4216, %v3368
        %v4250 = vsel %vm4224, %v4217, %v3370
        %v4251 = vsel %vm4224, %v4218, %v3372
        %v4252 = vsel %vm4224, %v4219, %v3374
        %v4253 = vsel %vm4224, %v4220, %v3376
        %v4254 = vsel %vm4224, %v4221, %v3378
        %v4255 = vsel %vm4224, %v4222, %v3380
        %v4256 = vsel %vm4224, %v4223, %v3382
        %vm4257 = vcmask 162816
        %v4258 = vsel %vm4257, %v4225, %v3514
        %v4259 = vsel %vm4257, %v4226, %v3516
        %v4260 = vsel %vm4257, %v4227, %v3518
        %v4261 = vsel %vm4257, %v4228, %v3520
        %v4262 = vsel %vm4257, %v4229, %v3522
        %v4263 = vsel %vm4257, %v4230, %v3524
        %v4264 = vsel %vm4257, %v4231, %v3526
        %v4265 = vsel %vm4257, %v4232, %v3528
        %v4266 = vsel %vm4257, %v4233, %v3530
        %v4267 = vsel %vm4257, %v4234, %v3532
        %v4268 = vsel %vm4257, %v4235, %v3534
        %v4269 = vsel %vm4257, %v4236, %v3536
        %v4270 = vsel %vm4257, %v4237, %v3538
        %v4271 = vsel %vm4257, %v4238, %v3540
        %v4272 = vsel %vm4257, %v4239, %v3542
        %v4273 = vsel %vm4257, %v4240, %v3544
        %v4274 = vsel %vm4257, %v4241, %v3546
        %v4275 = vsel %vm4257, %v4242, %v3548
        %v4276 = vsel %vm4257, %v4243, %v3550
        %v4277 = vsel %vm4257, %v4244, %v3552
        %v4278 = vsel %vm4257, %v4245, %v3554
        %v4279 = vsel %vm4257, %v4246, %v3556
        %v4280 = vsel %vm4257, %v4247, %v3558
        %v4281 = vsel %vm4257, %v4248, %v3560
        %v4282 = vsel %vm4257, %v4249, %v3562
        %v4283 = vsel %vm4257, %v4250, %v3564
        %v4284 = vsel %vm4257, %v4251, %v3566
        %v4285 = vsel %vm4257, %v4252, %v3568
        %v4286 = vsel %vm4257, %v4253, %v3570
        %v4287 = vsel %vm4257, %v4254, %v3572
        %v4288 = vsel %vm4257, %v4255, %v3574
        %v4289 = vsel %vm4257, %v4256, %v3576
        %vm4290 = vcmask 195584
        %v4291 = vsel %vm4290, %v4258, %v3642
        %v4292 = vsel %vm4290, %v4259, %v3644
        %v4293 = vsel %vm4290, %v4260, %v3646
        %v4294 = vsel %vm4290, %v4261, %v3648
        %v4295 = vsel %vm4290, %v4262, %v3650
        %v4296 = vsel %vm4290, %v4263, %v3652
        %v4297 = vsel %vm4290, %v4264, %v3654
        %v4298 = vsel %vm4290, %v4265, %v3656
        %v4299 = vsel %vm4290, %v4266, %v3658
        %v4300 = vsel %vm4290, %v4267, %v3660
        %v4301 = vsel %vm4290, %v4268, %v3662
        %v4302 = vsel %vm4290, %v4269, %v3664
        %v4303 = vsel %vm4290, %v4270, %v3666
        %v4304 = vsel %vm4290, %v4271, %v3668
        %v4305 = vsel %vm4290, %v4272, %v3670
        %v4306 = vsel %vm4290, %v4273, %v3672
        %v4307 = vsel %vm4290, %v4274, %v3674
        %v4308 = vsel %vm4290, %v4275, %v3676
        %v4309 = vsel %vm4290, %v4276, %v3678
        %v4310 = vsel %vm4290, %v4277, %v3680
        %v4311 = vsel %vm4290, %v4278, %v3682
        %v4312 = vsel %vm4290, %v4279, %v3684
        %v4313 = vsel %vm4290, %v4280, %v3686
        %v4314 = vsel %vm4290, %v4281, %v3688
        %v4315 = vsel %vm4290, %v4282, %v3690
        %v4316 = vsel %vm4290, %v4283, %v3692
        %v4317 = vsel %vm4290, %v4284, %v3694
        %v4318 = vsel %vm4290, %v4285, %v3696
        %v4319 = vsel %vm4290, %v4286, %v3698
        %v4320 = vsel %vm4290, %v4287, %v3700
        %v4321 = vsel %vm4290, %v4288, %v3702
        %v4322 = vsel %vm4290, %v4289, %v3704
        %vm4323 = vcmask 228352
        %v4324 = vsel %vm4323, %v4291, %v3836
        %v4325 = vsel %vm4323, %v4292, %v3838
        %v4326 = vsel %vm4323, %v4293, %v3840
        %v4327 = vsel %vm4323, %v4294, %v3842
        %v4328 = vsel %vm4323, %v4295, %v3844
        %v4329 = vsel %vm4323, %v4296, %v3846
        %v4330 = vsel %vm4323, %v4297, %v3848
        %v4331 = vsel %vm4323, %v4298, %v3850
        %v4332 = vsel %vm4323, %v4299, %v3852
        %v4333 = vsel %vm4323, %v4300, %v3854
        %v4334 = vsel %vm4323, %v4301, %v3856
        %v4335 = vsel %vm4323, %v4302, %v3858
        %v4336 = vsel %vm4323, %v4303, %v3860
        %v4337 = vsel %vm4323, %v4304, %v3862
        %v4338 = vsel %vm4323, %v4305, %v3864
        %v4339 = vsel %vm4323, %v4306, %v3866
        %v4340 = vsel %vm4323, %v4307, %v3868
        %v4341 = vsel %vm4323, %v4308, %v3870
        %v4342 = vsel %vm4323, %v4309, %v3872
        %v4343 = vsel %vm4323, %v4310, %v3874
        %v4344 = vsel %vm4323, %v4311, %v3876
        %v4345 = vsel %vm4323, %v4312, %v3878
        %v4346 = vsel %vm4323, %v4313, %v3880
        %v4347 = vsel %vm4323, %v4314, %v3882
        %v4348 = vsel %vm4323, %v4315, %v3884
        %v4349 = vsel %vm4323, %v4316, %v3886
        %v4350 = vsel %vm4323, %v4317, %v3888
        %v4351 = vsel %vm4323, %v4318, %v3890
        %v4352 = vsel %vm4323, %v4319, %v3892
        %v4353 = vsel %vm4323, %v4320, %v3894
        %v4354 = vsel %vm4323, %v4321, %v3896
        %v4355 = vsel %vm4323, %v4322, %v3898
        %vm4356 = vcmask 261120
        %v4357 = vsel %vm4356, %v4324, %v4030
        %v4358 = vsel %vm4356, %v4325, %v4032
        %v4359 = vsel %vm4356, %v4326, %v4034
        %v4360 = vsel %vm4356, %v4327, %v4036
        %v4361 = vsel %vm4356, %v4328, %v4038
        %v4362 = vsel %vm4356, %v4329, %v4040
        %v4363 = vsel %vm4356, %v4330, %v4042
        %v4364 = vsel %vm4356, %v4331, %v4044
        %v4365 = vsel %vm4356, %v4332, %v4046
        %v4366 = vsel %vm4356, %v4333, %v4048
        %v4367 = vsel %vm4356, %v4334, %v4050
        %v4368 = vsel %vm4356, %v4335, %v4052
        %v4369 = vsel %vm4356, %v4336, %v4054
        %v4370 = vsel %vm4356, %v4337, %v4056
        %v4371 = vsel %vm4356, %v4338, %v4058
        %v4372 = vsel %vm4356, %v4339, %v4060
        %v4373 = vsel %vm4356, %v4340, %v4062
        %v4374 = vsel %vm4356, %v4341, %v4064
        %v4375 = vsel %vm4356, %v4342, %v4066
        %v4376 = vsel %vm4356, %v4343, %v4068
        %v4377 = vsel %vm4356, %v4344, %v4070
        %v4378 = vsel %vm4356, %v4345, %v4072
        %v4379 = vsel %vm4356, %v4346, %v4074
        %v4380 = vsel %vm4356, %v4347, %v4076
        %v4381 = vsel %vm4356, %v4348, %v4078
        %v4382 = vsel %vm4356, %v4349, %v4080
        %v4383 = vsel %vm4356, %v4350, %v4082
        %v4384 = vsel %vm4356, %v4351, %v4084
        %v4385 = vsel %vm4356, %v4352, %v4086
        %v4386 = vsel %vm4356, %v4353, %v4088
        %v4387 = vsel %vm4356, %v4354, %v4090
        %v4388 = vsel %vm4356, %v4355, %v4092
        %v4389 = vld [vmem:[%s1] sm:$0xff]
        %v4390 = vld [vmem:[%s1 + $0x8] sm:$0xff]
        %v4391 = vld [vmem:[%s1 + $0x10] sm:$0xff]
        %v4392 = vld [vmem:[%s1 + $0x18] sm:$0xff]
        %v4393 = vld [vmem:[%s1 + $0x20] sm:$0xf]
        %v4394 = vld [vmem:[%s2] sm:$0x1]
        %v4396 = vperm.slane %v4394, 0
        %vm4398 = vcmask 293888
        %v4400 = vsel %vm4398, %v4357, 0
        %v4403 = vsel %vm4398, %v4358, 0
        %v4406 = vsel %vm4398, %v4359, 0
        %v4409 = vsel %vm4398, %v4360, 0
        %v4412 = vsel %vm4398, %v4361, 0
        %v4415 = vsel %vm4398, %v4362, 0
        %v4418 = vsel %vm4398, %v4363, 0
        %v4421 = vsel %vm4398, %v4364, 0
        %v4424 = vsel %vm4398, %v4365, 0
        %v4427 = vsel %vm4398, %v4366, 0
        %v4430 = vsel %vm4398, %v4367, 0
        %v4433 = vsel %vm4398, %v4368, 0
        %v4436 = vsel %vm4398, %v4369, 0
        %v4439 = vsel %vm4398, %v4370, 0
        %v4442 = vsel %vm4398, %v4371, 0
        %v4445 = vsel %vm4398, %v4372, 0
        %v4448 = vsel %vm4398, %v4373, 0
        %v4451 = vsel %vm4398, %v4374, 0
        %v4454 = vsel %vm4398, %v4375, 0
        %v4457 = vsel %vm4398, %v4376, 0
        %v4460 = vsel %vm4398, %v4377, 0
        %v4463 = vsel %vm4398, %v4378, 0
        %v4466 = vsel %vm4398, %v4379, 0
        %v4469 = vsel %vm4398, %v4380, 0
        %v4472 = vsel %vm4398, %v4381, 0
        %v4475 = vsel %vm4398, %v4382, 0
        %v4478 = vsel %vm4398, %v4383, 0
        %v4481 = vsel %vm4398, %v4384, 0
        %v4484 = vsel %vm4398, %v4385, 0
        %v4487 = vsel %vm4398, %v4386, 0
        %v4490 = vsel %vm4398, %v4387, 0
        %v4493 = vsel %vm4398, %v4388, 0
        %vm4495 = vcmask 1043456
        %v4497 = vsel %vm4495, %v4393, 0
        %4499 = vmatpush.msra.mxu0 0.0
        %4500 = vmatpush.msra.mxu0 0.0
        %4501 = vmatpush.msra.mxu0 0.0
        %4502 = vmatpush.msra.mxu0 0.0
        %4503 = vmatpush.msra.mxu0 0.0
        %4504 = vmatpush.msra.mxu0 0.0
        %4505 = vmatpush.msra.mxu0 0.0
        %4506 = vmatpush.msra.mxu0 0.0
        %4507 = vmatpush.msra.mxu0 0.0
        %4508 = vmatpush.msra.mxu0 0.0
        %4509 = vmatpush.msra.mxu0 0.0
        %4510 = vmatpush.msra.mxu0 %v4497
        %4511 = vmatpush.msra.mxu0 %v4392
        %4512 = vmatpush.msra.mxu0 %v4391
        %4513 = vmatpush.msra.mxu0 %v4390
        %4514 = vmatpush.msra.mxu0 %v4389
        %4515 = vmatmul.f32.gmra.mxu0 %v4400
        %v4516 = vpop.f32.mrf.mxu0
        %v4517 = vadd.f32 %v4396, %v4516
        %4518 = vmatmul.f32.gmra.mxu0 %v4403
        %v4519 = vpop.f32.mrf.mxu0
        %v4520 = vadd.f32 %v4396, %v4519
        %4521 = vmatmul.f32.gmra.mxu0 %v4406
        %v4522 = vpop.f32.mrf.mxu0
        %v4523 = vadd.f32 %v4396, %v4522
        %4524 = vmatmul.f32.gmra.mxu0 %v4409
        %v4525 = vpop.f32.mrf.mxu0
        %v4526 = vadd.f32 %v4396, %v4525
        %4527 = vmatmul.f32.gmra.mxu0 %v4412
        %v4528 = vpop.f32.mrf.mxu0
        %v4529 = vadd.f32 %v4396, %v4528
        %4530 = vmatmul.f32.gmra.mxu0 %v4415
        %v4531 = vpop.f32.mrf.mxu0
        %v4532 = vadd.f32 %v4396, %v4531
        %4533 = vmatmul.f32.gmra.mxu0 %v4418
        %v4534 = vpop.f32.mrf.mxu0
        %v4535 = vadd.f32 %v4396, %v4534
        %4536 = vmatmul.f32.gmra.mxu0 %v4421
        %v4537 = vpop.f32.mrf.mxu0
        %v4538 = vadd.f32 %v4396, %v4537
        %4539 = vmatmul.f32.gmra.mxu0 %v4424
        %v4540 = vpop.f32.mrf.mxu0
        %v4541 = vadd.f32 %v4396, %v4540
        %4542 = vmatmul.f32.gmra.mxu0 %v4427
        %v4543 = vpop.f32.mrf.mxu0
        %v4544 = vadd.f32 %v4396, %v4543
        %4545 = vmatmul.f32.gmra.mxu0 %v4430
        %v4546 = vpop.f32.mrf.mxu0
        %v4547 = vadd.f32 %v4396, %v4546
        %4548 = vmatmul.f32.gmra.mxu0 %v4433
        %v4549 = vpop.f32.mrf.mxu0
        %v4550 = vadd.f32 %v4396, %v4549
        %4551 = vmatmul.f32.gmra.mxu0 %v4436
        %v4552 = vpop.f32.mrf.mxu0
        %v4553 = vadd.f32 %v4396, %v4552
        %4554 = vmatmul.f32.gmra.mxu0 %v4439
        %v4555 = vpop.f32.mrf.mxu0
        %v4556 = vadd.f32 %v4396, %v4555
        %4557 = vmatmul.f32.gmra.mxu0 %v4442
        %v4558 = vpop.f32.mrf.mxu0
        %v4559 = vadd.f32 %v4396, %v4558
        %4560 = vmatmul.f32.gmra.mxu0 %v4445
        %v4561 = vpop.f32.mrf.mxu0
        %v4562 = vadd.f32 %v4396, %v4561
        %4563 = vmatmul.f32.gmra.mxu0 %v4448
        %v4564 = vpop.f32.mrf.mxu0
        %v4565 = vadd.f32 %v4396, %v4564
        %4566 = vmatmul.f32.gmra.mxu0 %v4451
        %v4567 = vpop.f32.mrf.mxu0
        %v4568 = vadd.f32 %v4396, %v4567
        %4569 = vmatmul.f32.gmra.mxu0 %v4454
        %v4570 = vpop.f32.mrf.mxu0
        %v4571 = vadd.f32 %v4396, %v4570
        %4572 = vmatmul.f32.gmra.mxu0 %v4457
        %v4573 = vpop.f32.mrf.mxu0
        %v4574 = vadd.f32 %v4396, %v4573
        %4575 = vmatmul.f32.gmra.mxu0 %v4460
        %v4576 = vpop.f32.mrf.mxu0
        %v4577 = vadd.f32 %v4396, %v4576
        %4578 = vmatmul.f32.gmra.mxu0 %v4463
        %v4579 = vpop.f32.mrf.mxu0
        %v4580 = vadd.f32 %v4396, %v4579
        %4581 = vmatmul.f32.gmra.mxu0 %v4466
        %v4582 = vpop.f32.mrf.mxu0
        %v4583 = vadd.f32 %v4396, %v4582
        %4584 = vmatmul.f32.gmra.mxu0 %v4469
        %v4585 = vpop.f32.mrf.mxu0
        %v4586 = vadd.f32 %v4396, %v4585
        %4587 = vmatmul.f32.gmra.mxu0 %v4472
        %v4588 = vpop.f32.mrf.mxu0
        %v4589 = vadd.f32 %v4396, %v4588
        %4590 = vmatmul.f32.gmra.mxu0 %v4475
        %v4591 = vpop.f32.mrf.mxu0
        %v4592 = vadd.f32 %v4396, %v4591
        %4593 = vmatmul.f32.gmra.mxu0 %v4478
        %v4594 = vpop.f32.mrf.mxu0
        %v4595 = vadd.f32 %v4396, %v4594
        %4596 = vmatmul.f32.gmra.mxu0 %v4481
        %v4597 = vpop.f32.mrf.mxu0
        %v4598 = vadd.f32 %v4396, %v4597
        %4599 = vmatmul.f32.gmra.mxu0 %v4484
        %v4600 = vpop.f32.mrf.mxu0
        %v4601 = vadd.f32 %v4396, %v4600
        %4602 = vmatmul.f32.gmra.mxu0 %v4487
        %v4603 = vpop.f32.mrf.mxu0
        %v4604 = vadd.f32 %v4396, %v4603
        %4605 = vmatmul.f32.gmra.mxu0 %v4490
        %v4606 = vpop.f32.mrf.mxu0
        %v4607 = vadd.f32 %v4396, %v4606
        %4608 = vmatmul.f32.gmra.mxu0 %v4493
        %v4609 = vpop.f32.mrf.mxu0
        %v4610 = vadd.f32 %v4396, %v4609
        %4611 = vdwg.mxu0
        %v4612 = vmax.f32 %v4517, 0.0
        %v4613 = vmax.f32 %v4520, 0.0
        %v4614 = vmax.f32 %v4523, 0.0
        %v4615 = vmax.f32 %v4526, 0.0
        %v4616 = vmax.f32 %v4529, 0.0
        %v4617 = vmax.f32 %v4532, 0.0
        %v4618 = vmax.f32 %v4535, 0.0
        %v4619 = vmax.f32 %v4538, 0.0
        %v4620 = vmax.f32 %v4541, 0.0
        %v4621 = vmax.f32 %v4544, 0.0
        %v4622 = vmax.f32 %v4547, 0.0
        %v4623 = vmax.f32 %v4550, 0.0
        %v4624 = vmax.f32 %v4553, 0.0
        %v4625 = vmax.f32 %v4556, 0.0
        %v4626 = vmax.f32 %v4559, 0.0
        %v4627 = vmax.f32 %v4562, 0.0
        %v4628 = vmax.f32 %v4565, 0.0
        %v4629 = vmax.f32 %v4568, 0.0
        %v4630 = vmax.f32 %v4571, 0.0
        %v4631 = vmax.f32 %v4574, 0.0
        %v4632 = vmax.f32 %v4577, 0.0
        %v4633 = vmax.f32 %v4580, 0.0
        %v4634 = vmax.f32 %v4583, 0.0
        %v4635 = vmax.f32 %v4586, 0.0
        %v4636 = vmax.f32 %v4589, 0.0
        %v4637 = vmax.f32 %v4592, 0.0
        %v4638 = vmax.f32 %v4595, 0.0
        %v4639 = vmax.f32 %v4598, 0.0
        %v4640 = vmax.f32 %v4601, 0.0
        %v4641 = vmax.f32 %v4604, 0.0
        %v4642 = vmax.f32 %v4607, 0.0
        %v4643 = vmax.f32 %v4610, 0.0
        %v4644 = vadd.f32 %v4612, %v4613
        %v4645 = vadd.f32 %v4644, %v4614
        %v4646 = vadd.f32 %v4645, %v4615
        %v4647 = vadd.f32 %v4646, %v4616
        %v4648 = vadd.f32 %v4647, %v4617
        %v4649 = vadd.f32 %v4648, %v4618
        %v4650 = vadd.f32 %v4649, %v4619
        %v4651 = vadd.f32 %v4650, %v4620
        %v4652 = vadd.f32 %v4651, %v4621
        %v4653 = vadd.f32 %v4652, %v4622
        %v4654 = vadd.f32 %v4653, %v4623
        %v4655 = vadd.f32 %v4654, %v4624
        %v4656 = vadd.f32 %v4655, %v4625
        %v4657 = vadd.f32 %v4656, %v4626
        %v4658 = vadd.f32 %v4657, %v4627
        %v4659 = vadd.f32 %v4658, %v4628
        %v4660 = vadd.f32 %v4659, %v4629
        %v4661 = vadd.f32 %v4660, %v4630
        %v4662 = vadd.f32 %v4661, %v4631
        %v4663 = vadd.f32 %v4662, %v4632
        %v4664 = vadd.f32 %v4663, %v4633
        %v4665 = vadd.f32 %v4664, %v4634
        %v4666 = vadd.f32 %v4665, %v4635
        %v4667 = vadd.f32 %v4666, %v4636
        %v4668 = vadd.f32 %v4667, %v4637
        %v4669 = vadd.f32 %v4668, %v4638
        %v4670 = vadd.f32 %v4669, %v4639
        %v4671 = vadd.f32 %v4670, %v4640
        %v4672 = vadd.f32 %v4671, %v4641
        %v4673 = vadd.f32 %v4672, %v4642
        %v4674 = vadd.f32 %v4673, %v4643
        %v4675 = vrot.slane %v4674, 4
        %v4676 = vadd.f32 %v4674, %v4675
        %v4677 = vrot.slane %v4676, 2
        %v4678 = vadd.f32 %v4676, %v4677
        %v4679 = vrot.slane %v4678, 1
        %v4680 = vadd.f32 %v4678, %v4679
        %v4681 = vmul.f32 %v4680, 0.00390625
        %v4682 = vld [vmem:[%s3] sm:$0x1]
        %v4683 = vmul.f32 %v4681, %v4682
        %v4684 = vsel %vm672, %v4683, 0.0
        %4685 = vadd.xlane.f32.xlu0 %v4684
        %v4686 = vpop.xlane.xlu0 %4685
        %v4687 = vrot.slane %v4686, 4
        %v4688 = vadd.f32 %v4686, %v4687
        %v4689 = vrot.slane %v4688, 2
        %v4690 = vadd.f32 %v4688, %v4689
        %v4691 = vrot.slane %v4690, 1
        %v4692 = vadd.f32 %v4690, %v4691
        %s4693 = vtos %v4692
        %s4694 = sld [smem:[#allocation2]]
        %s4695 = sadd.f32 %s4693, %s4694
        %v4696 = vstv %s4695
        %4697 = vst [vmem:[%s244] sm:$0x1] %v4696
        %s4698 = sand.u32 %s160, 1
        %s4699 = scalar_lea.sflag [#allocation4], %s4698
        %s4700 = sand.u32 %s160, 1
        %s4701 = scalar_lea.vmem [#allocation3], %s4700
        // Predicated region
        $region45: #{tpu_custom_call.1} parent=43 // pred_check
          %p4702 = pneg %p170
        $region46: #{tpu_custom_call.1} parent=43 // pred_check_branch
          %4704 = sbr.rel (%p4702) target = $region48
        $region47: #{tpu_custom_call.1} parent=43 // pred_region
          %4706 = vsyncadd %s4699, 0
          %s4707 = scalar_lea.hbm %s6, %s21
          %s4709 = sshll.u32 %s4701, 4
          %s4710 = int_to_ptr.vmem [resolvable:$true] %s4709
          %s4711 = sshll.u32 %s4707, 4
          %s4712 = int_to_ptr.hbm [resolvable:$true] %s4711
          %4714 = dma.vmem_to_hbm [thread:$0]  %s4710, 16, %s4712, %s4699
        $region48: #{tpu_custom_call.1} parent=43 // pred_fallthru
          _
      $region44: #{tpu_custom_call.1} parent=5 // pred_fallthru
        _
      %p4715 = scmp.le.s32.totalorder 2, %s16
      // Predicated region
      $region49: #{tpu_custom_call.1} parent=5 // pred_check
        %p4716 = pneg %p4715
      $region50: #{tpu_custom_call.1} parent=5 // pred_check_branch
        %4718 = sbr.rel (%p4716) target = $region52
      $region51: #{tpu_custom_call.1} parent=5 // pred_region
        %s4719 = ssub.s32 %s16, 2
        // Predicated region
        $region53: #{tpu_custom_call.1} parent=51 // pred_check
          %p4720 = pneg %p176
        $region54: #{tpu_custom_call.1} parent=51 // pred_check_branch
          %4722 = sbr.rel (%p4720) target = $region56
        $region55: #{tpu_custom_call.1} parent=51 // pred_region
          %s4723 = sand.u32 %s161, 1
          %s4724 = scalar_lea.sflag [#allocation4], %s4723
          %s4725 = sand.u32 %s161, 1
          %s4726 = scalar_lea.vmem [#allocation3], %s4725
          %4728 = dma.done %s4724, 16
        $region56: #{tpu_custom_call.1} parent=51 // pred_fallthru
          _
      $region52: #{tpu_custom_call.1} parent=5 // pred_fallthru
        _
    $region6: #{tpu_custom_call.1} parent=1 // loop_footer
      %s20 = sadd.s32 1, %s16
    $region7: #{tpu_custom_call.1} parent=1 // loop_footer_branch
      %15 = sbr.rel target = $region3
    $region8: #{tpu_custom_call.1} parent=1 // loop_exit
      _
    %4729 = vsyncpa [#allocation4], 1
    %s4730 = scalar_lea.sflag [#allocation4], 1
    %4731 = vsyncpa %s4730, 1

</llo_original>
